<compile_context>
chip_gen: v7x
topology: tpu7x:2x2x1
jax: 0.10.0
libtpu: 0.0.40
codegen_flags: <defaults>
</compile_context>

<pallas_src>
import math
from functools import partial

import jax
import jax.numpy as jnp
from jax.experimental import pallas as pl
from jax.experimental.pallas import tpu as pltpu


def _gelu(v, exact):
    if exact:
        # PyTorch nn.GELU() default = exact erf formulation (EUP slot on TPU).
        return 0.5 * v * (1.0 + jax.lax.erf(v * (1.0 / math.sqrt(2.0))))
    # tanh-approximation fallback, only used if erf does not lower on this build.
    c = math.sqrt(2.0 / math.pi)
    return 0.5 * v * (1.0 + jnp.tanh(c * (v + 0.044715 * v * v * v)))


def _efeb_kernel(xp_ref, dww_ref, dwb_ref, s1_ref, b1_ref,
                 we_ref, be_ref, wcat_ref, bf_ref, o_ref, *, exact_gelu):
    Hp, Wp, C = xp_ref.shape[1], xp_ref.shape[2], xp_ref.shape[3]
    H, W = Hp - 2, Wp - 2

    xp = xp_ref[0]                       # (H+2, W+2, C) f32, padded in the wrapper
    x = xp[1:H + 1, 1:W + 1, :]          # (H, W, C)  (also the center-tap window)
    w_dw = dww_ref[...]                  # (3, 3, C)

    # ---- depthwise 3x3 conv (stride 1, pad 1, groups=C); start from center tap ----
    dw = x * w_dw[1:2, 1:2, :]
    for ky in range(3):
        for kx in range(3):
            if ky == 1 and kx == 1:
                continue
            dw = dw + xp[ky:ky + H, kx:kx + W, :] * w_dw[ky:ky + 1, kx:kx + 1, :]
    dw = dw + dwb_ref[...]               # (1, C) broadcast

    # ---- GELU (EUP) -> folded BN1 -> inner residual add ----
    h = x + (_gelu(dw, exact_gelu) * s1_ref[...] + b1_ref[...])

    # ---- pointwise 1x1 convs as bf16 MXU matmuls (f32 accumulation) ----
    # W % 8 == 0 (checked in the wrapper) makes these reshapes layout-free views.
    hm = h.reshape(H * W, C).astype(jnp.bfloat16)
    xm = x.reshape(H * W, C)             # f32; cast together with e below
    e = jnp.dot(hm, we_ref[...], preferred_element_type=jnp.float32) + be_ref[...]
    e = jnp.maximum(e, 0.0)              # ReLU

    # Fused reduce+shortcut: [e | x] @ [w_red*bn2_s ; w_sc], single bias add
    # (BN2 scale/bias, reduce bias and shortcut bias all folded at trace time).
    cat = jnp.concatenate([e, xm], axis=-1).astype(jnp.bfloat16)   # (H*W, 3C)
    r = jnp.dot(cat, wcat_ref[...], preferred_element_type=jnp.float32) + bf_ref[...]
    o_ref[0] = r.reshape(H, W, C).astype(o_ref.dtype)


def _prepare_operands(p):
    """Trace-time folding of BN2 + biases and weight fusion / bf16 cast.

    Expected layouts (permute real PyTorch weights accordingly):
      dw_w : (3, 3, C)   from torch (C, 1, 3, 3)
      w_exp: (C, 2C)     from torch (2C, C, 1, 1)
      w_red: (2C, C)     from torch (C, 2C, 1, 1)
      w_sc : (C, C)      from torch (C, C, 1, 1)
    """
    w_red_folded = p["w_red"] * p["bn2_s"]                      # column-wise BN2 scale
    b_final = p["b_red"] * p["bn2_s"] + p["bn2_b"] + p["b_sc"]  # (1, C)
    w_cat = jnp.concatenate([w_red_folded, p["w_sc"]], axis=0)  # (3C, C)
    return dict(
        dw_w=p["dw_w"].astype(jnp.float32),
        dw_b=p["dw_b"].astype(jnp.float32),
        bn1_s=p["bn1_s"].astype(jnp.float32),
        bn1_b=p["bn1_b"].astype(jnp.float32),
        w_exp=p["w_exp"].astype(jnp.bfloat16),
        b_exp=p["b_exp"].astype(jnp.float32),
        w_cat=w_cat.astype(jnp.bfloat16),
        b_final=b_final.astype(jnp.float32),
    )


def efeb_forward(x_nchw, p, *, exact_gelu=True):
    N, C, H, W = x_nchw.shape
    assert W % 8 == 0, "W must be a multiple of 8 so in-kernel reshapes are views"
    C2, C3 = 2 * C, 3 * C
    ops = _prepare_operands(p)

    x = jnp.transpose(x_nchw, (0, 2, 3, 1)).astype(jnp.float32)      # NHWC
    xp = jnp.pad(x, ((0, 0), (1, 1), (1, 1), (0, 0)))                # pad once in HBM

    def full(*s):
        return pl.BlockSpec(s, lambda n: (0,) * len(s))

    out = pl.pallas_call(
        partial(_efeb_kernel, exact_gelu=exact_gelu),
        out_shape=jax.ShapeDtypeStruct((N, H, W, C), jnp.float32),
        grid=(N,),
        in_specs=[
            pl.BlockSpec((1, H + 2, W + 2, C), lambda n: (n, 0, 0, 0)),  # padded x
            full(3, 3, C),                 # depthwise conv weight
            full(1, C),                    # depthwise conv bias
            full(1, C), full(1, C),        # BN1 folded scale / bias
            full(C, C2),                   # 1x1 expand weight (bf16)
            full(1, C2),                   # expand bias
            full(C3, C),                   # fused [BN2-folded reduce ; shortcut] weight (bf16)
            full(1, C),                    # fused bias (b_red*bn2_s + bn2_b + b_sc)
        ],
        out_specs=pl.BlockSpec((1, H, W, C), lambda n: (n, 0, 0, 0)),
        compiler_params=pltpu.CompilerParams(
            dimension_semantics=("parallel",),
            vmem_limit_bytes=32 * 1024 * 1024,
        ),
    )(xp, ops["dw_w"], ops["dw_b"], ops["bn1_s"], ops["bn1_b"],
      ops["w_exp"], ops["b_exp"], ops["w_cat"], ops["b_final"])
    return jnp.transpose(out, (0, 3, 1, 2))                           # back to NCHW


# ---------------------------------------------------------------------------
# References for validation.
# ---------------------------------------------------------------------------
def efeb_reference(x_nchw, p, *, exact_gelu=True):
    """Pure-JAX f32 reference of the module's eval-mode forward (true semantics)."""
    x = jnp.transpose(x_nchw, (0, 2, 3, 1)).astype(jnp.float32)
    N, H, W, C = x.shape
    xp = jnp.pad(x, ((0, 0), (1, 1), (1, 1), (0, 0)))
    dw = jnp.zeros_like(x)
    for ky in range(3):
        for kx in range(3):
            dw = dw + xp[:, ky:ky + H, kx:kx + W, :] * p["dw_w"][ky, kx]
    dw = dw + p["dw_b"][0]
    h = x + (_gelu(dw, exact_gelu) * p["bn1_s"][0] + p["bn1_b"][0])
    e = jnp.maximum(jnp.einsum("nhwc,cd->nhwd", h, p["w_exp"]) + p["b_exp"][0], 0.0)
    r = jnp.einsum("nhwd,dc->nhwc", e, p["w_red"]) + p["b_red"][0]
    r = r * p["bn2_s"][0] + p["bn2_b"][0]
    sc = jnp.einsum("nhwc,cd->nhwd", x, p["w_sc"]) + p["b_sc"][0]
    return jnp.transpose(r + sc, (0, 3, 1, 2))


def efeb_reference_mirror(x_nchw, ops, *, exact_gelu=True):
    """Plain-JAX mirror of the kernel math (folded weights, bf16 matmul inputs)."""
    x = jnp.transpose(x_nchw, (0, 2, 3, 1)).astype(jnp.float32)
    N, H, W, C = x.shape
    xp = jnp.pad(x, ((0, 0), (1, 1), (1, 1), (0, 0)))
    dw = x * ops["dw_w"][1, 1]
    for ky in range(3):
        for kx in range(3):
            if ky == 1 and kx == 1:
                continue
            dw = dw + xp[:, ky:ky + H, kx:kx + W, :] * ops["dw_w"][ky, kx]
    dw = dw + ops["dw_b"][0]
    h = x + (_gelu(dw, exact_gelu) * ops["bn1_s"][0] + ops["bn1_b"][0])
    e = jnp.einsum("nhwc,cd->nhwd", h.astype(jnp.bfloat16), ops["w_exp"],
                   preferred_element_type=jnp.float32) + ops["b_exp"][0]
    e = jnp.maximum(e, 0.0)
    cat = jnp.concatenate([e, x], axis=-1).astype(jnp.bfloat16)
    r = jnp.einsum("nhwk,kc->nhwc", cat, ops["w_cat"],
                   preferred_element_type=jnp.float32) + ops["b_final"][0]
    return jnp.transpose(r, (0, 3, 1, 2))


def init_params(dim, key):
    """Deterministic synthetic parameters (shapes match EFEB(dim).__init__)."""
    C, C2 = dim, 2 * dim
    ks = jax.random.split(key, 12)
    rnd = lambda k, shp, s=0.2: s * jax.random.normal(k, shp, jnp.float32)

    def folded_bn(k):
        k1, k2, k3, k4 = jax.random.split(k, 4)
        gamma = 1.0 + 0.1 * jax.random.normal(k1, (1, C), jnp.float32)
        beta = 0.1 * jax.random.normal(k2, (1, C), jnp.float32)
        mean = 0.1 * jax.random.normal(k3, (1, C), jnp.float32)
        var = 1.0 + 0.1 * jax.random.uniform(k4, (1, C), dtype=jnp.float32)
        scale = gamma * jax.lax.rsqrt(var + 1e-5)
        return scale, beta - mean * scale

    bn1_s, bn1_b = folded_bn(ks[0])
    bn2_s, bn2_b = folded_bn(ks[1])
    return dict(
        dw_w=rnd(ks[2], (3, 3, C)),    # torch Conv2d(dim,dim,3,groups=dim).weight (dim,1,3,3) -> (3,3,dim)
        dw_b=rnd(ks[3], (1, C)),
        bn1_s=bn1_s, bn1_b=bn1_b,
        w_exp=rnd(ks[4], (C, C2)),     # torch Conv2d(dim,2dim,1).weight (2dim,dim,1,1) -> (dim,2dim)
        b_exp=rnd(ks[5], (1, C2)),
        w_red=rnd(ks[6], (C2, C)),     # torch Conv2d(2dim,dim,1).weight -> (2dim,dim)
        b_red=rnd(ks[7], (1, C)),
        bn2_s=bn2_s, bn2_b=bn2_b,
        w_sc=rnd(ks[8], (C, C)),       # torch shortcut Conv2d(dim,dim,1).weight -> (dim,dim)
        b_sc=rnd(ks[9], (1, C)),
    )


if __name__ == "__main__":
    dim, N, H, W = 4, 2, 16, 16
    key = jax.random.PRNGKey(0)
    kx, kp = jax.random.split(key)
    x = jax.random.normal(kx, (N, dim, H, W), jnp.float32)   # NCHW, like PyTorch
    params = init_params(dim, kp)

    exact = True
    try:
        out = jax.block_until_ready(efeb_forward(x, params, exact_gelu=True))
    except Exception:
        # erf not supported by this Mosaic build -> tanh-GELU fallback.
        exact = False
        out = jax.block_until_ready(efeb_forward(x, params, exact_gelu=False))

    assert out.shape == (N, dim, H, W)

    # 1) kernel implements the intended (folded, bf16-matmul) math
    ops = _prepare_operands(params)
    ref_mirror = efeb_reference_mirror(x, ops, exact_gelu=exact)
    err_mirror = float(jnp.max(jnp.abs(out - ref_mirror)))
    assert err_mirror < 5e-3, f"kernel vs bf16-mirror reference: {err_mirror}"

    # 2) end-to-end match to the exact f32 module semantics (bf16 MXU input budget)
    ref_f32 = efeb_reference(x, params, exact_gelu=exact)
    err_f32 = float(jnp.max(jnp.abs(out - ref_f32)))
    assert err_f32 < 5e-2, f"kernel vs f32 module reference: {err_f32}"

    print("KERNEL_OK")
</pallas_src>

<mosaic_0001>
module attributes {stable_mosaic.version = 11 : i64} {
  func.func @_efeb_kernel(%arg0: i32, %arg1: memref<1x18x18x4xf32, #tpu.memory_space<vmem>>, %arg2: memref<3x3x4xf32, #tpu.memory_space<vmem>>, %arg3: memref<1x4xf32, #tpu.memory_space<vmem>>, %arg4: memref<1x4xf32, #tpu.memory_space<vmem>>, %arg5: memref<1x4xf32, #tpu.memory_space<vmem>>, %arg6: memref<4x8xbf16, #tpu.memory_space<vmem>>, %arg7: memref<1x8xf32, #tpu.memory_space<vmem>>, %arg8: memref<12x4xbf16, #tpu.memory_space<vmem>>, %arg9: memref<1x4xf32, #tpu.memory_space<vmem>>, %arg10: memref<1x16x16x4xf32, #tpu.memory_space<vmem>>) attributes {dimension_semantics = [#tpu.dimension_semantics<parallel>], iteration_bounds = array<i64: 2>, scalar_prefetch = 0 : i64, scratch_operands = 0 : i64, tpu.core_type = #tpu.core_type<tc>, window_params = [{transform_indices = @transform_0, window_bounds = array<i64: 1, 18, 18, 4>}, {pipeline_mode = #tpu.pipeline_mode<synchronous>, transform_indices = @transform_1, window_bounds = array<i64: 3, 3, 4>}, {pipeline_mode = #tpu.pipeline_mode<synchronous>, transform_indices = @transform_2, window_bounds = array<i64: 1, 4>}, {pipeline_mode = #tpu.pipeline_mode<synchronous>, transform_indices = @transform_3, window_bounds = array<i64: 1, 4>}, {pipeline_mode = #tpu.pipeline_mode<synchronous>, transform_indices = @transform_4, window_bounds = array<i64: 1, 4>}, {pipeline_mode = #tpu.pipeline_mode<synchronous>, transform_indices = @transform_5, window_bounds = array<i64: 4, 8>}, {pipeline_mode = #tpu.pipeline_mode<synchronous>, transform_indices = @transform_6, window_bounds = array<i64: 1, 8>}, {pipeline_mode = #tpu.pipeline_mode<synchronous>, transform_indices = @transform_7, window_bounds = array<i64: 12, 4>}, {pipeline_mode = #tpu.pipeline_mode<synchronous>, transform_indices = @transform_8, window_bounds = array<i64: 1, 4>}, {transform_indices = @transform_9, window_bounds = array<i64: 1, 16, 16, 4>}]} {
    %c0 = arith.constant 0 : index
    %c0_0 = arith.constant 0 : index
    %c0_1 = arith.constant 0 : index
    %c0_2 = arith.constant 0 : index
    %0 = vector.load %arg1[%c0, %c0_0, %c0_1, %c0_2] : memref<1x18x18x4xf32, #tpu.memory_space<vmem>>, vector<1x18x18x4xf32>
    %1 = vector.shape_cast %0 : vector<1x18x18x4xf32> to vector<18x18x4xf32>
    %2 = vector.extract_strided_slice %1 {offsets = [1, 1, 0], sizes = [16, 16, 4], strides = [1, 1, 1]} : vector<18x18x4xf32> to vector<16x16x4xf32>
    %c0_3 = arith.constant 0 : index
    %c0_4 = arith.constant 0 : index
    %c0_5 = arith.constant 0 : index
    %3 = vector.load %arg2[%c0_3, %c0_4, %c0_5] : memref<3x3x4xf32, #tpu.memory_space<vmem>>, vector<3x3x4xf32>
    %4 = vector.extract_strided_slice %3 {offsets = [1, 1, 0], sizes = [1, 1, 4], strides = [1, 1, 1]} : vector<3x3x4xf32> to vector<1x1x4xf32>
    %5 = vector.broadcast %4 : vector<1x1x4xf32> to vector<16x16x4xf32>
    %6 = arith.mulf %2, %5 : vector<16x16x4xf32>
    %7 = vector.extract_strided_slice %1 {offsets = [0, 0, 0], sizes = [16, 16, 4], strides = [1, 1, 1]} : vector<18x18x4xf32> to vector<16x16x4xf32>
    %8 = vector.extract_strided_slice %3 {offsets = [0, 0, 0], sizes = [1, 1, 4], strides = [1, 1, 1]} : vector<3x3x4xf32> to vector<1x1x4xf32>
    %9 = vector.broadcast %8 : vector<1x1x4xf32> to vector<16x16x4xf32>
    %10 = arith.mulf %7, %9 : vector<16x16x4xf32>
    %11 = arith.addf %6, %10 : vector<16x16x4xf32>
    %12 = vector.extract_strided_slice %1 {offsets = [0, 1, 0], sizes = [16, 16, 4], strides = [1, 1, 1]} : vector<18x18x4xf32> to vector<16x16x4xf32>
    %13 = vector.extract_strided_slice %3 {offsets = [0, 1, 0], sizes = [1, 1, 4], strides = [1, 1, 1]} : vector<3x3x4xf32> to vector<1x1x4xf32>
    %14 = vector.broadcast %13 : vector<1x1x4xf32> to vector<16x16x4xf32>
    %15 = arith.mulf %12, %14 : vector<16x16x4xf32>
    %16 = arith.addf %11, %15 : vector<16x16x4xf32>
    %17 = vector.extract_strided_slice %1 {offsets = [0, 2, 0], sizes = [16, 16, 4], strides = [1, 1, 1]} : vector<18x18x4xf32> to vector<16x16x4xf32>
    %18 = vector.extract_strided_slice %3 {offsets = [0, 2, 0], sizes = [1, 1, 4], strides = [1, 1, 1]} : vector<3x3x4xf32> to vector<1x1x4xf32>
    %19 = vector.broadcast %18 : vector<1x1x4xf32> to vector<16x16x4xf32>
    %20 = arith.mulf %17, %19 : vector<16x16x4xf32>
    %21 = arith.addf %16, %20 : vector<16x16x4xf32>
    %22 = vector.extract_strided_slice %1 {offsets = [1, 0, 0], sizes = [16, 16, 4], strides = [1, 1, 1]} : vector<18x18x4xf32> to vector<16x16x4xf32>
    %23 = vector.extract_strided_slice %3 {offsets = [1, 0, 0], sizes = [1, 1, 4], strides = [1, 1, 1]} : vector<3x3x4xf32> to vector<1x1x4xf32>
    %24 = vector.broadcast %23 : vector<1x1x4xf32> to vector<16x16x4xf32>
    %25 = arith.mulf %22, %24 : vector<16x16x4xf32>
    %26 = arith.addf %21, %25 : vector<16x16x4xf32>
    %27 = vector.extract_strided_slice %1 {offsets = [1, 2, 0], sizes = [16, 16, 4], strides = [1, 1, 1]} : vector<18x18x4xf32> to vector<16x16x4xf32>
    %28 = vector.extract_strided_slice %3 {offsets = [1, 2, 0], sizes = [1, 1, 4], strides = [1, 1, 1]} : vector<3x3x4xf32> to vector<1x1x4xf32>
    %29 = vector.broadcast %28 : vector<1x1x4xf32> to vector<16x16x4xf32>
    %30 = arith.mulf %27, %29 : vector<16x16x4xf32>
    %31 = arith.addf %26, %30 : vector<16x16x4xf32>
    %32 = vector.extract_strided_slice %1 {offsets = [2, 0, 0], sizes = [16, 16, 4], strides = [1, 1, 1]} : vector<18x18x4xf32> to vector<16x16x4xf32>
    %33 = vector.extract_strided_slice %3 {offsets = [2, 0, 0], sizes = [1, 1, 4], strides = [1, 1, 1]} : vector<3x3x4xf32> to vector<1x1x4xf32>
    %34 = vector.broadcast %33 : vector<1x1x4xf32> to vector<16x16x4xf32>
    %35 = arith.mulf %32, %34 : vector<16x16x4xf32>
    %36 = arith.addf %31, %35 : vector<16x16x4xf32>
    %37 = vector.extract_strided_slice %1 {offsets = [2, 1, 0], sizes = [16, 16, 4], strides = [1, 1, 1]} : vector<18x18x4xf32> to vector<16x16x4xf32>
    %38 = vector.extract_strided_slice %3 {offsets = [2, 1, 0], sizes = [1, 1, 4], strides = [1, 1, 1]} : vector<3x3x4xf32> to vector<1x1x4xf32>
    %39 = vector.broadcast %38 : vector<1x1x4xf32> to vector<16x16x4xf32>
    %40 = arith.mulf %37, %39 : vector<16x16x4xf32>
    %41 = arith.addf %36, %40 : vector<16x16x4xf32>
    %42 = vector.extract_strided_slice %1 {offsets = [2, 2, 0], sizes = [16, 16, 4], strides = [1, 1, 1]} : vector<18x18x4xf32> to vector<16x16x4xf32>
    %43 = vector.extract_strided_slice %3 {offsets = [2, 2, 0], sizes = [1, 1, 4], strides = [1, 1, 1]} : vector<3x3x4xf32> to vector<1x1x4xf32>
    %44 = vector.broadcast %43 : vector<1x1x4xf32> to vector<16x16x4xf32>
    %45 = arith.mulf %42, %44 : vector<16x16x4xf32>
    %46 = arith.addf %41, %45 : vector<16x16x4xf32>
    %c0_6 = arith.constant 0 : index
    %c0_7 = arith.constant 0 : index
    %47 = vector.load %arg3[%c0_6, %c0_7] : memref<1x4xf32, #tpu.memory_space<vmem>>, vector<1x4xf32>
    %48 = vector.shape_cast %47 : vector<1x4xf32> to vector<1x1x4xf32>
    %49 = vector.broadcast %48 : vector<1x1x4xf32> to vector<16x16x4xf32>
    %50 = arith.addf %46, %49 : vector<16x16x4xf32>
    %cst = arith.constant 5.000000e-01 : f32
    %51 = vector.broadcast %cst : f32 to vector<16x16x4xf32>
    %52 = arith.mulf %51, %50 : vector<16x16x4xf32>
    %cst_8 = arith.constant 0.707106769 : f32
    %53 = vector.broadcast %cst_8 : f32 to vector<16x16x4xf32>
    %54 = arith.mulf %50, %53 : vector<16x16x4xf32>
    %55 = math.erf %54 : vector<16x16x4xf32>
    %cst_9 = arith.constant 1.000000e+00 : f32
    %56 = vector.broadcast %cst_9 : f32 to vector<16x16x4xf32>
    %57 = arith.addf %56, %55 : vector<16x16x4xf32>
    %58 = arith.mulf %52, %57 : vector<16x16x4xf32>
    %c0_10 = arith.constant 0 : index
    %c0_11 = arith.constant 0 : index
    %59 = vector.load %arg4[%c0_10, %c0_11] : memref<1x4xf32, #tpu.memory_space<vmem>>, vector<1x4xf32>
    %60 = vector.shape_cast %59 : vector<1x4xf32> to vector<1x1x4xf32>
    %61 = vector.broadcast %60 : vector<1x1x4xf32> to vector<16x16x4xf32>
    %62 = arith.mulf %58, %61 : vector<16x16x4xf32>
    %c0_12 = arith.constant 0 : index
    %c0_13 = arith.constant 0 : index
    %63 = vector.load %arg5[%c0_12, %c0_13] : memref<1x4xf32, #tpu.memory_space<vmem>>, vector<1x4xf32>
    %64 = vector.shape_cast %63 : vector<1x4xf32> to vector<1x1x4xf32>
    %65 = vector.broadcast %64 : vector<1x1x4xf32> to vector<16x16x4xf32>
    %66 = arith.addf %62, %65 : vector<16x16x4xf32>
    %67 = arith.addf %2, %66 : vector<16x16x4xf32>
    %68 = vector.shape_cast %67 : vector<16x16x4xf32> to vector<256x4xf32>
    %69 = arith.truncf %68 : vector<256x4xf32> to vector<256x4xbf16>
    %70 = vector.shape_cast %2 : vector<16x16x4xf32> to vector<256x4xf32>
    %c0_14 = arith.constant 0 : index
    %c0_15 = arith.constant 0 : index
    %71 = vector.load %arg6[%c0_14, %c0_15] : memref<4x8xbf16, #tpu.memory_space<vmem>>, vector<4x8xbf16>
    %cst_16 = arith.constant dense<0.000000e+00> : vector<256x8xf32>
    %72 = tpu.matmul %69, %71, %cst_16 {dimension_numbers = #tpu.dot_dimension_numbers<[1], [0], [0], [1], [0, 0, 1, 1], [], []>} : vector<256x4xbf16>, vector<4x8xbf16>, vector<256x8xf32> -> vector<256x8xf32>
    %c0_17 = arith.constant 0 : index
    %c0_18 = arith.constant 0 : index
    %73 = vector.load %arg7[%c0_17, %c0_18] : memref<1x8xf32, #tpu.memory_space<vmem>>, vector<1x8xf32>
    %74 = vector.broadcast %73 : vector<1x8xf32> to vector<256x8xf32>
    %75 = arith.addf %72, %74 : vector<256x8xf32>
    %cst_19 = arith.constant 0.000000e+00 : f32
    %76 = vector.broadcast %cst_19 : f32 to vector<256x8xf32>
    %77 = arith.maximumf %75, %76 : vector<256x8xf32>
    %78 = tpu.concatenate %77, %70 in 1 : vector<256x8xf32>, vector<256x4xf32> -> vector<256x12xf32>
    %79 = arith.truncf %78 : vector<256x12xf32> to vector<256x12xbf16>
    %c0_20 = arith.constant 0 : index
    %c0_21 = arith.constant 0 : index
    %80 = vector.load %arg8[%c0_20, %c0_21] : memref<12x4xbf16, #tpu.memory_space<vmem>>, vector<12x4xbf16>
    %cst_22 = arith.constant dense<0.000000e+00> : vector<256x4xf32>
    %81 = tpu.matmul %79, %80, %cst_22 {dimension_numbers = #tpu.dot_dimension_numbers<[1], [0], [0], [1], [0, 0, 1, 1], [], []>} : vector<256x12xbf16>, vector<12x4xbf16>, vector<256x4xf32> -> vector<256x4xf32>
    %c0_23 = arith.constant 0 : index
    %c0_24 = arith.constant 0 : index
    %82 = vector.load %arg9[%c0_23, %c0_24] : memref<1x4xf32, #tpu.memory_space<vmem>>, vector<1x4xf32>
    %83 = vector.broadcast %82 : vector<1x4xf32> to vector<256x4xf32>
    %84 = arith.addf %81, %83 : vector<256x4xf32>
    %85 = vector.shape_cast %84 : vector<256x4xf32> to vector<16x16x4xf32>
    %c0_25 = arith.constant 0 : index
    %c0_26 = arith.constant 0 : index
    %c0_27 = arith.constant 0 : index
    %c0_28 = arith.constant 0 : index
    %86 = vector.load %arg10[%c0_25, %c0_26, %c0_27, %c0_28] : memref<1x16x16x4xf32, #tpu.memory_space<vmem>>, vector<1x16x16x4xf32>
    %87 = vector.shape_cast %86 : vector<1x16x16x4xf32> to vector<16x16x4xf32>
    %88 = vector.shape_cast %85 : vector<16x16x4xf32> to vector<1x16x16x4xf32>
    tpu.vector_store %arg10[%c0_25, %c0_26, %c0_27, %c0_28], %88 {strides = array<i32>} : memref<1x16x16x4xf32, #tpu.memory_space<vmem>>, vector<1x16x16x4xf32>,
    return
  }
  func.func @transform_0(%arg0: i32) -> (i32, i32, i32, i32) {
    %c0_i32 = arith.constant 0 : i32
    %c0_i32_0 = arith.constant 0 : i32
    %c0_i32_1 = arith.constant 0 : i32
    %c0_i32_2 = arith.constant 0 : i32
    return %arg0, %c0_i32, %c0_i32_0, %c0_i32_1 : i32, i32, i32, i32
  }
  func.func @transform_1(%arg0: i32) -> (i32, i32, i32) {
    %c0_i32 = arith.constant 0 : i32
    %c0_i32_0 = arith.constant 0 : i32
    %c0_i32_1 = arith.constant 0 : i32
    %c0_i32_2 = arith.constant 0 : i32
    return %c0_i32, %c0_i32_0, %c0_i32_1 : i32, i32, i32
  }
  func.func @transform_2(%arg0: i32) -> (i32, i32) {
    %c0_i32 = arith.constant 0 : i32
    %c0_i32_0 = arith.constant 0 : i32
    %c0_i32_1 = arith.constant 0 : i32
    return %c0_i32, %c0_i32_0 : i32, i32
  }
  func.func @transform_3(%arg0: i32) -> (i32, i32) {
    %c0_i32 = arith.constant 0 : i32
    %c0_i32_0 = arith.constant 0 : i32
    %c0_i32_1 = arith.constant 0 : i32
    return %c0_i32, %c0_i32_0 : i32, i32
  }
  func.func @transform_4(%arg0: i32) -> (i32, i32) {
    %c0_i32 = arith.constant 0 : i32
    %c0_i32_0 = arith.constant 0 : i32
    %c0_i32_1 = arith.constant 0 : i32
    return %c0_i32, %c0_i32_0 : i32, i32
  }
  func.func @transform_5(%arg0: i32) -> (i32, i32) {
    %c0_i32 = arith.constant 0 : i32
    %c0_i32_0 = arith.constant 0 : i32
    %c0_i32_1 = arith.constant 0 : i32
    return %c0_i32, %c0_i32_0 : i32, i32
  }
  func.func @transform_6(%arg0: i32) -> (i32, i32) {
    %c0_i32 = arith.constant 0 : i32
    %c0_i32_0 = arith.constant 0 : i32
    %c0_i32_1 = arith.constant 0 : i32
    return %c0_i32, %c0_i32_0 : i32, i32
  }
  func.func @transform_7(%arg0: i32) -> (i32, i32) {
    %c0_i32 = arith.constant 0 : i32
    %c0_i32_0 = arith.constant 0 : i32
    %c0_i32_1 = arith.constant 0 : i32
    return %c0_i32, %c0_i32_0 : i32, i32
  }
  func.func @transform_8(%arg0: i32) -> (i32, i32) {
    %c0_i32 = arith.constant 0 : i32
    %c0_i32_0 = arith.constant 0 : i32
    %c0_i32_1 = arith.constant 0 : i32
    return %c0_i32, %c0_i32_0 : i32, i32
  }
  func.func @transform_9(%arg0: i32) -> (i32, i32, i32, i32) {
    %c0_i32 = arith.constant 0 : i32
    %c0_i32_0 = arith.constant 0 : i32
    %c0_i32_1 = arith.constant 0 : i32
    %c0_i32_2 = arith.constant 0 : i32
    return %arg0, %c0_i32, %c0_i32_0, %c0_i32_1 : i32, i32, i32, i32
  }
}

module attributes {stable_mosaic.version = 11 : i64} {
  func.func @_efeb_kernel(%arg0: i32, %arg1: memref<1x18x18x4xf32, #tpu.memory_space<vmem>>, %arg2: memref<3x3x4xf32, #tpu.memory_space<vmem>>, %arg3: memref<1x4xf32, #tpu.memory_space<vmem>>, %arg4: memref<1x4xf32, #tpu.memory_space<vmem>>, %arg5: memref<1x4xf32, #tpu.memory_space<vmem>>, %arg6: memref<4x8xbf16, #tpu.memory_space<vmem>>, %arg7: memref<1x8xf32, #tpu.memory_space<vmem>>, %arg8: memref<12x4xbf16, #tpu.memory_space<vmem>>, %arg9: memref<1x4xf32, #tpu.memory_space<vmem>>, %arg10: memref<1x16x16x4xf32, #tpu.memory_space<vmem>>) attributes {dimension_semantics = [#tpu.dimension_semantics<parallel>], iteration_bounds = array<i64: 2>, scalar_prefetch = 0 : i64, scratch_operands = 0 : i64, tpu.core_type = #tpu.core_type<tc>, window_params = [{transform_indices = @transform_0, window_bounds = array<i64: 1, 18, 18, 4>}, {pipeline_mode = #tpu.pipeline_mode<synchronous>, transform_indices = @transform_1, window_bounds = array<i64: 3, 3, 4>}, {pipeline_mode = #tpu.pipeline_mode<synchronous>, transform_indices = @transform_2, window_bounds = array<i64: 1, 4>}, {pipeline_mode = #tpu.pipeline_mode<synchronous>, transform_indices = @transform_3, window_bounds = array<i64: 1, 4>}, {pipeline_mode = #tpu.pipeline_mode<synchronous>, transform_indices = @transform_4, window_bounds = array<i64: 1, 4>}, {pipeline_mode = #tpu.pipeline_mode<synchronous>, transform_indices = @transform_5, window_bounds = array<i64: 4, 8>}, {pipeline_mode = #tpu.pipeline_mode<synchronous>, transform_indices = @transform_6, window_bounds = array<i64: 1, 8>}, {pipeline_mode = #tpu.pipeline_mode<synchronous>, transform_indices = @transform_7, window_bounds = array<i64: 12, 4>}, {pipeline_mode = #tpu.pipeline_mode<synchronous>, transform_indices = @transform_8, window_bounds = array<i64: 1, 4>}, {transform_indices = @transform_9, window_bounds = array<i64: 1, 16, 16, 4>}]} {
    %c0 = arith.constant 0 : index
    %c0_0 = arith.constant 0 : index
    %c0_1 = arith.constant 0 : index
    %c0_2 = arith.constant 0 : index
    %0 = vector.load %arg1[%c0, %c0_0, %c0_1, %c0_2] : memref<1x18x18x4xf32, #tpu.memory_space<vmem>>, vector<1x18x18x4xf32>
    %1 = vector.shape_cast %0 : vector<1x18x18x4xf32> to vector<18x18x4xf32>
    %2 = vector.extract_strided_slice %1 {offsets = [1, 1, 0], sizes = [16, 16, 4], strides = [1, 1, 1]} : vector<18x18x4xf32> to vector<16x16x4xf32>
    %c0_3 = arith.constant 0 : index
    %c0_4 = arith.constant 0 : index
    %c0_5 = arith.constant 0 : index
    %3 = vector.load %arg2[%c0_3, %c0_4, %c0_5] : memref<3x3x4xf32, #tpu.memory_space<vmem>>, vector<3x3x4xf32>
    %4 = vector.extract_strided_slice %3 {offsets = [1, 1, 0], sizes = [1, 1, 4], strides = [1, 1, 1]} : vector<3x3x4xf32> to vector<1x1x4xf32>
    %5 = vector.broadcast %4 : vector<1x1x4xf32> to vector<16x16x4xf32>
    %6 = arith.mulf %2, %5 : vector<16x16x4xf32>
    %7 = vector.extract_strided_slice %1 {offsets = [0, 0, 0], sizes = [16, 16, 4], strides = [1, 1, 1]} : vector<18x18x4xf32> to vector<16x16x4xf32>
    %8 = vector.extract_strided_slice %3 {offsets = [0, 0, 0], sizes = [1, 1, 4], strides = [1, 1, 1]} : vector<3x3x4xf32> to vector<1x1x4xf32>
    %9 = vector.broadcast %8 : vector<1x1x4xf32> to vector<16x16x4xf32>
    %10 = arith.mulf %7, %9 : vector<16x16x4xf32>
    %11 = arith.addf %6, %10 : vector<16x16x4xf32>
    %12 = vector.extract_strided_slice %1 {offsets = [0, 1, 0], sizes = [16, 16, 4], strides = [1, 1, 1]} : vector<18x18x4xf32> to vector<16x16x4xf32>
    %13 = vector.extract_strided_slice %3 {offsets = [0, 1, 0], sizes = [1, 1, 4], strides = [1, 1, 1]} : vector<3x3x4xf32> to vector<1x1x4xf32>
    %14 = vector.broadcast %13 : vector<1x1x4xf32> to vector<16x16x4xf32>
    %15 = arith.mulf %12, %14 : vector<16x16x4xf32>
    %16 = arith.addf %11, %15 : vector<16x16x4xf32>
    %17 = vector.extract_strided_slice %1 {offsets = [0, 2, 0], sizes = [16, 16, 4], strides = [1, 1, 1]} : vector<18x18x4xf32> to vector<16x16x4xf32>
    %18 = vector.extract_strided_slice %3 {offsets = [0, 2, 0], sizes = [1, 1, 4], strides = [1, 1, 1]} : vector<3x3x4xf32> to vector<1x1x4xf32>
    %19 = vector.broadcast %18 : vector<1x1x4xf32> to vector<16x16x4xf32>
    %20 = arith.mulf %17, %19 : vector<16x16x4xf32>
    %21 = arith.addf %16, %20 : vector<16x16x4xf32>
    %22 = vector.extract_strided_slice %1 {offsets = [1, 0, 0], sizes = [16, 16, 4], strides = [1, 1, 1]} : vector<18x18x4xf32> to vector<16x16x4xf32>
    %23 = vector.extract_strided_slice %3 {offsets = [1, 0, 0], sizes = [1, 1, 4], strides = [1, 1, 1]} : vector<3x3x4xf32> to vector<1x1x4xf32>
    %24 = vector.broadcast %23 : vector<1x1x4xf32> to vector<16x16x4xf32>
    %25 = arith.mulf %22, %24 : vector<16x16x4xf32>
    %26 = arith.addf %21, %25 : vector<16x16x4xf32>
    %27 = vector.extract_strided_slice %1 {offsets = [1, 2, 0], sizes = [16, 16, 4], strides = [1, 1, 1]} : vector<18x18x4xf32> to vector<16x16x4xf32>
    %28 = vector.extract_strided_slice %3 {offsets = [1, 2, 0], sizes = [1, 1, 4], strides = [1, 1, 1]} : vector<3x3x4xf32> to vector<1x1x4xf32>
    %29 = vector.broadcast %28 : vector<1x1x4xf32> to vector<16x16x4xf32>
    %30 = arith.mulf %27, %29 : vector<16x16x4xf32>
    %31 = arith.addf %26, %30 : vector<16x16x4xf32>
    %32 = vector.extract_strided_slice %1 {offsets = [2, 0, 0], sizes = [16, 16, 4], strides = [1, 1, 1]} : vector<18x18x4xf32> to vector<16x16x4xf32>
    %33 = vector.extract_strided_slice %3 {offsets = [2, 0, 0], sizes = [1, 1, 4], strides = [1, 1, 1]} : vector<3x3x4xf32> to vector<1x1x4xf32>
    %34 = vector.broadcast %33 : vector<1x1x4xf32> to vector<16x16x4xf32>
    %35 = arith.mulf %32, %34 : vector<16x16x4xf32>
    %36 = arith.addf %31, %35 : vector<16x16x4xf32>
    %37 = vector.extract_strided_slice %1 {offsets = [2, 1, 0], sizes = [16, 16, 4], strides = [1, 1, 1]} : vector<18x18x4xf32> to vector<16x16x4xf32>
    %38 = vector.extract_strided_slice %3 {offsets = [2, 1, 0], sizes = [1, 1, 4], strides = [1, 1, 1]} : vector<3x3x4xf32> to vector<1x1x4xf32>
    %39 = vector.broadcast %38 : vector<1x1x4xf32> to vector<16x16x4xf32>
    %40 = arith.mulf %37, %39 : vector<16x16x4xf32>
    %41 = arith.addf %36, %40 : vector<16x16x4xf32>
    %42 = vector.extract_strided_slice %1 {offsets = [2, 2, 0], sizes = [16, 16, 4], strides = [1, 1, 1]} : vector<18x18x4xf32> to vector<16x16x4xf32>
    %43 = vector.extract_strided_slice %3 {offsets = [2, 2, 0], sizes = [1, 1, 4], strides = [1, 1, 1]} : vector<3x3x4xf32> to vector<1x1x4xf32>
    %44 = vector.broadcast %43 : vector<1x1x4xf32> to vector<16x16x4xf32>
    %45 = arith.mulf %42, %44 : vector<16x16x4xf32>
    %46 = arith.addf %41, %45 : vector<16x16x4xf32>
    %c0_6 = arith.constant 0 : index
    %c0_7 = arith.constant 0 : index
    %47 = vector.load %arg3[%c0_6, %c0_7] : memref<1x4xf32, #tpu.memory_space<vmem>>, vector<1x4xf32>
    %48 = vector.shape_cast %47 : vector<1x4xf32> to vector<1x1x4xf32>
    %49 = vector.broadcast %48 : vector<1x1x4xf32> to vector<16x16x4xf32>
    %50 = arith.addf %46, %49 : vector<16x16x4xf32>
    %cst = arith.constant 5.000000e-01 : f32
    %51 = vector.broadcast %cst : f32 to vector<16x16x4xf32>
    %52 = arith.mulf %51, %50 : vector<16x16x4xf32>
    %cst_8 = arith.constant 4.471500e-02 : f32
    %53 = vector.broadcast %cst_8 : f32 to vector<16x16x4xf32>
    %54 = arith.mulf %53, %50 : vector<16x16x4xf32>
    %55 = arith.mulf %54, %50 : vector<16x16x4xf32>
    %56 = arith.mulf %55, %50 : vector<16x16x4xf32>
    %57 = arith.addf %50, %56 : vector<16x16x4xf32>
    %cst_9 = arith.constant 0.797884583 : f32
    %58 = vector.broadcast %cst_9 : f32 to vector<16x16x4xf32>
    %59 = arith.mulf %58, %57 : vector<16x16x4xf32>
    %60 = math.tanh %59 : vector<16x16x4xf32>
    %cst_10 = arith.constant 1.000000e+00 : f32
    %61 = vector.broadcast %cst_10 : f32 to vector<16x16x4xf32>
    %62 = arith.addf %61, %60 : vector<16x16x4xf32>
    %63 = arith.mulf %52, %62 : vector<16x16x4xf32>
    %c0_11 = arith.constant 0 : index
    %c0_12 = arith.constant 0 : index
    %64 = vector.load %arg4[%c0_11, %c0_12] : memref<1x4xf32, #tpu.memory_space<vmem>>, vector<1x4xf32>
    %65 = vector.shape_cast %64 : vector<1x4xf32> to vector<1x1x4xf32>
    %66 = vector.broadcast %65 : vector<1x1x4xf32> to vector<16x16x4xf32>
    %67 = arith.mulf %63, %66 : vector<16x16x4xf32>
    %c0_13 = arith.constant 0 : index
    %c0_14 = arith.constant 0 : index
    %68 = vector.load %arg5[%c0_13, %c0_14] : memref<1x4xf32, #tpu.memory_space<vmem>>, vector<1x4xf32>
    %69 = vector.shape_cast %68 : vector<1x4xf32> to vector<1x1x4xf32>
    %70 = vector.broadcast %69 : vector<1x1x4xf32> to vector<16x16x4xf32>
    %71 = arith.addf %67, %70 : vector<16x16x4xf32>
    %72 = arith.addf %2, %71 : vector<16x16x4xf32>
    %73 = vector.shape_cast %72 : vector<16x16x4xf32> to vector<256x4xf32>
    %74 = arith.truncf %73 : vector<256x4xf32> to vector<256x4xbf16>
    %75 = vector.shape_cast %2 : vector<16x16x4xf32> to vector<256x4xf32>
    %c0_15 = arith.constant 0 : index
    %c0_16 = arith.constant 0 : index
    %76 = vector.load %arg6[%c0_15, %c0_16] : memref<4x8xbf16, #tpu.memory_space<vmem>>, vector<4x8xbf16>
    %cst_17 = arith.constant dense<0.000000e+00> : vector<256x8xf32>
    %77 = tpu.matmul %74, %76, %cst_17 {dimension_numbers = #tpu.dot_dimension_numbers<[1], [0], [0], [1], [0, 0, 1, 1], [], []>} : vector<256x4xbf16>, vector<4x8xbf16>, vector<256x8xf32> -> vector<256x8xf32>
    %c0_18 = arith.constant 0 : index
    %c0_19 = arith.constant 0 : index
    %78 = vector.load %arg7[%c0_18, %c0_19] : memref<1x8xf32, #tpu.memory_space<vmem>>, vector<1x8xf32>
    %79 = vector.broadcast %78 : vector<1x8xf32> to vector<256x8xf32>
    %80 = arith.addf %77, %79 : vector<256x8xf32>
    %cst_20 = arith.constant 0.000000e+00 : f32
    %81 = vector.broadcast %cst_20 : f32 to vector<256x8xf32>
    %82 = arith.maximumf %80, %81 : vector<256x8xf32>
    %83 = tpu.concatenate %82, %75 in 1 : vector<256x8xf32>, vector<256x4xf32> -> vector<256x12xf32>
    %84 = arith.truncf %83 : vector<256x12xf32> to vector<256x12xbf16>
    %c0_21 = arith.constant 0 : index
    %c0_22 = arith.constant 0 : index
    %85 = vector.load %arg8[%c0_21, %c0_22] : memref<12x4xbf16, #tpu.memory_space<vmem>>, vector<12x4xbf16>
    %cst_23 = arith.constant dense<0.000000e+00> : vector<256x4xf32>
    %86 = tpu.matmul %84, %85, %cst_23 {dimension_numbers = #tpu.dot_dimension_numbers<[1], [0], [0], [1], [0, 0, 1, 1], [], []>} : vector<256x12xbf16>, vector<12x4xbf16>, vector<256x4xf32> -> vector<256x4xf32>
    %c0_24 = arith.constant 0 : index
    %c0_25 = arith.constant 0 : index
    %87 = vector.load %arg9[%c0_24, %c0_25] : memref<1x4xf32, #tpu.memory_space<vmem>>, vector<1x4xf32>
    %88 = vector.broadcast %87 : vector<1x4xf32> to vector<256x4xf32>
    %89 = arith.addf %86, %88 : vector<256x4xf32>
    %90 = vector.shape_cast %89 : vector<256x4xf32> to vector<16x16x4xf32>
    %c0_26 = arith.constant 0 : index
    %c0_27 = arith.constant 0 : index
    %c0_28 = arith.constant 0 : index
    %c0_29 = arith.constant 0 : index
    %91 = vector.load %arg10[%c0_26, %c0_27, %c0_28, %c0_29] : memref<1x16x16x4xf32, #tpu.memory_space<vmem>>, vector<1x16x16x4xf32>
    %92 = vector.shape_cast %91 : vector<1x16x16x4xf32> to vector<16x16x4xf32>
    %93 = vector.shape_cast %90 : vector<16x16x4xf32> to vector<1x16x16x4xf32>
    tpu.vector_store %arg10[%c0_26, %c0_27, %c0_28, %c0_29], %93 {strides = array<i32>} : memref<1x16x16x4xf32, #tpu.memory_space<vmem>>, vector<1x16x16x4xf32>,
    return
  }
  func.func @transform_0(%arg0: i32) -> (i32, i32, i32, i32) {
    %c0_i32 = arith.constant 0 : i32
    %c0_i32_0 = arith.constant 0 : i32
    %c0_i32_1 = arith.constant 0 : i32
    %c0_i32_2 = arith.constant 0 : i32
    return %arg0, %c0_i32, %c0_i32_0, %c0_i32_1 : i32, i32, i32, i32
  }
  func.func @transform_1(%arg0: i32) -> (i32, i32, i32) {
    %c0_i32 = arith.constant 0 : i32
    %c0_i32_0 = arith.constant 0 : i32
    %c0_i32_1 = arith.constant 0 : i32
    %c0_i32_2 = arith.constant 0 : i32
    return %c0_i32, %c0_i32_0, %c0_i32_1 : i32, i32, i32
  }
  func.func @transform_2(%arg0: i32) -> (i32, i32) {
    %c0_i32 = arith.constant 0 : i32
    %c0_i32_0 = arith.constant 0 : i32
    %c0_i32_1 = arith.constant 0 : i32
    return %c0_i32, %c0_i32_0 : i32, i32
  }
  func.func @transform_3(%arg0: i32) -> (i32, i32) {
    %c0_i32 = arith.constant 0 : i32
    %c0_i32_0 = arith.constant 0 : i32
    %c0_i32_1 = arith.constant 0 : i32
    return %c0_i32, %c0_i32_0 : i32, i32
  }
  func.func @transform_4(%arg0: i32) -> (i32, i32) {
    %c0_i32 = arith.constant 0 : i32
    %c0_i32_0 = arith.constant 0 : i32
    %c0_i32_1 = arith.constant 0 : i32
    return %c0_i32, %c0_i32_0 : i32, i32
  }
  func.func @transform_5(%arg0: i32) -> (i32, i32) {
    %c0_i32 = arith.constant 0 : i32
    %c0_i32_0 = arith.constant 0 : i32
    %c0_i32_1 = arith.constant 0 : i32
    return %c0_i32, %c0_i32_0 : i32, i32
  }
  func.func @transform_6(%arg0: i32) -> (i32, i32) {
    %c0_i32 = arith.constant 0 : i32
    %c0_i32_0 = arith.constant 0 : i32
    %c0_i32_1 = arith.constant 0 : i32
    return %c0_i32, %c0_i32_0 : i32, i32
  }
  func.func @transform_7(%arg0: i32) -> (i32, i32) {
    %c0_i32 = arith.constant 0 : i32
    %c0_i32_0 = arith.constant 0 : i32
    %c0_i32_1 = arith.constant 0 : i32
    return %c0_i32, %c0_i32_0 : i32, i32
  }
  func.func @transform_8(%arg0: i32) -> (i32, i32) {
    %c0_i32 = arith.constant 0 : i32
    %c0_i32_0 = arith.constant 0 : i32
    %c0_i32_1 = arith.constant 0 : i32
    return %c0_i32, %c0_i32_0 : i32, i32
  }
  func.func @transform_9(%arg0: i32) -> (i32, i32, i32, i32) {
    %c0_i32 = arith.constant 0 : i32
    %c0_i32_0 = arith.constant 0 : i32
    %c0_i32_1 = arith.constant 0 : i32
    %c0_i32_2 = arith.constant 0 : i32
    return %arg0, %c0_i32, %c0_i32_0, %c0_i32_1 : i32, i32, i32, i32
  }
}

</mosaic_0001>

<llo_original>
// kernel: tpu_custom_call.1
$region0: #{tpu_custom_call.1}
  #allocation0 [shape = 'u32[]', space=smem, size = 0x4, offset = 0x4, fixed_abs, tag = 'smem constant byte address 0x4 - core index']
  #allocation1 [shape = 'u32[144,128]{1,0:T(1,128)}', space=vmem, size = 0x12000, scoped, tag = 'internal scratch']
  %s0 = inlined_call_operand.vmem [shape: f32[2,18,18,4], index: 0, kind: input, shape index: {}]
  %s1 = inlined_call_operand.vmem [shape: f32[3,3,4], index: 1, kind: input, shape index: {}]
  %s2 = inlined_call_operand.vmem [shape: f32[1,4], index: 2, kind: input, shape index: {}]
  %s3 = inlined_call_operand.vmem [shape: f32[1,4], index: 3, kind: input, shape index: {}]
  %s4 = inlined_call_operand.vmem [shape: f32[1,4], index: 4, kind: input, shape index: {}]
  %s5 = inlined_call_operand.vmem [shape: bf16[4,8], index: 5, kind: input, shape index: {}]
  %s6 = inlined_call_operand.vmem [shape: f32[1,8], index: 6, kind: input, shape index: {}]
  %s7 = inlined_call_operand.vmem [shape: bf16[12,4], index: 7, kind: input, shape index: {}]
  %s8 = inlined_call_operand.vmem [shape: f32[1,4], index: 8, kind: input, shape index: {}]
  %s9 = inlined_call_operand.vmem [shape: f32[2,16,16,4], index: 9, kind: output, shape index: {}]
  %s10 = sld [smem:[#allocation0]]
  $region69: #{tpu_custom_call.1} parent=0
    _
  %s12 = ssub.s32 1, %s10
  %s13 = scalar_select 0, %s12, %s10
  loop: start=0, step=1, limit=4
  $region2: #{tpu_custom_call.1} parent=0 // loop_pre_header
    _
  $region3: #{tpu_custom_call.1} parent=0 // loop_header
    %s15 = sphi 0, %s19
    %p16 = scmp.ge.s32.totalorder %s15, 4
    %s25 = sphi 0, %s27
    %s28 = sphi 0, %s25
    %s29 = sphi 0, %s28
    %s45 = sphi 0, %s29
    %s49 = sphi 0, %s49
    %s51 = sphi 0, %s49
    %s52 = sphi 0, %s51
    %s66 = sphi 0, %s52
    %s70 = sphi 0, %s70
    %s72 = sphi 0, %s70
    %s73 = sphi 0, %s72
    %s87 = sphi 0, %s73
    %s91 = sphi 0, %s91
    %s93 = sphi 0, %s91
    %s94 = sphi 0, %s93
    %s108 = sphi 0, %s94
    %s112 = sphi 0, %s112
    %s114 = sphi 0, %s112
    %s115 = sphi 0, %s114
    %s129 = sphi 0, %s115
    %s133 = sphi 0, %s133
    %s135 = sphi 0, %s133
    %s136 = sphi 0, %s135
    %s150 = sphi 0, %s136
    %s154 = sphi 0, %s154
    %s156 = sphi 0, %s154
    %s157 = sphi 0, %s156
    %s171 = sphi 0, %s157
    %s175 = sphi 0, %s175
    %s177 = sphi 0, %s175
    %s178 = sphi 0, %s177
    %s192 = sphi 0, %s178
    %s196 = sphi 0, %s196
    %s198 = sphi 0, %s196
    %s199 = sphi 0, %s198
    %s213 = sphi 0, %s199
    %s219 = sphi 0, %s221
    %s222 = sphi 0, %s219
    %s223 = sphi 0, %s222
    %s239 = sphi 0, %s223
  $region4: #{tpu_custom_call.1} parent=0 // loop_header_branch
    %18 = sbr.rel (%p16) target = $region8
  $region5: #{tpu_custom_call.1} parent=0 // loop_body
    %s20 = ssub.s32 %s15, 1
    %s21 = ssub.s32 %s15, 2
    %s22 = sadd.s32 %s15, 1
    %s23 = ssub.s32 %s15, %s22
    %p24 = scmp.eq.s32.totalorder %s23, 0
    %s26 = sadd.s32 %s25, 1
    %s27 = scalar_select %p24, %s25, %s26
    %p30 = pneg %p24
    %p31 = scmp.eq.s32.totalorder %s15, 1
    %p32 = por %p30, %p31
    %p33 = scmp.ne.s32.totalorder %s25, %s28
    %p34 = scmp.eq.s32.totalorder %s15, 0
    %p35 = por %p33, %p34
    %p36 = scmp.ne.s32.totalorder %s25, %s28
    %p37 = scmp.eq.s32.totalorder %s20, 1
    %p38 = por %p36, %p37
    %p39 = scmp.ne.s32.totalorder %s28, %s29
    %p40 = scmp.eq.s32.totalorder %s20, 0
    %p41 = por %p39, %p40
    %p42 = scmp.ne.s32.totalorder %s28, %s29
    %p43 = scmp.eq.s32.totalorder %s21, 1
    %p44 = por %p42, %p43
    %p46 = scmp.ne.s32.totalorder %s29, %s45
    %p47 = scmp.eq.s32.totalorder %s21, 0
    %p48 = por %p46, %p47
    %s50 = sadd.s32 %s49, 1
    %p53 = scmp.eq.s32.totalorder %s15, 1
    %p54 = scmp.ne.s32.totalorder %s49, %s51
    %p55 = scmp.eq.s32.totalorder %s15, 0
    %p56 = por %p54, %p55
    %p57 = scmp.ne.s32.totalorder %s49, %s51
    %p58 = scmp.eq.s32.totalorder %s20, 1
    %p59 = por %p57, %p58
    %p60 = scmp.ne.s32.totalorder %s51, %s52
    %p61 = scmp.eq.s32.totalorder %s20, 0
    %p62 = por %p60, %p61
    %p63 = scmp.ne.s32.totalorder %s51, %s52
    %p64 = scmp.eq.s32.totalorder %s21, 1
    %p65 = por %p63, %p64
    %p67 = scmp.ne.s32.totalorder %s52, %s66
    %p68 = scmp.eq.s32.totalorder %s21, 0
    %p69 = por %p67, %p68
    %s71 = sadd.s32 %s70, 1
    %p74 = scmp.eq.s32.totalorder %s15, 1
    %p75 = scmp.ne.s32.totalorder %s70, %s72
    %p76 = scmp.eq.s32.totalorder %s15, 0
    %p77 = por %p75, %p76
    %p78 = scmp.ne.s32.totalorder %s70, %s72
    %p79 = scmp.eq.s32.totalorder %s20, 1
    %p80 = por %p78, %p79
    %p81 = scmp.ne.s32.totalorder %s72, %s73
    %p82 = scmp.eq.s32.totalorder %s20, 0
    %p83 = por %p81, %p82
    %p84 = scmp.ne.s32.totalorder %s72, %s73
    %p85 = scmp.eq.s32.totalorder %s21, 1
    %p86 = por %p84, %p85
    %p88 = scmp.ne.s32.totalorder %s73, %s87
    %p89 = scmp.eq.s32.totalorder %s21, 0
    %p90 = por %p88, %p89
    %s92 = sadd.s32 %s91, 1
    %p95 = scmp.eq.s32.totalorder %s15, 1
    %p96 = scmp.ne.s32.totalorder %s91, %s93
    %p97 = scmp.eq.s32.totalorder %s15, 0
    %p98 = por %p96, %p97
    %p99 = scmp.ne.s32.totalorder %s91, %s93
    %p100 = scmp.eq.s32.totalorder %s20, 1
    %p101 = por %p99, %p100
    %p102 = scmp.ne.s32.totalorder %s93, %s94
    %p103 = scmp.eq.s32.totalorder %s20, 0
    %p104 = por %p102, %p103
    %p105 = scmp.ne.s32.totalorder %s93, %s94
    %p106 = scmp.eq.s32.totalorder %s21, 1
    %p107 = por %p105, %p106
    %p109 = scmp.ne.s32.totalorder %s94, %s108
    %p110 = scmp.eq.s32.totalorder %s21, 0
    %p111 = por %p109, %p110
    %s113 = sadd.s32 %s112, 1
    %p116 = scmp.eq.s32.totalorder %s15, 1
    %p117 = scmp.ne.s32.totalorder %s112, %s114
    %p118 = scmp.eq.s32.totalorder %s15, 0
    %p119 = por %p117, %p118
    %p120 = scmp.ne.s32.totalorder %s112, %s114
    %p121 = scmp.eq.s32.totalorder %s20, 1
    %p122 = por %p120, %p121
    %p123 = scmp.ne.s32.totalorder %s114, %s115
    %p124 = scmp.eq.s32.totalorder %s20, 0
    %p125 = por %p123, %p124
    %p126 = scmp.ne.s32.totalorder %s114, %s115
    %p127 = scmp.eq.s32.totalorder %s21, 1
    %p128 = por %p126, %p127
    %p130 = scmp.ne.s32.totalorder %s115, %s129
    %p131 = scmp.eq.s32.totalorder %s21, 0
    %p132 = por %p130, %p131
    %s134 = sadd.s32 %s133, 1
    %p137 = scmp.eq.s32.totalorder %s15, 1
    %p138 = scmp.ne.s32.totalorder %s133, %s135
    %p139 = scmp.eq.s32.totalorder %s15, 0
    %p140 = por %p138, %p139
    %p141 = scmp.ne.s32.totalorder %s133, %s135
    %p142 = scmp.eq.s32.totalorder %s20, 1
    %p143 = por %p141, %p142
    %p144 = scmp.ne.s32.totalorder %s135, %s136
    %p145 = scmp.eq.s32.totalorder %s20, 0
    %p146 = por %p144, %p145
    %p147 = scmp.ne.s32.totalorder %s135, %s136
    %p148 = scmp.eq.s32.totalorder %s21, 1
    %p149 = por %p147, %p148
    %p151 = scmp.ne.s32.totalorder %s136, %s150
    %p152 = scmp.eq.s32.totalorder %s21, 0
    %p153 = por %p151, %p152
    %s155 = sadd.s32 %s154, 1
    %p158 = scmp.eq.s32.totalorder %s15, 1
    %p159 = scmp.ne.s32.totalorder %s154, %s156
    %p160 = scmp.eq.s32.totalorder %s15, 0
    %p161 = por %p159, %p160
    %p162 = scmp.ne.s32.totalorder %s154, %s156
    %p163 = scmp.eq.s32.totalorder %s20, 1
    %p164 = por %p162, %p163
    %p165 = scmp.ne.s32.totalorder %s156, %s157
    %p166 = scmp.eq.s32.totalorder %s20, 0
    %p167 = por %p165, %p166
    %p168 = scmp.ne.s32.totalorder %s156, %s157
    %p169 = scmp.eq.s32.totalorder %s21, 1
    %p170 = por %p168, %p169
    %p172 = scmp.ne.s32.totalorder %s157, %s171
    %p173 = scmp.eq.s32.totalorder %s21, 0
    %p174 = por %p172, %p173
    %s176 = sadd.s32 %s175, 1
    %p179 = scmp.eq.s32.totalorder %s15, 1
    %p180 = scmp.ne.s32.totalorder %s175, %s177
    %p181 = scmp.eq.s32.totalorder %s15, 0
    %p182 = por %p180, %p181
    %p183 = scmp.ne.s32.totalorder %s175, %s177
    %p184 = scmp.eq.s32.totalorder %s20, 1
    %p185 = por %p183, %p184
    %p186 = scmp.ne.s32.totalorder %s177, %s178
    %p187 = scmp.eq.s32.totalorder %s20, 0
    %p188 = por %p186, %p187
    %p189 = scmp.ne.s32.totalorder %s177, %s178
    %p190 = scmp.eq.s32.totalorder %s21, 1
    %p191 = por %p189, %p190
    %p193 = scmp.ne.s32.totalorder %s178, %s192
    %p194 = scmp.eq.s32.totalorder %s21, 0
    %p195 = por %p193, %p194
    %s197 = sadd.s32 %s196, 1
    %p200 = scmp.eq.s32.totalorder %s15, 1
    %p201 = scmp.ne.s32.totalorder %s196, %s198
    %p202 = scmp.eq.s32.totalorder %s15, 0
    %p203 = por %p201, %p202
    %p204 = scmp.ne.s32.totalorder %s196, %s198
    %p205 = scmp.eq.s32.totalorder %s20, 1
    %p206 = por %p204, %p205
    %p207 = scmp.ne.s32.totalorder %s198, %s199
    %p208 = scmp.eq.s32.totalorder %s20, 0
    %p209 = por %p207, %p208
    %p210 = scmp.ne.s32.totalorder %s198, %s199
    %p211 = scmp.eq.s32.totalorder %s21, 1
    %p212 = por %p210, %p211
    %p214 = scmp.ne.s32.totalorder %s199, %s213
    %p215 = scmp.eq.s32.totalorder %s21, 0
    %p216 = por %p214, %p215
    %s217 = ssub.s32 %s15, %s22
    %p218 = scmp.eq.s32.totalorder %s217, 0
    %s220 = sadd.s32 %s219, 1
    %s221 = scalar_select %p218, %s219, %s220
    %p224 = pneg %p218
    %p225 = scmp.eq.s32.totalorder %s15, 1
    %p226 = por %p224, %p225
    %p227 = scmp.ne.s32.totalorder %s219, %s222
    %p228 = scmp.eq.s32.totalorder %s15, 0
    %p229 = por %p227, %p228
    %p230 = scmp.ne.s32.totalorder %s219, %s222
    %p231 = scmp.eq.s32.totalorder %s20, 1
    %p232 = por %p230, %p231
    %p233 = scmp.ne.s32.totalorder %s222, %s223
    %p234 = scmp.eq.s32.totalorder %s20, 0
    %p235 = por %p233, %p234
    %p236 = scmp.ne.s32.totalorder %s222, %s223
    %p237 = scmp.eq.s32.totalorder %s21, 1
    %p238 = por %p236, %p237
    %p240 = scmp.ne.s32.totalorder %s223, %s239
    %p241 = scmp.eq.s32.totalorder %s21, 0
    %p242 = por %p240, %p241
    %p243 = scmp.le.s32.totalorder 1, %s15
    %p244 = scmp.lt.s32.totalorder %s15, 3
    %p245 = pnand %p243, %p244
    %p246 = pneg %p245
    // Predicated region
    $region9: #{tpu_custom_call.1} parent=5 // pred_check
      _
    $region10: #{tpu_custom_call.1} parent=5 // pred_check_branch
      %248 = sbr.rel (%p245) target = $region12
    $region11: #{tpu_custom_call.1} parent=5 // pred_region
      %s249 = ssub.s32 %s15, 1
      // Predicated region
      $region13: #{tpu_custom_call.1} parent=11 // pred_check
        %p250 = pneg %p62
      $region14: #{tpu_custom_call.1} parent=11 // pred_check_branch
        %252 = sbr.rel (%p250) target = $region16
      $region15: #{tpu_custom_call.1} parent=11 // pred_region
        _
      $region16: #{tpu_custom_call.1} parent=11 // pred_fallthru
        _
      // Predicated region
      $region17: #{tpu_custom_call.1} parent=11 // pred_check
        %p253 = pneg %p83
      $region18: #{tpu_custom_call.1} parent=11 // pred_check_branch
        %255 = sbr.rel (%p253) target = $region20
      $region19: #{tpu_custom_call.1} parent=11 // pred_region
        _
      $region20: #{tpu_custom_call.1} parent=11 // pred_fallthru
        _
      // Predicated region
      $region21: #{tpu_custom_call.1} parent=11 // pred_check
        %p256 = pneg %p104
      $region22: #{tpu_custom_call.1} parent=11 // pred_check_branch
        %258 = sbr.rel (%p256) target = $region24
      $region23: #{tpu_custom_call.1} parent=11 // pred_region
        _
      $region24: #{tpu_custom_call.1} parent=11 // pred_fallthru
        _
      // Predicated region
      $region25: #{tpu_custom_call.1} parent=11 // pred_check
        %p259 = pneg %p125
      $region26: #{tpu_custom_call.1} parent=11 // pred_check_branch
        %261 = sbr.rel (%p259) target = $region28
      $region27: #{tpu_custom_call.1} parent=11 // pred_region
        _
      $region28: #{tpu_custom_call.1} parent=11 // pred_fallthru
        _
      // Predicated region
      $region29: #{tpu_custom_call.1} parent=11 // pred_check
        %p262 = pneg %p146
      $region30: #{tpu_custom_call.1} parent=11 // pred_check_branch
        %264 = sbr.rel (%p262) target = $region32
      $region31: #{tpu_custom_call.1} parent=11 // pred_region
        _
      $region32: #{tpu_custom_call.1} parent=11 // pred_fallthru
        _
      // Predicated region
      $region33: #{tpu_custom_call.1} parent=11 // pred_check
        %p265 = pneg %p167
      $region34: #{tpu_custom_call.1} parent=11 // pred_check_branch
        %267 = sbr.rel (%p265) target = $region36
      $region35: #{tpu_custom_call.1} parent=11 // pred_region
        _
      $region36: #{tpu_custom_call.1} parent=11 // pred_fallthru
        _
      // Predicated region
      $region37: #{tpu_custom_call.1} parent=11 // pred_check
        %p268 = pneg %p188
      $region38: #{tpu_custom_call.1} parent=11 // pred_check_branch
        %270 = sbr.rel (%p268) target = $region40
      $region39: #{tpu_custom_call.1} parent=11 // pred_region
        _
      $region40: #{tpu_custom_call.1} parent=11 // pred_fallthru
        _
      // Predicated region
      $region41: #{tpu_custom_call.1} parent=11 // pred_check
        %p271 = pneg %p209
      $region42: #{tpu_custom_call.1} parent=11 // pred_check_branch
        %273 = sbr.rel (%p271) target = $region44
      $region43: #{tpu_custom_call.1} parent=11 // pred_region
        _
      $region44: #{tpu_custom_call.1} parent=11 // pred_fallthru
        _
    $region12: #{tpu_custom_call.1} parent=5 // pred_fallthru
      _
    %p274 = scmp.lt.s32.totalorder %s15, 2
    // Predicated region
    $region45: #{tpu_custom_call.1} parent=5 // pred_check
      %p275 = pneg %p274
    $region46: #{tpu_custom_call.1} parent=5 // pred_check_branch
      %277 = sbr.rel (%p275) target = $region48
    $region47: #{tpu_custom_call.1} parent=5 // pred_region
      // Predicated region
      $region49: #{tpu_custom_call.1} parent=47 // pred_check
        %p278 = pneg %p35
      $region50: #{tpu_custom_call.1} parent=47 // pred_check_branch
        %280 = sbr.rel (%p278) target = $region52
      $region51: #{tpu_custom_call.1} parent=47 // pred_region
        %p281 = scmp.lt.s32.totalorder %s15, 1
        %s282 = scalar_select %p281, %s15, 1
        %s283 = smul.addr %s282, 54
        %s284 = smul.addr %s283, 8
        %s285 = scalar_lea.vmem %s0, %s284
      $region52: #{tpu_custom_call.1} parent=47 // pred_fallthru
        _
    $region48: #{tpu_custom_call.1} parent=5 // pred_fallthru
      _
    %p286 = scmp.le.s32.totalorder 1, %s15
    %p287 = scmp.lt.s32.totalorder %s15, 3
    %p288 = pnand %p286, %p287
    %p289 = pneg %p288
    // Predicated region
    $region53: #{tpu_custom_call.1} parent=5 // pred_check
      _
    $region54: #{tpu_custom_call.1} parent=5 // pred_check_branch
      %291 = sbr.rel (%p288) target = $region56
    $region55: #{tpu_custom_call.1} parent=5 // pred_region
      %s292 = ssub.s32 %s15, 1
      %p293 = scmp.lt.s32.totalorder %s20, 1
      %s294 = scalar_select %p293, %s20, 1
      %s295 = smul.addr %s294, 54
      %s296 = smul.addr %s295, 8
      %s297 = scalar_lea.vmem %s0, %s296
      %p298 = pneg %p41
      %p299 = pneg %p38
      %p300 = pneg %p62
      %p301 = pneg %p59
      %p302 = pneg %p83
      %p303 = pneg %p80
      %p304 = pneg %p104
      %p305 = pneg %p101
      %p306 = pneg %p125
      %p307 = pneg %p122
      %p308 = pneg %p146
      %p309 = pneg %p143
      %p310 = pneg %p167
      %p311 = pneg %p164
      %p312 = pneg %p188
      %p313 = pneg %p185
      %p314 = pneg %p209
      %p315 = pneg %p206
      %p316 = pneg %p235
      %p317 = pneg %p232
      %p318 = scmp.lt.s32.totalorder %s20, 1
      %s319 = scalar_select %p318, %s20, 1
      %s320 = smul.addr %s319, 32
      %s321 = smul.addr %s320, 8
      %s322 = scalar_lea.vmem %s9, %s321
      %p323 = scmp.lt.s32.totalorder %s20, 1
      %s324 = scalar_select %p323, %s20, 1
      %s325 = smul.addr %s324, 54
      %s326 = smul.addr %s325, 8
      %s327 = scalar_lea.vmem %s0, %s326
      %p328 = scmp.lt.s32.totalorder %s20, 1
      %s329 = scalar_select %p328, %s20, 1
      %s330 = smul.addr %s329, 32
      %s331 = smul.addr %s330, 8
      %s332 = scalar_lea.vmem %s9, %s331
      %v334 = vld [vmem:[%s327] sm:$0xff]
      %v335 = vld [vmem:[%s327 + $0x8] sm:$0xff]
      %v336 = vld [vmem:[%s327 + $0x10] sm:$0x3]
      %v337 = vld [vmem:[%s327 + $0x18] sm:$0xff]
      %v338 = vld [vmem:[%s327 + $0x20] sm:$0xff]
      %v339 = vld [vmem:[%s327 + $0x28] sm:$0x3]
      %v340 = vld [vmem:[%s327 + $0x30] sm:$0xff]
      %v341 = vld [vmem:[%s327 + $0x38] sm:$0xff]
      %v342 = vld [vmem:[%s327 + $0x40] sm:$0x3]
      %v343 = vld [vmem:[%s327 + $0x48] sm:$0xff]
      %v344 = vld [vmem:[%s327 + $0x50] sm:$0xff]
      %v345 = vld [vmem:[%s327 + $0x58] sm:$0x3]
      %v346 = vld [vmem:[%s327 + $0x60] sm:$0xff]
      %v347 = vld [vmem:[%s327 + $0x68] sm:$0xff]
      %v348 = vld [vmem:[%s327 + $0x70] sm:$0x3]
      %v349 = vld [vmem:[%s327 + $0x78] sm:$0xff]
      %v350 = vld [vmem:[%s327 + $0x80] sm:$0xff]
      %v351 = vld [vmem:[%s327 + $0x88] sm:$0x3]
      %v352 = vld [vmem:[%s327 + $0x90] sm:$0xff]
      %v353 = vld [vmem:[%s327 + $0x98] sm:$0xff]
      %v354 = vld [vmem:[%s327 + $0xa0] sm:$0x3]
      %v355 = vld [vmem:[%s327 + $0xa8] sm:$0xff]
      %v356 = vld [vmem:[%s327 + $0xb0] sm:$0xff]
      %v357 = vld [vmem:[%s327 + $0xb8] sm:$0x3]
      %v358 = vld [vmem:[%s327 + $0xc0] sm:$0xff]
      %v359 = vld [vmem:[%s327 + $0xc8] sm:$0xff]
      %v360 = vld [vmem:[%s327 + $0xd0] sm:$0x3]
      %v361 = vld [vmem:[%s327 + $0xd8] sm:$0xff]
      %v362 = vld [vmem:[%s327 + $0xe0] sm:$0xff]
      %v363 = vld [vmem:[%s327 + $0xe8] sm:$0x3]
      %v364 = vld [vmem:[%s327 + $0xf0] sm:$0xff]
      %v365 = vld [vmem:[%s327 + $0xf8] sm:$0xff]
      %v366 = vld [vmem:[%s327 + $0x100] sm:$0x3]
      %v367 = vld [vmem:[%s327 + $0x108] sm:$0xff]
      %v368 = vld [vmem:[%s327 + $0x110] sm:$0xff]
      %v369 = vld [vmem:[%s327 + $0x118] sm:$0x3]
      %v370 = vld [vmem:[%s327 + $0x120] sm:$0xff]
      %v371 = vld [vmem:[%s327 + $0x128] sm:$0xff]
      %v372 = vld [vmem:[%s327 + $0x130] sm:$0x3]
      %v373 = vld [vmem:[%s327 + $0x138] sm:$0xff]
      %v374 = vld [vmem:[%s327 + $0x140] sm:$0xff]
      %v375 = vld [vmem:[%s327 + $0x148] sm:$0x3]
      %v376 = vld [vmem:[%s327 + $0x150] sm:$0xff]
      %v377 = vld [vmem:[%s327 + $0x158] sm:$0xff]
      %v378 = vld [vmem:[%s327 + $0x160] sm:$0x3]
      %v379 = vld [vmem:[%s327 + $0x168] sm:$0xff]
      %v380 = vld [vmem:[%s327 + $0x170] sm:$0xff]
      %v381 = vld [vmem:[%s327 + $0x178] sm:$0x3]
      %v382 = vld [vmem:[%s327 + $0x180] sm:$0xff]
      %v383 = vld [vmem:[%s327 + $0x188] sm:$0xff]
      %v384 = vld [vmem:[%s327 + $0x190] sm:$0x3]
      %v385 = vld [vmem:[%s327 + $0x198] sm:$0xff]
      %v386 = vld [vmem:[%s327 + $0x1a0] sm:$0xff]
      %v387 = vld [vmem:[%s327 + $0x1a8] sm:$0x3]
      %v388 = vld [vmem:[%s1] sm:$0x7]
      %v389 = vld [vmem:[%s1 + $0x4] sm:$0x7]
      %v390 = vld [vmem:[%s1 + $0x8] sm:$0x7]
      %v391 = vlaneseq
      %v392 = vshrl.u32 %v391, 7
      %v393 = vsub.s32 1, %v392
      %v394 = vrot.slane %v389, %v393
      %v395 = vmul.f32 %v337, %v394
      %v396 = vmul.f32 %v338, %v394
      %v397 = vmul.f32 %v339, %v394
      %v398 = vmul.f32 %v340, %v394
      %v399 = vmul.f32 %v341, %v394
      %v400 = vmul.f32 %v342, %v394
      %v401 = vmul.f32 %v343, %v394
      %v402 = vmul.f32 %v344, %v394
      %v403 = vmul.f32 %v345, %v394
      %v404 = vmul.f32 %v346, %v394
      %v405 = vmul.f32 %v347, %v394
      %v406 = vmul.f32 %v348, %v394
      %v407 = vmul.f32 %v349, %v394
      %v408 = vmul.f32 %v350, %v394
      %v409 = vmul.f32 %v351, %v394
      %v410 = vmul.f32 %v352, %v394
      %v411 = vmul.f32 %v353, %v394
      %v412 = vmul.f32 %v354, %v394
      %v413 = vmul.f32 %v355, %v394
      %v414 = vmul.f32 %v356, %v394
      %v415 = vmul.f32 %v357, %v394
      %v416 = vmul.f32 %v358, %v394
      %v417 = vmul.f32 %v359, %v394
      %v418 = vmul.f32 %v360, %v394
      %v419 = vmul.f32 %v361, %v394
      %v420 = vmul.f32 %v362, %v394
      %v421 = vmul.f32 %v363, %v394
      %v422 = vmul.f32 %v364, %v394
      %v423 = vmul.f32 %v365, %v394
      %v424 = vmul.f32 %v366, %v394
      %v425 = vmul.f32 %v367, %v394
      %v426 = vmul.f32 %v368, %v394
      %v427 = vmul.f32 %v369, %v394
      %v428 = vmul.f32 %v370, %v394
      %v429 = vmul.f32 %v371, %v394
      %v430 = vmul.f32 %v372, %v394
      %v431 = vmul.f32 %v373, %v394
      %v432 = vmul.f32 %v374, %v394
      %v433 = vmul.f32 %v375, %v394
      %v434 = vmul.f32 %v376, %v394
      %v435 = vmul.f32 %v377, %v394
      %v436 = vmul.f32 %v378, %v394
      %v437 = vmul.f32 %v379, %v394
      %v438 = vmul.f32 %v380, %v394
      %v439 = vmul.f32 %v381, %v394
      %v440 = vmul.f32 %v382, %v394
      %v441 = vmul.f32 %v383, %v394
      %v442 = vmul.f32 %v384, %v394
      %v443 = vlaneseq
      %v444 = vshrl.u32 %v443, 7
      %v445 = vsub.s32 0, %v444
      %v446 = vrot.slane %v388, %v445
      %v447 = vmul.f32 %v334, %v446
      %v448 = vmul.f32 %v335, %v446
      %v449 = vmul.f32 %v337, %v446
      %v450 = vmul.f32 %v338, %v446
      %v451 = vmul.f32 %v340, %v446
      %v452 = vmul.f32 %v341, %v446
      %v453 = vmul.f32 %v343, %v446
      %v454 = vmul.f32 %v344, %v446
      %v455 = vmul.f32 %v346, %v446
      %v456 = vmul.f32 %v347, %v446
      %v457 = vmul.f32 %v349, %v446
      %v458 = vmul.f32 %v350, %v446
      %v459 = vmul.f32 %v352, %v446
      %v460 = vmul.f32 %v353, %v446
      %v461 = vmul.f32 %v355, %v446
      %v462 = vmul.f32 %v356, %v446
      %v463 = vmul.f32 %v358, %v446
      %v464 = vmul.f32 %v359, %v446
      %v465 = vmul.f32 %v361, %v446
      %v466 = vmul.f32 %v362, %v446
      %v467 = vmul.f32 %v364, %v446
      %v468 = vmul.f32 %v365, %v446
      %v469 = vmul.f32 %v367, %v446
      %v470 = vmul.f32 %v368, %v446
      %v471 = vmul.f32 %v370, %v446
      %v472 = vmul.f32 %v371, %v446
      %v473 = vmul.f32 %v373, %v446
      %v474 = vmul.f32 %v374, %v446
      %v475 = vmul.f32 %v376, %v446
      %v476 = vmul.f32 %v377, %v446
      %v477 = vmul.f32 %v379, %v446
      %v478 = vmul.f32 %v380, %v446
      %vm511 = vcmask 1040384
      %v512 = vrot.slane %v447, 7
      %v513 = vrot.slane %v448, 7
      %v514 = vsel %vm511, %v512, %v513
      %v515 = vrot.slane %v449, 7
      %v516 = vrot.slane %v450, 7
      %v517 = vsel %vm511, %v515, %v516
      %v518 = vrot.slane %v451, 7
      %v519 = vrot.slane %v452, 7
      %v520 = vsel %vm511, %v518, %v519
      %v521 = vrot.slane %v453, 7
      %v522 = vrot.slane %v454, 7
      %v523 = vsel %vm511, %v521, %v522
      %v524 = vrot.slane %v455, 7
      %v525 = vrot.slane %v456, 7
      %v526 = vsel %vm511, %v524, %v525
      %v527 = vrot.slane %v457, 7
      %v528 = vrot.slane %v458, 7
      %v529 = vsel %vm511, %v527, %v528
      %v530 = vrot.slane %v459, 7
      %v531 = vrot.slane %v460, 7
      %v532 = vsel %vm511, %v530, %v531
      %v533 = vrot.slane %v461, 7
      %v534 = vrot.slane %v462, 7
      %v535 = vsel %vm511, %v533, %v534
      %v536 = vrot.slane %v463, 7
      %v537 = vrot.slane %v464, 7
      %v538 = vsel %vm511, %v536, %v537
      %v539 = vrot.slane %v465, 7
      %v540 = vrot.slane %v466, 7
      %v541 = vsel %vm511, %v539, %v540
      %v542 = vrot.slane %v467, 7
      %v543 = vrot.slane %v468, 7
      %v544 = vsel %vm511, %v542, %v543
      %v545 = vrot.slane %v469, 7
      %v546 = vrot.slane %v470, 7
      %v547 = vsel %vm511, %v545, %v546
      %v548 = vrot.slane %v471, 7
      %v549 = vrot.slane %v472, 7
      %v550 = vsel %vm511, %v548, %v549
      %v551 = vrot.slane %v473, 7
      %v552 = vrot.slane %v474, 7
      %v553 = vsel %vm511, %v551, %v552
      %v554 = vrot.slane %v475, 7
      %v555 = vrot.slane %v476, 7
      %v556 = vsel %vm511, %v554, %v555
      %v557 = vrot.slane %v477, 7
      %v558 = vrot.slane %v478, 7
      %v559 = vsel %vm511, %v557, %v558
      %v608 = vadd.f32 %v395, %v512
      %v609 = vadd.f32 %v396, %v514
      %v610 = vadd.f32 %v397, %v513
      %v611 = vadd.f32 %v398, %v515
      %v612 = vadd.f32 %v399, %v517
      %v613 = vadd.f32 %v400, %v516
      %v614 = vadd.f32 %v401, %v518
      %v615 = vadd.f32 %v402, %v520
      %v616 = vadd.f32 %v403, %v519
      %v617 = vadd.f32 %v404, %v521
      %v618 = vadd.f32 %v405, %v523
      %v619 = vadd.f32 %v406, %v522
      %v620 = vadd.f32 %v407, %v524
      %v621 = vadd.f32 %v408, %v526
      %v622 = vadd.f32 %v409, %v525
      %v623 = vadd.f32 %v410, %v527
      %v624 = vadd.f32 %v411, %v529
      %v625 = vadd.f32 %v412, %v528
      %v626 = vadd.f32 %v413, %v530
      %v627 = vadd.f32 %v414, %v532
      %v628 = vadd.f32 %v415, %v531
      %v629 = vadd.f32 %v416, %v533
      %v630 = vadd.f32 %v417, %v535
      %v631 = vadd.f32 %v418, %v534
      %v632 = vadd.f32 %v419, %v536
      %v633 = vadd.f32 %v420, %v538
      %v634 = vadd.f32 %v421, %v537
      %v635 = vadd.f32 %v422, %v539
      %v636 = vadd.f32 %v423, %v541
      %v637 = vadd.f32 %v424, %v540
      %v638 = vadd.f32 %v425, %v542
      %v639 = vadd.f32 %v426, %v544
      %v640 = vadd.f32 %v427, %v543
      %v641 = vadd.f32 %v428, %v545
      %v642 = vadd.f32 %v429, %v547
      %v643 = vadd.f32 %v430, %v546
      %v644 = vadd.f32 %v431, %v548
      %v645 = vadd.f32 %v432, %v550
      %v646 = vadd.f32 %v433, %v549
      %v647 = vadd.f32 %v434, %v551
      %v648 = vadd.f32 %v435, %v553
      %v649 = vadd.f32 %v436, %v552
      %v650 = vadd.f32 %v437, %v554
      %v651 = vadd.f32 %v438, %v556
      %v652 = vadd.f32 %v439, %v555
      %v653 = vadd.f32 %v440, %v557
      %v654 = vadd.f32 %v441, %v559
      %v655 = vadd.f32 %v442, %v558
      %v656 = vlaneseq
      %v657 = vshrl.u32 %v656, 7
      %v658 = vsub.s32 1, %v657
      %v659 = vrot.slane %v388, %v658
      %v660 = vmul.f32 %v334, %v659
      %v661 = vmul.f32 %v335, %v659
      %v662 = vmul.f32 %v336, %v659
      %v663 = vmul.f32 %v337, %v659
      %v664 = vmul.f32 %v338, %v659
      %v665 = vmul.f32 %v339, %v659
      %v666 = vmul.f32 %v340, %v659
      %v667 = vmul.f32 %v341, %v659
      %v668 = vmul.f32 %v342, %v659
      %v669 = vmul.f32 %v343, %v659
      %v670 = vmul.f32 %v344, %v659
      %v671 = vmul.f32 %v345, %v659
      %v672 = vmul.f32 %v346, %v659
      %v673 = vmul.f32 %v347, %v659
      %v674 = vmul.f32 %v348, %v659
      %v675 = vmul.f32 %v349, %v659
      %v676 = vmul.f32 %v350, %v659
      %v677 = vmul.f32 %v351, %v659
      %v678 = vmul.f32 %v352, %v659
      %v679 = vmul.f32 %v353, %v659
      %v680 = vmul.f32 %v354, %v659
      %v681 = vmul.f32 %v355, %v659
      %v682 = vmul.f32 %v356, %v659
      %v683 = vmul.f32 %v357, %v659
      %v684 = vmul.f32 %v358, %v659
      %v685 = vmul.f32 %v359, %v659
      %v686 = vmul.f32 %v360, %v659
      %v687 = vmul.f32 %v361, %v659
      %v688 = vmul.f32 %v362, %v659
      %v689 = vmul.f32 %v363, %v659
      %v690 = vmul.f32 %v364, %v659
      %v691 = vmul.f32 %v365, %v659
      %v692 = vmul.f32 %v366, %v659
      %v693 = vmul.f32 %v367, %v659
      %v694 = vmul.f32 %v368, %v659
      %v695 = vmul.f32 %v369, %v659
      %v696 = vmul.f32 %v370, %v659
      %v697 = vmul.f32 %v371, %v659
      %v698 = vmul.f32 %v372, %v659
      %v699 = vmul.f32 %v373, %v659
      %v700 = vmul.f32 %v374, %v659
      %v701 = vmul.f32 %v375, %v659
      %v702 = vmul.f32 %v376, %v659
      %v703 = vmul.f32 %v377, %v659
      %v704 = vmul.f32 %v378, %v659
      %v705 = vmul.f32 %v379, %v659
      %v706 = vmul.f32 %v380, %v659
      %v707 = vmul.f32 %v381, %v659
      %v708 = vadd.f32 %v608, %v660
      %v709 = vadd.f32 %v609, %v661
      %v710 = vadd.f32 %v610, %v662
      %v711 = vadd.f32 %v611, %v663
      %v712 = vadd.f32 %v612, %v664
      %v713 = vadd.f32 %v613, %v665
      %v714 = vadd.f32 %v614, %v666
      %v715 = vadd.f32 %v615, %v667
      %v716 = vadd.f32 %v616, %v668
      %v717 = vadd.f32 %v617, %v669
      %v718 = vadd.f32 %v618, %v670
      %v719 = vadd.f32 %v619, %v671
      %v720 = vadd.f32 %v620, %v672
      %v721 = vadd.f32 %v621, %v673
      %v722 = vadd.f32 %v622, %v674
      %v723 = vadd.f32 %v623, %v675
      %v724 = vadd.f32 %v624, %v676
      %v725 = vadd.f32 %v625, %v677
      %v726 = vadd.f32 %v626, %v678
      %v727 = vadd.f32 %v627, %v679
      %v728 = vadd.f32 %v628, %v680
      %v729 = vadd.f32 %v629, %v681
      %v730 = vadd.f32 %v630, %v682
      %v731 = vadd.f32 %v631, %v683
      %v732 = vadd.f32 %v632, %v684
      %v733 = vadd.f32 %v633, %v685
      %v734 = vadd.f32 %v634, %v686
      %v735 = vadd.f32 %v635, %v687
      %v736 = vadd.f32 %v636, %v688
      %v737 = vadd.f32 %v637, %v689
      %v738 = vadd.f32 %v638, %v690
      %v739 = vadd.f32 %v639, %v691
      %v740 = vadd.f32 %v640, %v692
      %v741 = vadd.f32 %v641, %v693
      %v742 = vadd.f32 %v642, %v694
      %v743 = vadd.f32 %v643, %v695
      %v744 = vadd.f32 %v644, %v696
      %v745 = vadd.f32 %v645, %v697
      %v746 = vadd.f32 %v646, %v698
      %v747 = vadd.f32 %v647, %v699
      %v748 = vadd.f32 %v648, %v700
      %v749 = vadd.f32 %v649, %v701
      %v750 = vadd.f32 %v650, %v702
      %v751 = vadd.f32 %v651, %v703
      %v752 = vadd.f32 %v652, %v704
      %v753 = vadd.f32 %v653, %v705
      %v754 = vadd.f32 %v654, %v706
      %v755 = vadd.f32 %v655, %v707
      %v756 = vlaneseq
      %v757 = vshrl.u32 %v756, 7
      %v758 = vsub.s32 2, %v757
      %v759 = vrot.slane %v388, %v758
      %v760 = vmul.f32 %v334, %v759
      %v761 = vmul.f32 %v335, %v759
      %v762 = vmul.f32 %v336, %v759
      %v763 = vmul.f32 %v337, %v759
      %v764 = vmul.f32 %v338, %v759
      %v765 = vmul.f32 %v339, %v759
      %v766 = vmul.f32 %v340, %v759
      %v767 = vmul.f32 %v341, %v759
      %v768 = vmul.f32 %v342, %v759
      %v769 = vmul.f32 %v343, %v759
      %v770 = vmul.f32 %v344, %v759
      %v771 = vmul.f32 %v345, %v759
      %v772 = vmul.f32 %v346, %v759
      %v773 = vmul.f32 %v347, %v759
      %v774 = vmul.f32 %v348, %v759
      %v775 = vmul.f32 %v349, %v759
      %v776 = vmul.f32 %v350, %v759
      %v777 = vmul.f32 %v351, %v759
      %v778 = vmul.f32 %v352, %v759
      %v779 = vmul.f32 %v353, %v759
      %v780 = vmul.f32 %v354, %v759
      %v781 = vmul.f32 %v355, %v759
      %v782 = vmul.f32 %v356, %v759
      %v783 = vmul.f32 %v357, %v759
      %v784 = vmul.f32 %v358, %v759
      %v785 = vmul.f32 %v359, %v759
      %v786 = vmul.f32 %v360, %v759
      %v787 = vmul.f32 %v361, %v759
      %v788 = vmul.f32 %v362, %v759
      %v789 = vmul.f32 %v363, %v759
      %v790 = vmul.f32 %v364, %v759
      %v791 = vmul.f32 %v365, %v759
      %v792 = vmul.f32 %v366, %v759
      %v793 = vmul.f32 %v367, %v759
      %v794 = vmul.f32 %v368, %v759
      %v795 = vmul.f32 %v369, %v759
      %v796 = vmul.f32 %v370, %v759
      %v797 = vmul.f32 %v371, %v759
      %v798 = vmul.f32 %v372, %v759
      %v799 = vmul.f32 %v373, %v759
      %v800 = vmul.f32 %v374, %v759
      %v801 = vmul.f32 %v375, %v759
      %v802 = vmul.f32 %v376, %v759
      %v803 = vmul.f32 %v377, %v759
      %v804 = vmul.f32 %v378, %v759
      %v805 = vmul.f32 %v379, %v759
      %v806 = vmul.f32 %v380, %v759
      %v807 = vmul.f32 %v381, %v759
      %vm856 = vcmask 1046528
      %v857 = vrot.slane %v760, 1
      %v858 = vrot.slane %v761, 1
      %v859 = vsel %vm856, %v857, %v858
      %v860 = vrot.slane %v762, 1
      %v861 = vsel %vm856, %v858, %v860
      %v862 = vrot.slane %v763, 1
      %v863 = vrot.slane %v764, 1
      %v864 = vsel %vm856, %v862, %v863
      %v865 = vrot.slane %v765, 1
      %v866 = vsel %vm856, %v863, %v865
      %v867 = vrot.slane %v766, 1
      %v868 = vrot.slane %v767, 1
      %v869 = vsel %vm856, %v867, %v868
      %v870 = vrot.slane %v768, 1
      %v871 = vsel %vm856, %v868, %v870
      %v872 = vrot.slane %v769, 1
      %v873 = vrot.slane %v770, 1
      %v874 = vsel %vm856, %v872, %v873
      %v875 = vrot.slane %v771, 1
      %v876 = vsel %vm856, %v873, %v875
      %v877 = vrot.slane %v772, 1
      %v878 = vrot.slane %v773, 1
      %v879 = vsel %vm856, %v877, %v878
      %v880 = vrot.slane %v774, 1
      %v881 = vsel %vm856, %v878, %v880
      %v882 = vrot.slane %v775, 1
      %v883 = vrot.slane %v776, 1
      %v884 = vsel %vm856, %v882, %v883
      %v885 = vrot.slane %v777, 1
      %v886 = vsel %vm856, %v883, %v885
      %v887 = vrot.slane %v778, 1
      %v888 = vrot.slane %v779, 1
      %v889 = vsel %vm856, %v887, %v888
      %v890 = vrot.slane %v780, 1
      %v891 = vsel %vm856, %v888, %v890
      %v892 = vrot.slane %v781, 1
      %v893 = vrot.slane %v782, 1
      %v894 = vsel %vm856, %v892, %v893
      %v895 = vrot.slane %v783, 1
      %v896 = vsel %vm856, %v893, %v895
      %v897 = vrot.slane %v784, 1
      %v898 = vrot.slane %v785, 1
      %v899 = vsel %vm856, %v897, %v898
      %v900 = vrot.slane %v786, 1
      %v901 = vsel %vm856, %v898, %v900
      %v902 = vrot.slane %v787, 1
      %v903 = vrot.slane %v788, 1
      %v904 = vsel %vm856, %v902, %v903
      %v905 = vrot.slane %v789, 1
      %v906 = vsel %vm856, %v903, %v905
      %v907 = vrot.slane %v790, 1
      %v908 = vrot.slane %v791, 1
      %v909 = vsel %vm856, %v907, %v908
      %v910 = vrot.slane %v792, 1
      %v911 = vsel %vm856, %v908, %v910
      %v912 = vrot.slane %v793, 1
      %v913 = vrot.slane %v794, 1
      %v914 = vsel %vm856, %v912, %v913
      %v915 = vrot.slane %v795, 1
      %v916 = vsel %vm856, %v913, %v915
      %v917 = vrot.slane %v796, 1
      %v918 = vrot.slane %v797, 1
      %v919 = vsel %vm856, %v917, %v918
      %v920 = vrot.slane %v798, 1
      %v921 = vsel %vm856, %v918, %v920
      %v922 = vrot.slane %v799, 1
      %v923 = vrot.slane %v800, 1
      %v924 = vsel %vm856, %v922, %v923
      %v925 = vrot.slane %v801, 1
      %v926 = vsel %vm856, %v923, %v925
      %v927 = vrot.slane %v802, 1
      %v928 = vrot.slane %v803, 1
      %v929 = vsel %vm856, %v927, %v928
      %v930 = vrot.slane %v804, 1
      %v931 = vsel %vm856, %v928, %v930
      %v932 = vrot.slane %v805, 1
      %v933 = vrot.slane %v806, 1
      %v934 = vsel %vm856, %v932, %v933
      %v935 = vrot.slane %v807, 1
      %v936 = vsel %vm856, %v933, %v935
      %v985 = vadd.f32 %v708, %v859
      %v986 = vadd.f32 %v709, %v861
      %v987 = vadd.f32 %v710, %v860
      %v988 = vadd.f32 %v711, %v864
      %v989 = vadd.f32 %v712, %v866
      %v990 = vadd.f32 %v713, %v865
      %v991 = vadd.f32 %v714, %v869
      %v992 = vadd.f32 %v715, %v871
      %v993 = vadd.f32 %v716, %v870
      %v994 = vadd.f32 %v717, %v874
      %v995 = vadd.f32 %v718, %v876
      %v996 = vadd.f32 %v719, %v875
      %v997 = vadd.f32 %v720, %v879
      %v998 = vadd.f32 %v721, %v881
      %v999 = vadd.f32 %v722, %v880
      %v1000 = vadd.f32 %v723, %v884
      %v1001 = vadd.f32 %v724, %v886
      %v1002 = vadd.f32 %v725, %v885
      %v1003 = vadd.f32 %v726, %v889
      %v1004 = vadd.f32 %v727, %v891
      %v1005 = vadd.f32 %v728, %v890
      %v1006 = vadd.f32 %v729, %v894
      %v1007 = vadd.f32 %v730, %v896
      %v1008 = vadd.f32 %v731, %v895
      %v1009 = vadd.f32 %v732, %v899
      %v1010 = vadd.f32 %v733, %v901
      %v1011 = vadd.f32 %v734, %v900
      %v1012 = vadd.f32 %v735, %v904
      %v1013 = vadd.f32 %v736, %v906
      %v1014 = vadd.f32 %v737, %v905
      %v1015 = vadd.f32 %v738, %v909
      %v1016 = vadd.f32 %v739, %v911
      %v1017 = vadd.f32 %v740, %v910
      %v1018 = vadd.f32 %v741, %v914
      %v1019 = vadd.f32 %v742, %v916
      %v1020 = vadd.f32 %v743, %v915
      %v1021 = vadd.f32 %v744, %v919
      %v1022 = vadd.f32 %v745, %v921
      %v1023 = vadd.f32 %v746, %v920
      %v1024 = vadd.f32 %v747, %v924
      %v1025 = vadd.f32 %v748, %v926
      %v1026 = vadd.f32 %v749, %v925
      %v1027 = vadd.f32 %v750, %v929
      %v1028 = vadd.f32 %v751, %v931
      %v1029 = vadd.f32 %v752, %v930
      %v1030 = vadd.f32 %v753, %v934
      %v1031 = vadd.f32 %v754, %v936
      %v1032 = vadd.f32 %v755, %v935
      %v1033 = vlaneseq
      %v1034 = vshrl.u32 %v1033, 7
      %v1035 = vsub.s32 0, %v1034
      %v1036 = vrot.slane %v389, %v1035
      %v1037 = vmul.f32 %v337, %v1036
      %v1038 = vmul.f32 %v338, %v1036
      %v1039 = vmul.f32 %v340, %v1036
      %v1040 = vmul.f32 %v341, %v1036
      %v1041 = vmul.f32 %v343, %v1036
      %v1042 = vmul.f32 %v344, %v1036
      %v1043 = vmul.f32 %v346, %v1036
      %v1044 = vmul.f32 %v347, %v1036
      %v1045 = vmul.f32 %v349, %v1036
      %v1046 = vmul.f32 %v350, %v1036
      %v1047 = vmul.f32 %v352, %v1036
      %v1048 = vmul.f32 %v353, %v1036
      %v1049 = vmul.f32 %v355, %v1036
      %v1050 = vmul.f32 %v356, %v1036
      %v1051 = vmul.f32 %v358, %v1036
      %v1052 = vmul.f32 %v359, %v1036
      %v1053 = vmul.f32 %v361, %v1036
      %v1054 = vmul.f32 %v362, %v1036
      %v1055 = vmul.f32 %v364, %v1036
      %v1056 = vmul.f32 %v365, %v1036
      %v1057 = vmul.f32 %v367, %v1036
      %v1058 = vmul.f32 %v368, %v1036
      %v1059 = vmul.f32 %v370, %v1036
      %v1060 = vmul.f32 %v371, %v1036
      %v1061 = vmul.f32 %v373, %v1036
      %v1062 = vmul.f32 %v374, %v1036
      %v1063 = vmul.f32 %v376, %v1036
      %v1064 = vmul.f32 %v377, %v1036
      %v1065 = vmul.f32 %v379, %v1036
      %v1066 = vmul.f32 %v380, %v1036
      %v1067 = vmul.f32 %v382, %v1036
      %v1068 = vmul.f32 %v383, %v1036
      %v1101 = vrot.slane %v1037, 7
      %v1102 = vrot.slane %v1038, 7
      %v1103 = vsel %vm511, %v1101, %v1102
      %v1104 = vrot.slane %v1039, 7
      %v1105 = vrot.slane %v1040, 7
      %v1106 = vsel %vm511, %v1104, %v1105
      %v1107 = vrot.slane %v1041, 7
      %v1108 = vrot.slane %v1042, 7
      %v1109 = vsel %vm511, %v1107, %v1108
      %v1110 = vrot.slane %v1043, 7
      %v1111 = vrot.slane %v1044, 7
      %v1112 = vsel %vm511, %v1110, %v1111
      %v1113 = vrot.slane %v1045, 7
      %v1114 = vrot.slane %v1046, 7
      %v1115 = vsel %vm511, %v1113, %v1114
      %v1116 = vrot.slane %v1047, 7
      %v1117 = vrot.slane %v1048, 7
      %v1118 = vsel %vm511, %v1116, %v1117
      %v1119 = vrot.slane %v1049, 7
      %v1120 = vrot.slane %v1050, 7
      %v1121 = vsel %vm511, %v1119, %v1120
      %v1122 = vrot.slane %v1051, 7
      %v1123 = vrot.slane %v1052, 7
      %v1124 = vsel %vm511, %v1122, %v1123
      %v1125 = vrot.slane %v1053, 7
      %v1126 = vrot.slane %v1054, 7
      %v1127 = vsel %vm511, %v1125, %v1126
      %v1128 = vrot.slane %v1055, 7
      %v1129 = vrot.slane %v1056, 7
      %v1130 = vsel %vm511, %v1128, %v1129
      %v1131 = vrot.slane %v1057, 7
      %v1132 = vrot.slane %v1058, 7
      %v1133 = vsel %vm511, %v1131, %v1132
      %v1134 = vrot.slane %v1059, 7
      %v1135 = vrot.slane %v1060, 7
      %v1136 = vsel %vm511, %v1134, %v1135
      %v1137 = vrot.slane %v1061, 7
      %v1138 = vrot.slane %v1062, 7
      %v1139 = vsel %vm511, %v1137, %v1138
      %v1140 = vrot.slane %v1063, 7
      %v1141 = vrot.slane %v1064, 7
      %v1142 = vsel %vm511, %v1140, %v1141
      %v1143 = vrot.slane %v1065, 7
      %v1144 = vrot.slane %v1066, 7
      %v1145 = vsel %vm511, %v1143, %v1144
      %v1146 = vrot.slane %v1067, 7
      %v1147 = vrot.slane %v1068, 7
      %v1148 = vsel %vm511, %v1146, %v1147
      %v1197 = vadd.f32 %v985, %v1101
      %v1198 = vadd.f32 %v986, %v1103
      %v1199 = vadd.f32 %v987, %v1102
      %v1200 = vadd.f32 %v988, %v1104
      %v1201 = vadd.f32 %v989, %v1106
      %v1202 = vadd.f32 %v990, %v1105
      %v1203 = vadd.f32 %v991, %v1107
      %v1204 = vadd.f32 %v992, %v1109
      %v1205 = vadd.f32 %v993, %v1108
      %v1206 = vadd.f32 %v994, %v1110
      %v1207 = vadd.f32 %v995, %v1112
      %v1208 = vadd.f32 %v996, %v1111
      %v1209 = vadd.f32 %v997, %v1113
      %v1210 = vadd.f32 %v998, %v1115
      %v1211 = vadd.f32 %v999, %v1114
      %v1212 = vadd.f32 %v1000, %v1116
      %v1213 = vadd.f32 %v1001, %v1118
      %v1214 = vadd.f32 %v1002, %v1117
      %v1215 = vadd.f32 %v1003, %v1119
      %v1216 = vadd.f32 %v1004, %v1121
      %v1217 = vadd.f32 %v1005, %v1120
      %v1218 = vadd.f32 %v1006, %v1122
      %v1219 = vadd.f32 %v1007, %v1124
      %v1220 = vadd.f32 %v1008, %v1123
      %v1221 = vadd.f32 %v1009, %v1125
      %v1222 = vadd.f32 %v1010, %v1127
      %v1223 = vadd.f32 %v1011, %v1126
      %v1224 = vadd.f32 %v1012, %v1128
      %v1225 = vadd.f32 %v1013, %v1130
      %v1226 = vadd.f32 %v1014, %v1129
      %v1227 = vadd.f32 %v1015, %v1131
      %v1228 = vadd.f32 %v1016, %v1133
      %v1229 = vadd.f32 %v1017, %v1132
      %v1230 = vadd.f32 %v1018, %v1134
      %v1231 = vadd.f32 %v1019, %v1136
      %v1232 = vadd.f32 %v1020, %v1135
      %v1233 = vadd.f32 %v1021, %v1137
      %v1234 = vadd.f32 %v1022, %v1139
      %v1235 = vadd.f32 %v1023, %v1138
      %v1236 = vadd.f32 %v1024, %v1140
      %v1237 = vadd.f32 %v1025, %v1142
      %v1238 = vadd.f32 %v1026, %v1141
      %v1239 = vadd.f32 %v1027, %v1143
      %v1240 = vadd.f32 %v1028, %v1145
      %v1241 = vadd.f32 %v1029, %v1144
      %v1242 = vadd.f32 %v1030, %v1146
      %v1243 = vadd.f32 %v1031, %v1148
      %v1244 = vadd.f32 %v1032, %v1147
      %v1245 = vlaneseq
      %v1246 = vshrl.u32 %v1245, 7
      %v1247 = vsub.s32 2, %v1246
      %v1248 = vrot.slane %v389, %v1247
      %v1249 = vmul.f32 %v337, %v1248
      %v1250 = vmul.f32 %v338, %v1248
      %v1251 = vmul.f32 %v339, %v1248
      %v1252 = vmul.f32 %v340, %v1248
      %v1253 = vmul.f32 %v341, %v1248
      %v1254 = vmul.f32 %v342, %v1248
      %v1255 = vmul.f32 %v343, %v1248
      %v1256 = vmul.f32 %v344, %v1248
      %v1257 = vmul.f32 %v345, %v1248
      %v1258 = vmul.f32 %v346, %v1248
      %v1259 = vmul.f32 %v347, %v1248
      %v1260 = vmul.f32 %v348, %v1248
      %v1261 = vmul.f32 %v349, %v1248
      %v1262 = vmul.f32 %v350, %v1248
      %v1263 = vmul.f32 %v351, %v1248
      %v1264 = vmul.f32 %v352, %v1248
      %v1265 = vmul.f32 %v353, %v1248
      %v1266 = vmul.f32 %v354, %v1248
      %v1267 = vmul.f32 %v355, %v1248
      %v1268 = vmul.f32 %v356, %v1248
      %v1269 = vmul.f32 %v357, %v1248
      %v1270 = vmul.f32 %v358, %v1248
      %v1271 = vmul.f32 %v359, %v1248
      %v1272 = vmul.f32 %v360, %v1248
      %v1273 = vmul.f32 %v361, %v1248
      %v1274 = vmul.f32 %v362, %v1248
      %v1275 = vmul.f32 %v363, %v1248
      %v1276 = vmul.f32 %v364, %v1248
      %v1277 = vmul.f32 %v365, %v1248
      %v1278 = vmul.f32 %v366, %v1248
      %v1279 = vmul.f32 %v367, %v1248
      %v1280 = vmul.f32 %v368, %v1248
      %v1281 = vmul.f32 %v369, %v1248
      %v1282 = vmul.f32 %v370, %v1248
      %v1283 = vmul.f32 %v371, %v1248
      %v1284 = vmul.f32 %v372, %v1248
      %v1285 = vmul.f32 %v373, %v1248
      %v1286 = vmul.f32 %v374, %v1248
      %v1287 = vmul.f32 %v375, %v1248
      %v1288 = vmul.f32 %v376, %v1248
      %v1289 = vmul.f32 %v377, %v1248
      %v1290 = vmul.f32 %v378, %v1248
      %v1291 = vmul.f32 %v379, %v1248
      %v1292 = vmul.f32 %v380, %v1248
      %v1293 = vmul.f32 %v381, %v1248
      %v1294 = vmul.f32 %v382, %v1248
      %v1295 = vmul.f32 %v383, %v1248
      %v1296 = vmul.f32 %v384, %v1248
      %v1345 = vrot.slane %v1249, 1
      %v1346 = vrot.slane %v1250, 1
      %v1347 = vsel %vm856, %v1345, %v1346
      %v1348 = vrot.slane %v1251, 1
      %v1349 = vsel %vm856, %v1346, %v1348
      %v1350 = vrot.slane %v1252, 1
      %v1351 = vrot.slane %v1253, 1
      %v1352 = vsel %vm856, %v1350, %v1351
      %v1353 = vrot.slane %v1254, 1
      %v1354 = vsel %vm856, %v1351, %v1353
      %v1355 = vrot.slane %v1255, 1
      %v1356 = vrot.slane %v1256, 1
      %v1357 = vsel %vm856, %v1355, %v1356
      %v1358 = vrot.slane %v1257, 1
      %v1359 = vsel %vm856, %v1356, %v1358
      %v1360 = vrot.slane %v1258, 1
      %v1361 = vrot.slane %v1259, 1
      %v1362 = vsel %vm856, %v1360, %v1361
      %v1363 = vrot.slane %v1260, 1
      %v1364 = vsel %vm856, %v1361, %v1363
      %v1365 = vrot.slane %v1261, 1
      %v1366 = vrot.slane %v1262, 1
      %v1367 = vsel %vm856, %v1365, %v1366
      %v1368 = vrot.slane %v1263, 1
      %v1369 = vsel %vm856, %v1366, %v1368
      %v1370 = vrot.slane %v1264, 1
      %v1371 = vrot.slane %v1265, 1
      %v1372 = vsel %vm856, %v1370, %v1371
      %v1373 = vrot.slane %v1266, 1
      %v1374 = vsel %vm856, %v1371, %v1373
      %v1375 = vrot.slane %v1267, 1
      %v1376 = vrot.slane %v1268, 1
      %v1377 = vsel %vm856, %v1375, %v1376
      %v1378 = vrot.slane %v1269, 1
      %v1379 = vsel %vm856, %v1376, %v1378
      %v1380 = vrot.slane %v1270, 1
      %v1381 = vrot.slane %v1271, 1
      %v1382 = vsel %vm856, %v1380, %v1381
      %v1383 = vrot.slane %v1272, 1
      %v1384 = vsel %vm856, %v1381, %v1383
      %v1385 = vrot.slane %v1273, 1
      %v1386 = vrot.slane %v1274, 1
      %v1387 = vsel %vm856, %v1385, %v1386
      %v1388 = vrot.slane %v1275, 1
      %v1389 = vsel %vm856, %v1386, %v1388
      %v1390 = vrot.slane %v1276, 1
      %v1391 = vrot.slane %v1277, 1
      %v1392 = vsel %vm856, %v1390, %v1391
      %v1393 = vrot.slane %v1278, 1
      %v1394 = vsel %vm856, %v1391, %v1393
      %v1395 = vrot.slane %v1279, 1
      %v1396 = vrot.slane %v1280, 1
      %v1397 = vsel %vm856, %v1395, %v1396
      %v1398 = vrot.slane %v1281, 1
      %v1399 = vsel %vm856, %v1396, %v1398
      %v1400 = vrot.slane %v1282, 1
      %v1401 = vrot.slane %v1283, 1
      %v1402 = vsel %vm856, %v1400, %v1401
      %v1403 = vrot.slane %v1284, 1
      %v1404 = vsel %vm856, %v1401, %v1403
      %v1405 = vrot.slane %v1285, 1
      %v1406 = vrot.slane %v1286, 1
      %v1407 = vsel %vm856, %v1405, %v1406
      %v1408 = vrot.slane %v1287, 1
      %v1409 = vsel %vm856, %v1406, %v1408
      %v1410 = vrot.slane %v1288, 1
      %v1411 = vrot.slane %v1289, 1
      %v1412 = vsel %vm856, %v1410, %v1411
      %v1413 = vrot.slane %v1290, 1
      %v1414 = vsel %vm856, %v1411, %v1413
      %v1415 = vrot.slane %v1291, 1
      %v1416 = vrot.slane %v1292, 1
      %v1417 = vsel %vm856, %v1415, %v1416
      %v1418 = vrot.slane %v1293, 1
      %v1419 = vsel %vm856, %v1416, %v1418
      %v1420 = vrot.slane %v1294, 1
      %v1421 = vrot.slane %v1295, 1
      %v1422 = vsel %vm856, %v1420, %v1421
      %v1423 = vrot.slane %v1296, 1
      %v1424 = vsel %vm856, %v1421, %v1423
      %v1473 = vadd.f32 %v1197, %v1347
      %v1474 = vadd.f32 %v1198, %v1349
      %v1475 = vadd.f32 %v1199, %v1348
      %v1476 = vadd.f32 %v1200, %v1352
      %v1477 = vadd.f32 %v1201, %v1354
      %v1478 = vadd.f32 %v1202, %v1353
      %v1479 = vadd.f32 %v1203, %v1357
      %v1480 = vadd.f32 %v1204, %v1359
      %v1481 = vadd.f32 %v1205, %v1358
      %v1482 = vadd.f32 %v1206, %v1362
      %v1483 = vadd.f32 %v1207, %v1364
      %v1484 = vadd.f32 %v1208, %v1363
      %v1485 = vadd.f32 %v1209, %v1367
      %v1486 = vadd.f32 %v1210, %v1369
      %v1487 = vadd.f32 %v1211, %v1368
      %v1488 = vadd.f32 %v1212, %v1372
      %v1489 = vadd.f32 %v1213, %v1374
      %v1490 = vadd.f32 %v1214, %v1373
      %v1491 = vadd.f32 %v1215, %v1377
      %v1492 = vadd.f32 %v1216, %v1379
      %v1493 = vadd.f32 %v1217, %v1378
      %v1494 = vadd.f32 %v1218, %v1382
      %v1495 = vadd.f32 %v1219, %v1384
      %v1496 = vadd.f32 %v1220, %v1383
      %v1497 = vadd.f32 %v1221, %v1387
      %v1498 = vadd.f32 %v1222, %v1389
      %v1499 = vadd.f32 %v1223, %v1388
      %v1500 = vadd.f32 %v1224, %v1392
      %v1501 = vadd.f32 %v1225, %v1394
      %v1502 = vadd.f32 %v1226, %v1393
      %v1503 = vadd.f32 %v1227, %v1397
      %v1504 = vadd.f32 %v1228, %v1399
      %v1505 = vadd.f32 %v1229, %v1398
      %v1506 = vadd.f32 %v1230, %v1402
      %v1507 = vadd.f32 %v1231, %v1404
      %v1508 = vadd.f32 %v1232, %v1403
      %v1509 = vadd.f32 %v1233, %v1407
      %v1510 = vadd.f32 %v1234, %v1409
      %v1511 = vadd.f32 %v1235, %v1408
      %v1512 = vadd.f32 %v1236, %v1412
      %v1513 = vadd.f32 %v1237, %v1414
      %v1514 = vadd.f32 %v1238, %v1413
      %v1515 = vadd.f32 %v1239, %v1417
      %v1516 = vadd.f32 %v1240, %v1419
      %v1517 = vadd.f32 %v1241, %v1418
      %v1518 = vadd.f32 %v1242, %v1422
      %v1519 = vadd.f32 %v1243, %v1424
      %v1520 = vadd.f32 %v1244, %v1423
      %v1521 = vlaneseq
      %v1522 = vshrl.u32 %v1521, 7
      %v1523 = vsub.s32 0, %v1522
      %v1524 = vrot.slane %v390, %v1523
      %v1525 = vmul.f32 %v340, %v1524
      %v1526 = vmul.f32 %v341, %v1524
      %v1527 = vmul.f32 %v343, %v1524
      %v1528 = vmul.f32 %v344, %v1524
      %v1529 = vmul.f32 %v346, %v1524
      %v1530 = vmul.f32 %v347, %v1524
      %v1531 = vmul.f32 %v349, %v1524
      %v1532 = vmul.f32 %v350, %v1524
      %v1533 = vmul.f32 %v352, %v1524
      %v1534 = vmul.f32 %v353, %v1524
      %v1535 = vmul.f32 %v355, %v1524
      %v1536 = vmul.f32 %v356, %v1524
      %v1537 = vmul.f32 %v358, %v1524
      %v1538 = vmul.f32 %v359, %v1524
      %v1539 = vmul.f32 %v361, %v1524
      %v1540 = vmul.f32 %v362, %v1524
      %v1541 = vmul.f32 %v364, %v1524
      %v1542 = vmul.f32 %v365, %v1524
      %v1543 = vmul.f32 %v367, %v1524
      %v1544 = vmul.f32 %v368, %v1524
      %v1545 = vmul.f32 %v370, %v1524
      %v1546 = vmul.f32 %v371, %v1524
      %v1547 = vmul.f32 %v373, %v1524
      %v1548 = vmul.f32 %v374, %v1524
      %v1549 = vmul.f32 %v376, %v1524
      %v1550 = vmul.f32 %v377, %v1524
      %v1551 = vmul.f32 %v379, %v1524
      %v1552 = vmul.f32 %v380, %v1524
      %v1553 = vmul.f32 %v382, %v1524
      %v1554 = vmul.f32 %v383, %v1524
      %v1555 = vmul.f32 %v385, %v1524
      %v1556 = vmul.f32 %v386, %v1524
      %v1589 = vrot.slane %v1525, 7
      %v1590 = vrot.slane %v1526, 7
      %v1591 = vsel %vm511, %v1589, %v1590
      %v1592 = vrot.slane %v1527, 7
      %v1593 = vrot.slane %v1528, 7
      %v1594 = vsel %vm511, %v1592, %v1593
      %v1595 = vrot.slane %v1529, 7
      %v1596 = vrot.slane %v1530, 7
      %v1597 = vsel %vm511, %v1595, %v1596
      %v1598 = vrot.slane %v1531, 7
      %v1599 = vrot.slane %v1532, 7
      %v1600 = vsel %vm511, %v1598, %v1599
      %v1601 = vrot.slane %v1533, 7
      %v1602 = vrot.slane %v1534, 7
      %v1603 = vsel %vm511, %v1601, %v1602
      %v1604 = vrot.slane %v1535, 7
      %v1605 = vrot.slane %v1536, 7
      %v1606 = vsel %vm511, %v1604, %v1605
      %v1607 = vrot.slane %v1537, 7
      %v1608 = vrot.slane %v1538, 7
      %v1609 = vsel %vm511, %v1607, %v1608
      %v1610 = vrot.slane %v1539, 7
      %v1611 = vrot.slane %v1540, 7
      %v1612 = vsel %vm511, %v1610, %v1611
      %v1613 = vrot.slane %v1541, 7
      %v1614 = vrot.slane %v1542, 7
      %v1615 = vsel %vm511, %v1613, %v1614
      %v1616 = vrot.slane %v1543, 7
      %v1617 = vrot.slane %v1544, 7
      %v1618 = vsel %vm511, %v1616, %v1617
      %v1619 = vrot.slane %v1545, 7
      %v1620 = vrot.slane %v1546, 7
      %v1621 = vsel %vm511, %v1619, %v1620
      %v1622 = vrot.slane %v1547, 7
      %v1623 = vrot.slane %v1548, 7
      %v1624 = vsel %vm511, %v1622, %v1623
      %v1625 = vrot.slane %v1549, 7
      %v1626 = vrot.slane %v1550, 7
      %v1627 = vsel %vm511, %v1625, %v1626
      %v1628 = vrot.slane %v1551, 7
      %v1629 = vrot.slane %v1552, 7
      %v1630 = vsel %vm511, %v1628, %v1629
      %v1631 = vrot.slane %v1553, 7
      %v1632 = vrot.slane %v1554, 7
      %v1633 = vsel %vm511, %v1631, %v1632
      %v1634 = vrot.slane %v1555, 7
      %v1635 = vrot.slane %v1556, 7
      %v1636 = vsel %vm511, %v1634, %v1635
      %v1685 = vadd.f32 %v1473, %v1589
      %v1686 = vadd.f32 %v1474, %v1591
      %v1687 = vadd.f32 %v1475, %v1590
      %v1688 = vadd.f32 %v1476, %v1592
      %v1689 = vadd.f32 %v1477, %v1594
      %v1690 = vadd.f32 %v1478, %v1593
      %v1691 = vadd.f32 %v1479, %v1595
      %v1692 = vadd.f32 %v1480, %v1597
      %v1693 = vadd.f32 %v1481, %v1596
      %v1694 = vadd.f32 %v1482, %v1598
      %v1695 = vadd.f32 %v1483, %v1600
      %v1696 = vadd.f32 %v1484, %v1599
      %v1697 = vadd.f32 %v1485, %v1601
      %v1698 = vadd.f32 %v1486, %v1603
      %v1699 = vadd.f32 %v1487, %v1602
      %v1700 = vadd.f32 %v1488, %v1604
      %v1701 = vadd.f32 %v1489, %v1606
      %v1702 = vadd.f32 %v1490, %v1605
      %v1703 = vadd.f32 %v1491, %v1607
      %v1704 = vadd.f32 %v1492, %v1609
      %v1705 = vadd.f32 %v1493, %v1608
      %v1706 = vadd.f32 %v1494, %v1610
      %v1707 = vadd.f32 %v1495, %v1612
      %v1708 = vadd.f32 %v1496, %v1611
      %v1709 = vadd.f32 %v1497, %v1613
      %v1710 = vadd.f32 %v1498, %v1615
      %v1711 = vadd.f32 %v1499, %v1614
      %v1712 = vadd.f32 %v1500, %v1616
      %v1713 = vadd.f32 %v1501, %v1618
      %v1714 = vadd.f32 %v1502, %v1617
      %v1715 = vadd.f32 %v1503, %v1619
      %v1716 = vadd.f32 %v1504, %v1621
      %v1717 = vadd.f32 %v1505, %v1620
      %v1718 = vadd.f32 %v1506, %v1622
      %v1719 = vadd.f32 %v1507, %v1624
      %v1720 = vadd.f32 %v1508, %v1623
      %v1721 = vadd.f32 %v1509, %v1625
      %v1722 = vadd.f32 %v1510, %v1627
      %v1723 = vadd.f32 %v1511, %v1626
      %v1724 = vadd.f32 %v1512, %v1628
      %v1725 = vadd.f32 %v1513, %v1630
      %v1726 = vadd.f32 %v1514, %v1629
      %v1727 = vadd.f32 %v1515, %v1631
      %v1728 = vadd.f32 %v1516, %v1633
      %v1729 = vadd.f32 %v1517, %v1632
      %v1730 = vadd.f32 %v1518, %v1634
      %v1731 = vadd.f32 %v1519, %v1636
      %v1732 = vadd.f32 %v1520, %v1635
      %v1733 = vlaneseq
      %v1734 = vshrl.u32 %v1733, 7
      %v1735 = vsub.s32 1, %v1734
      %v1736 = vrot.slane %v390, %v1735
      %v1737 = vmul.f32 %v340, %v1736
      %v1738 = vmul.f32 %v341, %v1736
      %v1739 = vmul.f32 %v342, %v1736
      %v1740 = vmul.f32 %v343, %v1736
      %v1741 = vmul.f32 %v344, %v1736
      %v1742 = vmul.f32 %v345, %v1736
      %v1743 = vmul.f32 %v346, %v1736
      %v1744 = vmul.f32 %v347, %v1736
      %v1745 = vmul.f32 %v348, %v1736
      %v1746 = vmul.f32 %v349, %v1736
      %v1747 = vmul.f32 %v350, %v1736
      %v1748 = vmul.f32 %v351, %v1736
      %v1749 = vmul.f32 %v352, %v1736
      %v1750 = vmul.f32 %v353, %v1736
      %v1751 = vmul.f32 %v354, %v1736
      %v1752 = vmul.f32 %v355, %v1736
      %v1753 = vmul.f32 %v356, %v1736
      %v1754 = vmul.f32 %v357, %v1736
      %v1755 = vmul.f32 %v358, %v1736
      %v1756 = vmul.f32 %v359, %v1736
      %v1757 = vmul.f32 %v360, %v1736
      %v1758 = vmul.f32 %v361, %v1736
      %v1759 = vmul.f32 %v362, %v1736
      %v1760 = vmul.f32 %v363, %v1736
      %v1761 = vmul.f32 %v364, %v1736
      %v1762 = vmul.f32 %v365, %v1736
      %v1763 = vmul.f32 %v366, %v1736
      %v1764 = vmul.f32 %v367, %v1736
      %v1765 = vmul.f32 %v368, %v1736
      %v1766 = vmul.f32 %v369, %v1736
      %v1767 = vmul.f32 %v370, %v1736
      %v1768 = vmul.f32 %v371, %v1736
      %v1769 = vmul.f32 %v372, %v1736
      %v1770 = vmul.f32 %v373, %v1736
      %v1771 = vmul.f32 %v374, %v1736
      %v1772 = vmul.f32 %v375, %v1736
      %v1773 = vmul.f32 %v376, %v1736
      %v1774 = vmul.f32 %v377, %v1736
      %v1775 = vmul.f32 %v378, %v1736
      %v1776 = vmul.f32 %v379, %v1736
      %v1777 = vmul.f32 %v380, %v1736
      %v1778 = vmul.f32 %v381, %v1736
      %v1779 = vmul.f32 %v382, %v1736
      %v1780 = vmul.f32 %v383, %v1736
      %v1781 = vmul.f32 %v384, %v1736
      %v1782 = vmul.f32 %v385, %v1736
      %v1783 = vmul.f32 %v386, %v1736
      %v1784 = vmul.f32 %v387, %v1736
      %v1785 = vadd.f32 %v1685, %v1737
      %v1786 = vadd.f32 %v1686, %v1738
      %v1787 = vadd.f32 %v1687, %v1739
      %v1788 = vadd.f32 %v1688, %v1740
      %v1789 = vadd.f32 %v1689, %v1741
      %v1790 = vadd.f32 %v1690, %v1742
      %v1791 = vadd.f32 %v1691, %v1743
      %v1792 = vadd.f32 %v1692, %v1744
      %v1793 = vadd.f32 %v1693, %v1745
      %v1794 = vadd.f32 %v1694, %v1746
      %v1795 = vadd.f32 %v1695, %v1747
      %v1796 = vadd.f32 %v1696, %v1748
      %v1797 = vadd.f32 %v1697, %v1749
      %v1798 = vadd.f32 %v1698, %v1750
      %v1799 = vadd.f32 %v1699, %v1751
      %v1800 = vadd.f32 %v1700, %v1752
      %v1801 = vadd.f32 %v1701, %v1753
      %v1802 = vadd.f32 %v1702, %v1754
      %v1803 = vadd.f32 %v1703, %v1755
      %v1804 = vadd.f32 %v1704, %v1756
      %v1805 = vadd.f32 %v1705, %v1757
      %v1806 = vadd.f32 %v1706, %v1758
      %v1807 = vadd.f32 %v1707, %v1759
      %v1808 = vadd.f32 %v1708, %v1760
      %v1809 = vadd.f32 %v1709, %v1761
      %v1810 = vadd.f32 %v1710, %v1762
      %v1811 = vadd.f32 %v1711, %v1763
      %v1812 = vadd.f32 %v1712, %v1764
      %v1813 = vadd.f32 %v1713, %v1765
      %v1814 = vadd.f32 %v1714, %v1766
      %v1815 = vadd.f32 %v1715, %v1767
      %v1816 = vadd.f32 %v1716, %v1768
      %v1817 = vadd.f32 %v1717, %v1769
      %v1818 = vadd.f32 %v1718, %v1770
      %v1819 = vadd.f32 %v1719, %v1771
      %v1820 = vadd.f32 %v1720, %v1772
      %v1821 = vadd.f32 %v1721, %v1773
      %v1822 = vadd.f32 %v1722, %v1774
      %v1823 = vadd.f32 %v1723, %v1775
      %v1824 = vadd.f32 %v1724, %v1776
      %v1825 = vadd.f32 %v1725, %v1777
      %v1826 = vadd.f32 %v1726, %v1778
      %v1827 = vadd.f32 %v1727, %v1779
      %v1828 = vadd.f32 %v1728, %v1780
      %v1829 = vadd.f32 %v1729, %v1781
      %v1830 = vadd.f32 %v1730, %v1782
      %v1831 = vadd.f32 %v1731, %v1783
      %v1832 = vadd.f32 %v1732, %v1784
      %v1833 = vlaneseq
      %v1834 = vshrl.u32 %v1833, 7
      %v1835 = vsub.s32 2, %v1834
      %v1836 = vrot.slane %v390, %v1835
      %v1837 = vmul.f32 %v340, %v1836
      %v1838 = vmul.f32 %v341, %v1836
      %v1839 = vmul.f32 %v342, %v1836
      %v1840 = vmul.f32 %v343, %v1836
      %v1841 = vmul.f32 %v344, %v1836
      %v1842 = vmul.f32 %v345, %v1836
      %v1843 = vmul.f32 %v346, %v1836
      %v1844 = vmul.f32 %v347, %v1836
      %v1845 = vmul.f32 %v348, %v1836
      %v1846 = vmul.f32 %v349, %v1836
      %v1847 = vmul.f32 %v350, %v1836
      %v1848 = vmul.f32 %v351, %v1836
      %v1849 = vmul.f32 %v352, %v1836
      %v1850 = vmul.f32 %v353, %v1836
      %v1851 = vmul.f32 %v354, %v1836
      %v1852 = vmul.f32 %v355, %v1836
      %v1853 = vmul.f32 %v356, %v1836
      %v1854 = vmul.f32 %v357, %v1836
      %v1855 = vmul.f32 %v358, %v1836
      %v1856 = vmul.f32 %v359, %v1836
      %v1857 = vmul.f32 %v360, %v1836
      %v1858 = vmul.f32 %v361, %v1836
      %v1859 = vmul.f32 %v362, %v1836
      %v1860 = vmul.f32 %v363, %v1836
      %v1861 = vmul.f32 %v364, %v1836
      %v1862 = vmul.f32 %v365, %v1836
      %v1863 = vmul.f32 %v366, %v1836
      %v1864 = vmul.f32 %v367, %v1836
      %v1865 = vmul.f32 %v368, %v1836
      %v1866 = vmul.f32 %v369, %v1836
      %v1867 = vmul.f32 %v370, %v1836
      %v1868 = vmul.f32 %v371, %v1836
      %v1869 = vmul.f32 %v372, %v1836
      %v1870 = vmul.f32 %v373, %v1836
      %v1871 = vmul.f32 %v374, %v1836
      %v1872 = vmul.f32 %v375, %v1836
      %v1873 = vmul.f32 %v376, %v1836
      %v1874 = vmul.f32 %v377, %v1836
      %v1875 = vmul.f32 %v378, %v1836
      %v1876 = vmul.f32 %v379, %v1836
      %v1877 = vmul.f32 %v380, %v1836
      %v1878 = vmul.f32 %v381, %v1836
      %v1879 = vmul.f32 %v382, %v1836
      %v1880 = vmul.f32 %v383, %v1836
      %v1881 = vmul.f32 %v384, %v1836
      %v1882 = vmul.f32 %v385, %v1836
      %v1883 = vmul.f32 %v386, %v1836
      %v1884 = vmul.f32 %v387, %v1836
      %v1933 = vrot.slane %v1837, 1
      %v1934 = vrot.slane %v1838, 1
      %v1935 = vsel %vm856, %v1933, %v1934
      %v1936 = vrot.slane %v1839, 1
      %v1937 = vsel %vm856, %v1934, %v1936
      %v1938 = vrot.slane %v1840, 1
      %v1939 = vrot.slane %v1841, 1
      %v1940 = vsel %vm856, %v1938, %v1939
      %v1941 = vrot.slane %v1842, 1
      %v1942 = vsel %vm856, %v1939, %v1941
      %v1943 = vrot.slane %v1843, 1
      %v1944 = vrot.slane %v1844, 1
      %v1945 = vsel %vm856, %v1943, %v1944
      %v1946 = vrot.slane %v1845, 1
      %v1947 = vsel %vm856, %v1944, %v1946
      %v1948 = vrot.slane %v1846, 1
      %v1949 = vrot.slane %v1847, 1
      %v1950 = vsel %vm856, %v1948, %v1949
      %v1951 = vrot.slane %v1848, 1
      %v1952 = vsel %vm856, %v1949, %v1951
      %v1953 = vrot.slane %v1849, 1
      %v1954 = vrot.slane %v1850, 1
      %v1955 = vsel %vm856, %v1953, %v1954
      %v1956 = vrot.slane %v1851, 1
      %v1957 = vsel %vm856, %v1954, %v1956
      %v1958 = vrot.slane %v1852, 1
      %v1959 = vrot.slane %v1853, 1
      %v1960 = vsel %vm856, %v1958, %v1959
      %v1961 = vrot.slane %v1854, 1
      %v1962 = vsel %vm856, %v1959, %v1961
      %v1963 = vrot.slane %v1855, 1
      %v1964 = vrot.slane %v1856, 1
      %v1965 = vsel %vm856, %v1963, %v1964
      %v1966 = vrot.slane %v1857, 1
      %v1967 = vsel %vm856, %v1964, %v1966
      %v1968 = vrot.slane %v1858, 1
      %v1969 = vrot.slane %v1859, 1
      %v1970 = vsel %vm856, %v1968, %v1969
      %v1971 = vrot.slane %v1860, 1
      %v1972 = vsel %vm856, %v1969, %v1971
      %v1973 = vrot.slane %v1861, 1
      %v1974 = vrot.slane %v1862, 1
      %v1975 = vsel %vm856, %v1973, %v1974
      %v1976 = vrot.slane %v1863, 1
      %v1977 = vsel %vm856, %v1974, %v1976
      %v1978 = vrot.slane %v1864, 1
      %v1979 = vrot.slane %v1865, 1
      %v1980 = vsel %vm856, %v1978, %v1979
      %v1981 = vrot.slane %v1866, 1
      %v1982 = vsel %vm856, %v1979, %v1981
      %v1983 = vrot.slane %v1867, 1
      %v1984 = vrot.slane %v1868, 1
      %v1985 = vsel %vm856, %v1983, %v1984
      %v1986 = vrot.slane %v1869, 1
      %v1987 = vsel %vm856, %v1984, %v1986
      %v1988 = vrot.slane %v1870, 1
      %v1989 = vrot.slane %v1871, 1
      %v1990 = vsel %vm856, %v1988, %v1989
      %v1991 = vrot.slane %v1872, 1
      %v1992 = vsel %vm856, %v1989, %v1991
      %v1993 = vrot.slane %v1873, 1
      %v1994 = vrot.slane %v1874, 1
      %v1995 = vsel %vm856, %v1993, %v1994
      %v1996 = vrot.slane %v1875, 1
      %v1997 = vsel %vm856, %v1994, %v1996
      %v1998 = vrot.slane %v1876, 1
      %v1999 = vrot.slane %v1877, 1
      %v2000 = vsel %vm856, %v1998, %v1999
      %v2001 = vrot.slane %v1878, 1
      %v2002 = vsel %vm856, %v1999, %v2001
      %v2003 = vrot.slane %v1879, 1
      %v2004 = vrot.slane %v1880, 1
      %v2005 = vsel %vm856, %v2003, %v2004
      %v2006 = vrot.slane %v1881, 1
      %v2007 = vsel %vm856, %v2004, %v2006
      %v2008 = vrot.slane %v1882, 1
      %v2009 = vrot.slane %v1883, 1
      %v2010 = vsel %vm856, %v2008, %v2009
      %v2011 = vrot.slane %v1884, 1
      %v2012 = vsel %vm856, %v2009, %v2011
      %v2061 = vadd.f32 %v1785, %v1935
      %v2062 = vadd.f32 %v1786, %v1937
      %v2063 = vadd.f32 %v1787, %v1936
      %v2064 = vadd.f32 %v1788, %v1940
      %v2065 = vadd.f32 %v1789, %v1942
      %v2066 = vadd.f32 %v1790, %v1941
      %v2067 = vadd.f32 %v1791, %v1945
      %v2068 = vadd.f32 %v1792, %v1947
      %v2069 = vadd.f32 %v1793, %v1946
      %v2070 = vadd.f32 %v1794, %v1950
      %v2071 = vadd.f32 %v1795, %v1952
      %v2072 = vadd.f32 %v1796, %v1951
      %v2073 = vadd.f32 %v1797, %v1955
      %v2074 = vadd.f32 %v1798, %v1957
      %v2075 = vadd.f32 %v1799, %v1956
      %v2076 = vadd.f32 %v1800, %v1960
      %v2077 = vadd.f32 %v1801, %v1962
      %v2078 = vadd.f32 %v1802, %v1961
      %v2079 = vadd.f32 %v1803, %v1965
      %v2080 = vadd.f32 %v1804, %v1967
      %v2081 = vadd.f32 %v1805, %v1966
      %v2082 = vadd.f32 %v1806, %v1970
      %v2083 = vadd.f32 %v1807, %v1972
      %v2084 = vadd.f32 %v1808, %v1971
      %v2085 = vadd.f32 %v1809, %v1975
      %v2086 = vadd.f32 %v1810, %v1977
      %v2087 = vadd.f32 %v1811, %v1976
      %v2088 = vadd.f32 %v1812, %v1980
      %v2089 = vadd.f32 %v1813, %v1982
      %v2090 = vadd.f32 %v1814, %v1981
      %v2091 = vadd.f32 %v1815, %v1985
      %v2092 = vadd.f32 %v1816, %v1987
      %v2093 = vadd.f32 %v1817, %v1986
      %v2094 = vadd.f32 %v1818, %v1990
      %v2095 = vadd.f32 %v1819, %v1992
      %v2096 = vadd.f32 %v1820, %v1991
      %v2097 = vadd.f32 %v1821, %v1995
      %v2098 = vadd.f32 %v1822, %v1997
      %v2099 = vadd.f32 %v1823, %v1996
      %v2100 = vadd.f32 %v1824, %v2000
      %v2101 = vadd.f32 %v1825, %v2002
      %v2102 = vadd.f32 %v1826, %v2001
      %v2103 = vadd.f32 %v1827, %v2005
      %v2104 = vadd.f32 %v1828, %v2007
      %v2105 = vadd.f32 %v1829, %v2006
      %v2106 = vadd.f32 %v1830, %v2010
      %v2107 = vadd.f32 %v1831, %v2012
      %v2108 = vadd.f32 %v1832, %v2011
      %v2109 = vld [vmem:[%s2] sm:$0x1]
      %v2111 = vlaneseq
      %v2112 = vshrl.u32 %v2111, 7
      %v2113 = vsub.s32 0, %v2112
      %v2114 = vrot.slane %v2109, %v2113
      %v2116 = vadd.f32 %v2061, %v2114
      %v2117 = vadd.f32 %v2062, %v2114
      %v2118 = vadd.f32 %v2063, %v2114
      %v2119 = vadd.f32 %v2064, %v2114
      %v2120 = vadd.f32 %v2065, %v2114
      %v2121 = vadd.f32 %v2066, %v2114
      %v2122 = vadd.f32 %v2067, %v2114
      %v2123 = vadd.f32 %v2068, %v2114
      %v2124 = vadd.f32 %v2069, %v2114
      %v2125 = vadd.f32 %v2070, %v2114
      %v2126 = vadd.f32 %v2071, %v2114
      %v2127 = vadd.f32 %v2072, %v2114
      %v2128 = vadd.f32 %v2073, %v2114
      %v2129 = vadd.f32 %v2074, %v2114
      %v2130 = vadd.f32 %v2075, %v2114
      %v2131 = vadd.f32 %v2076, %v2114
      %v2132 = vadd.f32 %v2077, %v2114
      %v2133 = vadd.f32 %v2078, %v2114
      %v2134 = vadd.f32 %v2079, %v2114
      %v2135 = vadd.f32 %v2080, %v2114
      %v2136 = vadd.f32 %v2081, %v2114
      %v2137 = vadd.f32 %v2082, %v2114
      %v2138 = vadd.f32 %v2083, %v2114
      %v2139 = vadd.f32 %v2084, %v2114
      %v2140 = vadd.f32 %v2085, %v2114
      %v2141 = vadd.f32 %v2086, %v2114
      %v2142 = vadd.f32 %v2087, %v2114
      %v2143 = vadd.f32 %v2088, %v2114
      %v2144 = vadd.f32 %v2089, %v2114
      %v2145 = vadd.f32 %v2090, %v2114
      %v2146 = vadd.f32 %v2091, %v2114
      %v2147 = vadd.f32 %v2092, %v2114
      %v2148 = vadd.f32 %v2093, %v2114
      %v2149 = vadd.f32 %v2094, %v2114
      %v2150 = vadd.f32 %v2095, %v2114
      %v2151 = vadd.f32 %v2096, %v2114
      %v2152 = vadd.f32 %v2097, %v2114
      %v2153 = vadd.f32 %v2098, %v2114
      %v2154 = vadd.f32 %v2099, %v2114
      %v2155 = vadd.f32 %v2100, %v2114
      %v2156 = vadd.f32 %v2101, %v2114
      %v2157 = vadd.f32 %v2102, %v2114
      %v2158 = vadd.f32 %v2103, %v2114
      %v2159 = vadd.f32 %v2104, %v2114
      %v2160 = vadd.f32 %v2105, %v2114
      %v2161 = vadd.f32 %v2106, %v2114
      %v2162 = vadd.f32 %v2107, %v2114
      %v2163 = vadd.f32 %v2108, %v2114
      %v2164 = vmul.f32 %v2116, 0.5
      %v2165 = vmul.f32 %v2117, 0.5
      %v2166 = vmul.f32 %v2118, 0.5
      %v2167 = vmul.f32 %v2119, 0.5
      %v2168 = vmul.f32 %v2120, 0.5
      %v2169 = vmul.f32 %v2121, 0.5
      %v2170 = vmul.f32 %v2122, 0.5
      %v2171 = vmul.f32 %v2123, 0.5
      %v2172 = vmul.f32 %v2124, 0.5
      %v2173 = vmul.f32 %v2125, 0.5
      %v2174 = vmul.f32 %v2126, 0.5
      %v2175 = vmul.f32 %v2127, 0.5
      %v2176 = vmul.f32 %v2128, 0.5
      %v2177 = vmul.f32 %v2129, 0.5
      %v2178 = vmul.f32 %v2130, 0.5
      %v2179 = vmul.f32 %v2131, 0.5
      %v2180 = vmul.f32 %v2132, 0.5
      %v2181 = vmul.f32 %v2133, 0.5
      %v2182 = vmul.f32 %v2134, 0.5
      %v2183 = vmul.f32 %v2135, 0.5
      %v2184 = vmul.f32 %v2136, 0.5
      %v2185 = vmul.f32 %v2137, 0.5
      %v2186 = vmul.f32 %v2138, 0.5
      %v2187 = vmul.f32 %v2139, 0.5
      %v2188 = vmul.f32 %v2140, 0.5
      %v2189 = vmul.f32 %v2141, 0.5
      %v2190 = vmul.f32 %v2142, 0.5
      %v2191 = vmul.f32 %v2143, 0.5
      %v2192 = vmul.f32 %v2144, 0.5
      %v2193 = vmul.f32 %v2145, 0.5
      %v2194 = vmul.f32 %v2146, 0.5
      %v2195 = vmul.f32 %v2147, 0.5
      %v2196 = vmul.f32 %v2148, 0.5
      %v2197 = vmul.f32 %v2149, 0.5
      %v2198 = vmul.f32 %v2150, 0.5
      %v2199 = vmul.f32 %v2151, 0.5
      %v2200 = vmul.f32 %v2152, 0.5
      %v2201 = vmul.f32 %v2153, 0.5
      %v2202 = vmul.f32 %v2154, 0.5
      %v2203 = vmul.f32 %v2155, 0.5
      %v2204 = vmul.f32 %v2156, 0.5
      %v2205 = vmul.f32 %v2157, 0.5
      %v2206 = vmul.f32 %v2158, 0.5
      %v2207 = vmul.f32 %v2159, 0.5
      %v2208 = vmul.f32 %v2160, 0.5
      %v2209 = vmul.f32 %v2161, 0.5
      %v2210 = vmul.f32 %v2162, 0.5
      %v2211 = vmul.f32 %v2163, 0.5
      %v2212 = vmul.f32 %v2116, 0.70710677
      %v2213 = vmul.f32 %v2117, 0.70710677
      %v2214 = vmul.f32 %v2118, 0.70710677
      %v2215 = vmul.f32 %v2119, 0.70710677
      %v2216 = vmul.f32 %v2120, 0.70710677
      %v2217 = vmul.f32 %v2121, 0.70710677
      %v2218 = vmul.f32 %v2122, 0.70710677
      %v2219 = vmul.f32 %v2123, 0.70710677
      %v2220 = vmul.f32 %v2124, 0.70710677
      %v2221 = vmul.f32 %v2125, 0.70710677
      %v2222 = vmul.f32 %v2126, 0.70710677
      %v2223 = vmul.f32 %v2127, 0.70710677
      %v2224 = vmul.f32 %v2128, 0.70710677
      %v2225 = vmul.f32 %v2129, 0.70710677
      %v2226 = vmul.f32 %v2130, 0.70710677
      %v2227 = vmul.f32 %v2131, 0.70710677
      %v2228 = vmul.f32 %v2132, 0.70710677
      %v2229 = vmul.f32 %v2133, 0.70710677
      %v2230 = vmul.f32 %v2134, 0.70710677
      %v2231 = vmul.f32 %v2135, 0.70710677
      %v2232 = vmul.f32 %v2136, 0.70710677
      %v2233 = vmul.f32 %v2137, 0.70710677
      %v2234 = vmul.f32 %v2138, 0.70710677
      %v2235 = vmul.f32 %v2139, 0.70710677
      %v2236 = vmul.f32 %v2140, 0.70710677
      %v2237 = vmul.f32 %v2141, 0.70710677
      %v2238 = vmul.f32 %v2142, 0.70710677
      %v2239 = vmul.f32 %v2143, 0.70710677
      %v2240 = vmul.f32 %v2144, 0.70710677
      %v2241 = vmul.f32 %v2145, 0.70710677
      %v2242 = vmul.f32 %v2146, 0.70710677
      %v2243 = vmul.f32 %v2147, 0.70710677
      %v2244 = vmul.f32 %v2148, 0.70710677
      %v2245 = vmul.f32 %v2149, 0.70710677
      %v2246 = vmul.f32 %v2150, 0.70710677
      %v2247 = vmul.f32 %v2151, 0.70710677
      %v2248 = vmul.f32 %v2152, 0.70710677
      %v2249 = vmul.f32 %v2153, 0.70710677
      %v2250 = vmul.f32 %v2154, 0.70710677
      %v2251 = vmul.f32 %v2155, 0.70710677
      %v2252 = vmul.f32 %v2156, 0.70710677
      %v2253 = vmul.f32 %v2157, 0.70710677
      %v2254 = vmul.f32 %v2158, 0.70710677
      %v2255 = vmul.f32 %v2159, 0.70710677
      %v2256 = vmul.f32 %v2160, 0.70710677
      %v2257 = vmul.f32 %v2161, 0.70710677
      %v2258 = vmul.f32 %v2162, 0.70710677
      %v2259 = vmul.f32 %v2163, 0.70710677
      %v2260 = verf.f32.pop %v2212
      %v2261 = verf.f32.pop %v2213
      %v2262 = verf.f32.pop %v2214
      %v2263 = verf.f32.pop %v2215
      %v2264 = verf.f32.pop %v2216
      %v2265 = verf.f32.pop %v2217
      %v2266 = verf.f32.pop %v2218
      %v2267 = verf.f32.pop %v2219
      %v2268 = verf.f32.pop %v2220
      %v2269 = verf.f32.pop %v2221
      %v2270 = verf.f32.pop %v2222
      %v2271 = verf.f32.pop %v2223
      %v2272 = verf.f32.pop %v2224
      %v2273 = verf.f32.pop %v2225
      %v2274 = verf.f32.pop %v2226
      %v2275 = verf.f32.pop %v2227
      %v2276 = verf.f32.pop %v2228
      %v2277 = verf.f32.pop %v2229
      %v2278 = verf.f32.pop %v2230
      %v2279 = verf.f32.pop %v2231
      %v2280 = verf.f32.pop %v2232
      %v2281 = verf.f32.pop %v2233
      %v2282 = verf.f32.pop %v2234
      %v2283 = verf.f32.pop %v2235
      %v2284 = verf.f32.pop %v2236
      %v2285 = verf.f32.pop %v2237
      %v2286 = verf.f32.pop %v2238
      %v2287 = verf.f32.pop %v2239
      %v2288 = verf.f32.pop %v2240
      %v2289 = verf.f32.pop %v2241
      %v2290 = verf.f32.pop %v2242
      %v2291 = verf.f32.pop %v2243
      %v2292 = verf.f32.pop %v2244
      %v2293 = verf.f32.pop %v2245
      %v2294 = verf.f32.pop %v2246
      %v2295 = verf.f32.pop %v2247
      %v2296 = verf.f32.pop %v2248
      %v2297 = verf.f32.pop %v2249
      %v2298 = verf.f32.pop %v2250
      %v2299 = verf.f32.pop %v2251
      %v2300 = verf.f32.pop %v2252
      %v2301 = verf.f32.pop %v2253
      %v2302 = verf.f32.pop %v2254
      %v2303 = verf.f32.pop %v2255
      %v2304 = verf.f32.pop %v2256
      %v2305 = verf.f32.pop %v2257
      %v2306 = verf.f32.pop %v2258
      %v2307 = verf.f32.pop %v2259
      %v2308 = vadd.f32 %v2260, 1.0
      %v2309 = vadd.f32 %v2261, 1.0
      %v2310 = vadd.f32 %v2262, 1.0
      %v2311 = vadd.f32 %v2263, 1.0
      %v2312 = vadd.f32 %v2264, 1.0
      %v2313 = vadd.f32 %v2265, 1.0
      %v2314 = vadd.f32 %v2266, 1.0
      %v2315 = vadd.f32 %v2267, 1.0
      %v2316 = vadd.f32 %v2268, 1.0
      %v2317 = vadd.f32 %v2269, 1.0
      %v2318 = vadd.f32 %v2270, 1.0
      %v2319 = vadd.f32 %v2271, 1.0
      %v2320 = vadd.f32 %v2272, 1.0
      %v2321 = vadd.f32 %v2273, 1.0
      %v2322 = vadd.f32 %v2274, 1.0
      %v2323 = vadd.f32 %v2275, 1.0
      %v2324 = vadd.f32 %v2276, 1.0
      %v2325 = vadd.f32 %v2277, 1.0
      %v2326 = vadd.f32 %v2278, 1.0
      %v2327 = vadd.f32 %v2279, 1.0
      %v2328 = vadd.f32 %v2280, 1.0
      %v2329 = vadd.f32 %v2281, 1.0
      %v2330 = vadd.f32 %v2282, 1.0
      %v2331 = vadd.f32 %v2283, 1.0
      %v2332 = vadd.f32 %v2284, 1.0
      %v2333 = vadd.f32 %v2285, 1.0
      %v2334 = vadd.f32 %v2286, 1.0
      %v2335 = vadd.f32 %v2287, 1.0
      %v2336 = vadd.f32 %v2288, 1.0
      %v2337 = vadd.f32 %v2289, 1.0
      %v2338 = vadd.f32 %v2290, 1.0
      %v2339 = vadd.f32 %v2291, 1.0
      %v2340 = vadd.f32 %v2292, 1.0
      %v2341 = vadd.f32 %v2293, 1.0
      %v2342 = vadd.f32 %v2294, 1.0
      %v2343 = vadd.f32 %v2295, 1.0
      %v2344 = vadd.f32 %v2296, 1.0
      %v2345 = vadd.f32 %v2297, 1.0
      %v2346 = vadd.f32 %v2298, 1.0
      %v2347 = vadd.f32 %v2299, 1.0
      %v2348 = vadd.f32 %v2300, 1.0
      %v2349 = vadd.f32 %v2301, 1.0
      %v2350 = vadd.f32 %v2302, 1.0
      %v2351 = vadd.f32 %v2303, 1.0
      %v2352 = vadd.f32 %v2304, 1.0
      %v2353 = vadd.f32 %v2305, 1.0
      %v2354 = vadd.f32 %v2306, 1.0
      %v2355 = vadd.f32 %v2307, 1.0
      %v2356 = vmul.f32 %v2164, %v2308
      %v2357 = vmul.f32 %v2165, %v2309
      %v2358 = vmul.f32 %v2166, %v2310
      %v2359 = vmul.f32 %v2167, %v2311
      %v2360 = vmul.f32 %v2168, %v2312
      %v2361 = vmul.f32 %v2169, %v2313
      %v2362 = vmul.f32 %v2170, %v2314
      %v2363 = vmul.f32 %v2171, %v2315
      %v2364 = vmul.f32 %v2172, %v2316
      %v2365 = vmul.f32 %v2173, %v2317
      %v2366 = vmul.f32 %v2174, %v2318
      %v2367 = vmul.f32 %v2175, %v2319
      %v2368 = vmul.f32 %v2176, %v2320
      %v2369 = vmul.f32 %v2177, %v2321
      %v2370 = vmul.f32 %v2178, %v2322
      %v2371 = vmul.f32 %v2179, %v2323
      %v2372 = vmul.f32 %v2180, %v2324
      %v2373 = vmul.f32 %v2181, %v2325
      %v2374 = vmul.f32 %v2182, %v2326
      %v2375 = vmul.f32 %v2183, %v2327
      %v2376 = vmul.f32 %v2184, %v2328
      %v2377 = vmul.f32 %v2185, %v2329
      %v2378 = vmul.f32 %v2186, %v2330
      %v2379 = vmul.f32 %v2187, %v2331
      %v2380 = vmul.f32 %v2188, %v2332
      %v2381 = vmul.f32 %v2189, %v2333
      %v2382 = vmul.f32 %v2190, %v2334
      %v2383 = vmul.f32 %v2191, %v2335
      %v2384 = vmul.f32 %v2192, %v2336
      %v2385 = vmul.f32 %v2193, %v2337
      %v2386 = vmul.f32 %v2194, %v2338
      %v2387 = vmul.f32 %v2195, %v2339
      %v2388 = vmul.f32 %v2196, %v2340
      %v2389 = vmul.f32 %v2197, %v2341
      %v2390 = vmul.f32 %v2198, %v2342
      %v2391 = vmul.f32 %v2199, %v2343
      %v2392 = vmul.f32 %v2200, %v2344
      %v2393 = vmul.f32 %v2201, %v2345
      %v2394 = vmul.f32 %v2202, %v2346
      %v2395 = vmul.f32 %v2203, %v2347
      %v2396 = vmul.f32 %v2204, %v2348
      %v2397 = vmul.f32 %v2205, %v2349
      %v2398 = vmul.f32 %v2206, %v2350
      %v2399 = vmul.f32 %v2207, %v2351
      %v2400 = vmul.f32 %v2208, %v2352
      %v2401 = vmul.f32 %v2209, %v2353
      %v2402 = vmul.f32 %v2210, %v2354
      %v2403 = vmul.f32 %v2211, %v2355
      %v2404 = vld [vmem:[%s3] sm:$0x1]
      %v2406 = vlaneseq
      %v2407 = vshrl.u32 %v2406, 7
      %v2408 = vsub.s32 0, %v2407
      %v2409 = vrot.slane %v2404, %v2408
      %v2411 = vmul.f32 %v2356, %v2409
      %v2412 = vmul.f32 %v2357, %v2409
      %v2413 = vmul.f32 %v2358, %v2409
      %v2414 = vmul.f32 %v2359, %v2409
      %v2415 = vmul.f32 %v2360, %v2409
      %v2416 = vmul.f32 %v2361, %v2409
      %v2417 = vmul.f32 %v2362, %v2409
      %v2418 = vmul.f32 %v2363, %v2409
      %v2419 = vmul.f32 %v2364, %v2409
      %v2420 = vmul.f32 %v2365, %v2409
      %v2421 = vmul.f32 %v2366, %v2409
      %v2422 = vmul.f32 %v2367, %v2409
      %v2423 = vmul.f32 %v2368, %v2409
      %v2424 = vmul.f32 %v2369, %v2409
      %v2425 = vmul.f32 %v2370, %v2409
      %v2426 = vmul.f32 %v2371, %v2409
      %v2427 = vmul.f32 %v2372, %v2409
      %v2428 = vmul.f32 %v2373, %v2409
      %v2429 = vmul.f32 %v2374, %v2409
      %v2430 = vmul.f32 %v2375, %v2409
      %v2431 = vmul.f32 %v2376, %v2409
      %v2432 = vmul.f32 %v2377, %v2409
      %v2433 = vmul.f32 %v2378, %v2409
      %v2434 = vmul.f32 %v2379, %v2409
      %v2435 = vmul.f32 %v2380, %v2409
      %v2436 = vmul.f32 %v2381, %v2409
      %v2437 = vmul.f32 %v2382, %v2409
      %v2438 = vmul.f32 %v2383, %v2409
      %v2439 = vmul.f32 %v2384, %v2409
      %v2440 = vmul.f32 %v2385, %v2409
      %v2441 = vmul.f32 %v2386, %v2409
      %v2442 = vmul.f32 %v2387, %v2409
      %v2443 = vmul.f32 %v2388, %v2409
      %v2444 = vmul.f32 %v2389, %v2409
      %v2445 = vmul.f32 %v2390, %v2409
      %v2446 = vmul.f32 %v2391, %v2409
      %v2447 = vmul.f32 %v2392, %v2409
      %v2448 = vmul.f32 %v2393, %v2409
      %v2449 = vmul.f32 %v2394, %v2409
      %v2450 = vmul.f32 %v2395, %v2409
      %v2451 = vmul.f32 %v2396, %v2409
      %v2452 = vmul.f32 %v2397, %v2409
      %v2453 = vmul.f32 %v2398, %v2409
      %v2454 = vmul.f32 %v2399, %v2409
      %v2455 = vmul.f32 %v2400, %v2409
      %v2456 = vmul.f32 %v2401, %v2409
      %v2457 = vmul.f32 %v2402, %v2409
      %v2458 = vmul.f32 %v2403, %v2409
      %v2459 = vld [vmem:[%s4] sm:$0x1]
      %v2461 = vlaneseq
      %v2462 = vshrl.u32 %v2461, 7
      %v2463 = vsub.s32 0, %v2462
      %v2464 = vrot.slane %v2459, %v2463
      %v2466 = vadd.f32 %v2411, %v2464
      %v2467 = vadd.f32 %v2412, %v2464
      %v2468 = vadd.f32 %v2413, %v2464
      %v2469 = vadd.f32 %v2414, %v2464
      %v2470 = vadd.f32 %v2415, %v2464
      %v2471 = vadd.f32 %v2416, %v2464
      %v2472 = vadd.f32 %v2417, %v2464
      %v2473 = vadd.f32 %v2418, %v2464
      %v2474 = vadd.f32 %v2419, %v2464
      %v2475 = vadd.f32 %v2420, %v2464
      %v2476 = vadd.f32 %v2421, %v2464
      %v2477 = vadd.f32 %v2422, %v2464
      %v2478 = vadd.f32 %v2423, %v2464
      %v2479 = vadd.f32 %v2424, %v2464
      %v2480 = vadd.f32 %v2425, %v2464
      %v2481 = vadd.f32 %v2426, %v2464
      %v2482 = vadd.f32 %v2427, %v2464
      %v2483 = vadd.f32 %v2428, %v2464
      %v2484 = vadd.f32 %v2429, %v2464
      %v2485 = vadd.f32 %v2430, %v2464
      %v2486 = vadd.f32 %v2431, %v2464
      %v2487 = vadd.f32 %v2432, %v2464
      %v2488 = vadd.f32 %v2433, %v2464
      %v2489 = vadd.f32 %v2434, %v2464
      %v2490 = vadd.f32 %v2435, %v2464
      %v2491 = vadd.f32 %v2436, %v2464
      %v2492 = vadd.f32 %v2437, %v2464
      %v2493 = vadd.f32 %v2438, %v2464
      %v2494 = vadd.f32 %v2439, %v2464
      %v2495 = vadd.f32 %v2440, %v2464
      %v2496 = vadd.f32 %v2441, %v2464
      %v2497 = vadd.f32 %v2442, %v2464
      %v2498 = vadd.f32 %v2443, %v2464
      %v2499 = vadd.f32 %v2444, %v2464
      %v2500 = vadd.f32 %v2445, %v2464
      %v2501 = vadd.f32 %v2446, %v2464
      %v2502 = vadd.f32 %v2447, %v2464
      %v2503 = vadd.f32 %v2448, %v2464
      %v2504 = vadd.f32 %v2449, %v2464
      %v2505 = vadd.f32 %v2450, %v2464
      %v2506 = vadd.f32 %v2451, %v2464
      %v2507 = vadd.f32 %v2452, %v2464
      %v2508 = vadd.f32 %v2453, %v2464
      %v2509 = vadd.f32 %v2454, %v2464
      %v2510 = vadd.f32 %v2455, %v2464
      %v2511 = vadd.f32 %v2456, %v2464
      %v2512 = vadd.f32 %v2457, %v2464
      %v2513 = vadd.f32 %v2458, %v2464
      %v2514 = vadd.f32 %v337, %v2466
      %v2515 = vadd.f32 %v338, %v2467
      %v2516 = vadd.f32 %v339, %v2468
      %v2517 = vadd.f32 %v340, %v2469
      %v2518 = vadd.f32 %v341, %v2470
      %v2519 = vadd.f32 %v342, %v2471
      %v2520 = vadd.f32 %v343, %v2472
      %v2521 = vadd.f32 %v344, %v2473
      %v2522 = vadd.f32 %v345, %v2474
      %v2523 = vadd.f32 %v346, %v2475
      %v2524 = vadd.f32 %v347, %v2476
      %v2525 = vadd.f32 %v348, %v2477
      %v2526 = vadd.f32 %v349, %v2478
      %v2527 = vadd.f32 %v350, %v2479
      %v2528 = vadd.f32 %v351, %v2480
      %v2529 = vadd.f32 %v352, %v2481
      %v2530 = vadd.f32 %v353, %v2482
      %v2531 = vadd.f32 %v354, %v2483
      %v2532 = vadd.f32 %v355, %v2484
      %v2533 = vadd.f32 %v356, %v2485
      %v2534 = vadd.f32 %v357, %v2486
      %v2535 = vadd.f32 %v358, %v2487
      %v2536 = vadd.f32 %v359, %v2488
      %v2537 = vadd.f32 %v360, %v2489
      %v2538 = vadd.f32 %v361, %v2490
      %v2539 = vadd.f32 %v362, %v2491
      %v2540 = vadd.f32 %v363, %v2492
      %v2541 = vadd.f32 %v364, %v2493
      %v2542 = vadd.f32 %v365, %v2494
      %v2543 = vadd.f32 %v366, %v2495
      %v2544 = vadd.f32 %v367, %v2496
      %v2545 = vadd.f32 %v368, %v2497
      %v2546 = vadd.f32 %v369, %v2498
      %v2547 = vadd.f32 %v370, %v2499
      %v2548 = vadd.f32 %v371, %v2500
      %v2549 = vadd.f32 %v372, %v2501
      %v2550 = vadd.f32 %v373, %v2502
      %v2551 = vadd.f32 %v374, %v2503
      %v2552 = vadd.f32 %v375, %v2504
      %v2553 = vadd.f32 %v376, %v2505
      %v2554 = vadd.f32 %v377, %v2506
      %v2555 = vadd.f32 %v378, %v2507
      %v2556 = vadd.f32 %v379, %v2508
      %v2557 = vadd.f32 %v380, %v2509
      %v2558 = vadd.f32 %v381, %v2510
      %v2559 = vadd.f32 %v382, %v2511
      %v2560 = vadd.f32 %v383, %v2512
      %v2561 = vadd.f32 %v384, %v2513
      %v2610 = vrot.slane %v2514, 1
      %v2611 = vrot.slane %v2515, 1
      %v2612 = vsel %vm856, %v2610, %v2611
      %v2613 = vrot.slane %v2516, 1
      %v2614 = vsel %vm856, %v2611, %v2613
      %v2615 = vrot.slane %v2517, 1
      %v2616 = vrot.slane %v2518, 1
      %v2617 = vsel %vm856, %v2615, %v2616
      %v2618 = vrot.slane %v2519, 1
      %v2619 = vsel %vm856, %v2616, %v2618
      %v2620 = vrot.slane %v2520, 1
      %v2621 = vrot.slane %v2521, 1
      %v2622 = vsel %vm856, %v2620, %v2621
      %v2623 = vrot.slane %v2522, 1
      %v2624 = vsel %vm856, %v2621, %v2623
      %v2625 = vrot.slane %v2523, 1
      %v2626 = vrot.slane %v2524, 1
      %v2627 = vsel %vm856, %v2625, %v2626
      %v2628 = vrot.slane %v2525, 1
      %v2629 = vsel %vm856, %v2626, %v2628
      %v2630 = vrot.slane %v2526, 1
      %v2631 = vrot.slane %v2527, 1
      %v2632 = vsel %vm856, %v2630, %v2631
      %v2633 = vrot.slane %v2528, 1
      %v2634 = vsel %vm856, %v2631, %v2633
      %v2635 = vrot.slane %v2529, 1
      %v2636 = vrot.slane %v2530, 1
      %v2637 = vsel %vm856, %v2635, %v2636
      %v2638 = vrot.slane %v2531, 1
      %v2639 = vsel %vm856, %v2636, %v2638
      %v2640 = vrot.slane %v2532, 1
      %v2641 = vrot.slane %v2533, 1
      %v2642 = vsel %vm856, %v2640, %v2641
      %v2643 = vrot.slane %v2534, 1
      %v2644 = vsel %vm856, %v2641, %v2643
      %v2645 = vrot.slane %v2535, 1
      %v2646 = vrot.slane %v2536, 1
      %v2647 = vsel %vm856, %v2645, %v2646
      %v2648 = vrot.slane %v2537, 1
      %v2649 = vsel %vm856, %v2646, %v2648
      %v2650 = vrot.slane %v2538, 1
      %v2651 = vrot.slane %v2539, 1
      %v2652 = vsel %vm856, %v2650, %v2651
      %v2653 = vrot.slane %v2540, 1
      %v2654 = vsel %vm856, %v2651, %v2653
      %v2655 = vrot.slane %v2541, 1
      %v2656 = vrot.slane %v2542, 1
      %v2657 = vsel %vm856, %v2655, %v2656
      %v2658 = vrot.slane %v2543, 1
      %v2659 = vsel %vm856, %v2656, %v2658
      %v2660 = vrot.slane %v2544, 1
      %v2661 = vrot.slane %v2545, 1
      %v2662 = vsel %vm856, %v2660, %v2661
      %v2663 = vrot.slane %v2546, 1
      %v2664 = vsel %vm856, %v2661, %v2663
      %v2665 = vrot.slane %v2547, 1
      %v2666 = vrot.slane %v2548, 1
      %v2667 = vsel %vm856, %v2665, %v2666
      %v2668 = vrot.slane %v2549, 1
      %v2669 = vsel %vm856, %v2666, %v2668
      %v2670 = vrot.slane %v2550, 1
      %v2671 = vrot.slane %v2551, 1
      %v2672 = vsel %vm856, %v2670, %v2671
      %v2673 = vrot.slane %v2552, 1
      %v2674 = vsel %vm856, %v2671, %v2673
      %v2675 = vrot.slane %v2553, 1
      %v2676 = vrot.slane %v2554, 1
      %v2677 = vsel %vm856, %v2675, %v2676
      %v2678 = vrot.slane %v2555, 1
      %v2679 = vsel %vm856, %v2676, %v2678
      %v2680 = vrot.slane %v2556, 1
      %v2681 = vrot.slane %v2557, 1
      %v2682 = vsel %vm856, %v2680, %v2681
      %v2683 = vrot.slane %v2558, 1
      %v2684 = vsel %vm856, %v2681, %v2683
      %v2685 = vrot.slane %v2559, 1
      %v2686 = vrot.slane %v2560, 1
      %v2687 = vsel %vm856, %v2685, %v2686
      %v2688 = vrot.slane %v2561, 1
      %v2689 = vsel %vm856, %v2686, %v2688
      %v2722 = vpack.c.bf16 %v2614, %v2612
      %v2723 = vpack.c.bf16 %v2619, %v2617
      %v2724 = vpack.c.bf16 %v2624, %v2622
      %v2725 = vpack.c.bf16 %v2629, %v2627
      %v2726 = vpack.c.bf16 %v2634, %v2632
      %v2727 = vpack.c.bf16 %v2639, %v2637
      %v2728 = vpack.c.bf16 %v2644, %v2642
      %v2729 = vpack.c.bf16 %v2649, %v2647
      %v2730 = vpack.c.bf16 %v2654, %v2652
      %v2731 = vpack.c.bf16 %v2659, %v2657
      %v2732 = vpack.c.bf16 %v2664, %v2662
      %v2733 = vpack.c.bf16 %v2669, %v2667
      %v2734 = vpack.c.bf16 %v2674, %v2672
      %v2735 = vpack.c.bf16 %v2679, %v2677
      %v2736 = vpack.c.bf16 %v2684, %v2682
      %v2737 = vpack.c.bf16 %v2689, %v2687
      %v2786 = vrot.slane %v337, 1
      %v2787 = vrot.slane %v338, 1
      %v2788 = vsel %vm856, %v2786, %v2787
      %v2789 = vrot.slane %v339, 1
      %v2790 = vsel %vm856, %v2787, %v2789
      %v2791 = vrot.slane %v340, 1
      %v2792 = vrot.slane %v341, 1
      %v2793 = vsel %vm856, %v2791, %v2792
      %v2794 = vrot.slane %v342, 1
      %v2795 = vsel %vm856, %v2792, %v2794
      %v2796 = vrot.slane %v343, 1
      %v2797 = vrot.slane %v344, 1
      %v2798 = vsel %vm856, %v2796, %v2797
      %v2799 = vrot.slane %v345, 1
      %v2800 = vsel %vm856, %v2797, %v2799
      %v2801 = vrot.slane %v346, 1
      %v2802 = vrot.slane %v347, 1
      %v2803 = vsel %vm856, %v2801, %v2802
      %v2804 = vrot.slane %v348, 1
      %v2805 = vsel %vm856, %v2802, %v2804
      %v2806 = vrot.slane %v349, 1
      %v2807 = vrot.slane %v350, 1
      %v2808 = vsel %vm856, %v2806, %v2807
      %v2809 = vrot.slane %v351, 1
      %v2810 = vsel %vm856, %v2807, %v2809
      %v2811 = vrot.slane %v352, 1
      %v2812 = vrot.slane %v353, 1
      %v2813 = vsel %vm856, %v2811, %v2812
      %v2814 = vrot.slane %v354, 1
      %v2815 = vsel %vm856, %v2812, %v2814
      %v2816 = vrot.slane %v355, 1
      %v2817 = vrot.slane %v356, 1
      %v2818 = vsel %vm856, %v2816, %v2817
      %v2819 = vrot.slane %v357, 1
      %v2820 = vsel %vm856, %v2817, %v2819
      %v2821 = vrot.slane %v358, 1
      %v2822 = vrot.slane %v359, 1
      %v2823 = vsel %vm856, %v2821, %v2822
      %v2824 = vrot.slane %v360, 1
      %v2825 = vsel %vm856, %v2822, %v2824
      %v2826 = vrot.slane %v361, 1
      %v2827 = vrot.slane %v362, 1
      %v2828 = vsel %vm856, %v2826, %v2827
      %v2829 = vrot.slane %v363, 1
      %v2830 = vsel %vm856, %v2827, %v2829
      %v2831 = vrot.slane %v364, 1
      %v2832 = vrot.slane %v365, 1
      %v2833 = vsel %vm856, %v2831, %v2832
      %v2834 = vrot.slane %v366, 1
      %v2835 = vsel %vm856, %v2832, %v2834
      %v2836 = vrot.slane %v367, 1
      %v2837 = vrot.slane %v368, 1
      %v2838 = vsel %vm856, %v2836, %v2837
      %v2839 = vrot.slane %v369, 1
      %v2840 = vsel %vm856, %v2837, %v2839
      %v2841 = vrot.slane %v370, 1
      %v2842 = vrot.slane %v371, 1
      %v2843 = vsel %vm856, %v2841, %v2842
      %v2844 = vrot.slane %v372, 1
      %v2845 = vsel %vm856, %v2842, %v2844
      %v2846 = vrot.slane %v373, 1
      %v2847 = vrot.slane %v374, 1
      %v2848 = vsel %vm856, %v2846, %v2847
      %v2849 = vrot.slane %v375, 1
      %v2850 = vsel %vm856, %v2847, %v2849
      %v2851 = vrot.slane %v376, 1
      %v2852 = vrot.slane %v377, 1
      %v2853 = vsel %vm856, %v2851, %v2852
      %v2854 = vrot.slane %v378, 1
      %v2855 = vsel %vm856, %v2852, %v2854
      %v2856 = vrot.slane %v379, 1
      %v2857 = vrot.slane %v380, 1
      %v2858 = vsel %vm856, %v2856, %v2857
      %v2859 = vrot.slane %v381, 1
      %v2860 = vsel %vm856, %v2857, %v2859
      %v2861 = vrot.slane %v382, 1
      %v2862 = vrot.slane %v383, 1
      %v2863 = vsel %vm856, %v2861, %v2862
      %v2864 = vrot.slane %v384, 1
      %v2865 = vsel %vm856, %v2862, %v2864
      %v2866 = vld [vmem:[%s5] sm:$0x3]
      %v2867 = vld [vmem:[%s6] sm:$0x1]
      %v2869 = vlaneseq
      %v2870 = vshrl.u32 %v2869, 7
      %v2871 = vsub.s32 0, %v2870
      %v2872 = vrot.slane %v2867, %v2871
      %vm2874 = vcmask 31744
      %v2876 = vsel %vm2874, %v2722, 0
      %v2879 = vsel %vm2874, %v2723, 0
      %v2882 = vsel %vm2874, %v2724, 0
      %v2885 = vsel %vm2874, %v2725, 0
      %v2888 = vsel %vm2874, %v2726, 0
      %v2891 = vsel %vm2874, %v2727, 0
      %v2894 = vsel %vm2874, %v2728, 0
      %v2897 = vsel %vm2874, %v2729, 0
      %v2900 = vsel %vm2874, %v2730, 0
      %v2903 = vsel %vm2874, %v2731, 0
      %v2906 = vsel %vm2874, %v2732, 0
      %v2909 = vsel %vm2874, %v2733, 0
      %v2912 = vsel %vm2874, %v2734, 0
      %v2915 = vsel %vm2874, %v2735, 0
      %v2918 = vsel %vm2874, %v2736, 0
      %v2921 = vsel %vm2874, %v2737, 0
      %vm2923 = vcmask 1041408
      %v2925 = vsel %vm2923, %v2866, 0
      %2927 = vmatprep.subr.bf16.mxu0 0
      %2928 = vmatpush1.bf16.msra.mxu0 %v2925
      %2929 = vmatprep.subr.bf16.mxu0 0
      %2930 = vmatpush1.bf16.msra.mxu0 0
      %2931 = vmatprep.subr.bf16.mxu0 0
      %2932 = vmatpush1.bf16.msra.mxu0 0
      %2933 = vmatprep.subr.bf16.mxu0 0
      %2934 = vmatpush1.bf16.msra.mxu0 0
      %2935 = vmatprep.subr.bf16.mxu0 0
      %2936 = vmatpush1.bf16.msra.mxu0 0
      %2937 = vmatprep.subr.bf16.mxu0 0
      %2938 = vmatpush1.bf16.msra.mxu0 0
      %2939 = vmatprep.subr.bf16.mxu0 0
      %2940 = vmatpush1.bf16.msra.mxu0 0
      %2941 = vmatprep.subr.bf16.mxu0 0
      %2942 = vmatpush1.bf16.msra.mxu0 0
      %2943 = vmatprep.subr.bf16.mxu0 0
      %2944 = vmatpush1.bf16.msra.mxu0 0
      %2945 = vmatprep.subr.bf16.mxu0 0
      %2946 = vmatpush1.bf16.msra.mxu0 0
      %2947 = vmatprep.subr.bf16.mxu0 0
      %2948 = vmatpush1.bf16.msra.mxu0 0
      %2949 = vmatprep.subr.bf16.mxu0 0
      %2950 = vmatpush1.bf16.msra.mxu0 0
      %2951 = vmatprep.subr.bf16.mxu0 0
      %2952 = vmatpush1.bf16.msra.mxu0 0
      %2953 = vmatprep.subr.bf16.mxu0 0
      %2954 = vmatpush1.bf16.msra.mxu0 0
      %2955 = vmatprep.subr.bf16.mxu0 0
      %2956 = vmatpush1.bf16.msra.mxu0 0
      %2957 = vmatprep.subr.bf16.mxu0 0
      %2958 = vmatpush1.bf16.msra.mxu0 0
      %2959 = vmatprep.mubr.bf16.mxu0 0
      %2960 = vmatmul.mubr.bf16.gmra.mrb[0].mxu0 %v2876
      %v2961 = vpop.f32.mrb[0].mxu0
      %v2962 = vadd.f32 %v2872, %v2961
      %v2963 = vpop.f32.mrb[0].mxu0
      %v2964 = vpop.f32.mrb[0].mxu0
      %v2965 = vadd.f32 %v2872, %v2964
      %v2966 = vpop.f32.mrb[0].mxu0
      %2967 = vmatprep.mubr.bf16.mxu0 0
      %2968 = vmatmul.mubr.bf16.gmra.mrb[0].mxu0 %v2879
      %v2969 = vpop.f32.mrb[0].mxu0
      %v2970 = vadd.f32 %v2872, %v2969
      %v2971 = vpop.f32.mrb[0].mxu0
      %v2972 = vpop.f32.mrb[0].mxu0
      %v2973 = vadd.f32 %v2872, %v2972
      %v2974 = vpop.f32.mrb[0].mxu0
      %2975 = vmatprep.mubr.bf16.mxu0 0
      %2976 = vmatmul.mubr.bf16.gmra.mrb[0].mxu0 %v2882
      %v2977 = vpop.f32.mrb[0].mxu0
      %v2978 = vadd.f32 %v2872, %v2977
      %v2979 = vpop.f32.mrb[0].mxu0
      %v2980 = vpop.f32.mrb[0].mxu0
      %v2981 = vadd.f32 %v2872, %v2980
      %v2982 = vpop.f32.mrb[0].mxu0
      %2983 = vmatprep.mubr.bf16.mxu0 0
      %2984 = vmatmul.mubr.bf16.gmra.mrb[0].mxu0 %v2885
      %v2985 = vpop.f32.mrb[0].mxu0
      %v2986 = vadd.f32 %v2872, %v2985
      %v2987 = vpop.f32.mrb[0].mxu0
      %v2988 = vpop.f32.mrb[0].mxu0
      %v2989 = vadd.f32 %v2872, %v2988
      %v2990 = vpop.f32.mrb[0].mxu0
      %2991 = vmatprep.mubr.bf16.mxu0 0
      %2992 = vmatmul.mubr.bf16.gmra.mrb[0].mxu0 %v2888
      %v2993 = vpop.f32.mrb[0].mxu0
      %v2994 = vadd.f32 %v2872, %v2993
      %v2995 = vpop.f32.mrb[0].mxu0
      %v2996 = vpop.f32.mrb[0].mxu0
      %v2997 = vadd.f32 %v2872, %v2996
      %v2998 = vpop.f32.mrb[0].mxu0
      %2999 = vmatprep.mubr.bf16.mxu0 0
      %3000 = vmatmul.mubr.bf16.gmra.mrb[0].mxu0 %v2891
      %v3001 = vpop.f32.mrb[0].mxu0
      %v3002 = vadd.f32 %v2872, %v3001
      %v3003 = vpop.f32.mrb[0].mxu0
      %v3004 = vpop.f32.mrb[0].mxu0
      %v3005 = vadd.f32 %v2872, %v3004
      %v3006 = vpop.f32.mrb[0].mxu0
      %3007 = vmatprep.mubr.bf16.mxu0 0
      %3008 = vmatmul.mubr.bf16.gmra.mrb[0].mxu0 %v2894
      %v3009 = vpop.f32.mrb[0].mxu0
      %v3010 = vadd.f32 %v2872, %v3009
      %v3011 = vpop.f32.mrb[0].mxu0
      %v3012 = vpop.f32.mrb[0].mxu0
      %v3013 = vadd.f32 %v2872, %v3012
      %v3014 = vpop.f32.mrb[0].mxu0
      %3015 = vmatprep.mubr.bf16.mxu0 0
      %3016 = vmatmul.mubr.bf16.gmra.mrb[0].mxu0 %v2897
      %v3017 = vpop.f32.mrb[0].mxu0
      %v3018 = vadd.f32 %v2872, %v3017
      %v3019 = vpop.f32.mrb[0].mxu0
      %v3020 = vpop.f32.mrb[0].mxu0
      %v3021 = vadd.f32 %v2872, %v3020
      %v3022 = vpop.f32.mrb[0].mxu0
      %3023 = vmatprep.mubr.bf16.mxu0 0
      %3024 = vmatmul.mubr.bf16.gmra.mrb[0].mxu0 %v2900
      %v3025 = vpop.f32.mrb[0].mxu0
      %v3026 = vadd.f32 %v2872, %v3025
      %v3027 = vpop.f32.mrb[0].mxu0
      %v3028 = vpop.f32.mrb[0].mxu0
      %v3029 = vadd.f32 %v2872, %v3028
      %v3030 = vpop.f32.mrb[0].mxu0
      %3031 = vmatprep.mubr.bf16.mxu0 0
      %3032 = vmatmul.mubr.bf16.gmra.mrb[0].mxu0 %v2903
      %v3033 = vpop.f32.mrb[0].mxu0
      %v3034 = vadd.f32 %v2872, %v3033
      %v3035 = vpop.f32.mrb[0].mxu0
      %v3036 = vpop.f32.mrb[0].mxu0
      %v3037 = vadd.f32 %v2872, %v3036
      %v3038 = vpop.f32.mrb[0].mxu0
      %3039 = vmatprep.mubr.bf16.mxu0 0
      %3040 = vmatmul.mubr.bf16.gmra.mrb[0].mxu0 %v2906
      %v3041 = vpop.f32.mrb[0].mxu0
      %v3042 = vadd.f32 %v2872, %v3041
      %v3043 = vpop.f32.mrb[0].mxu0
      %v3044 = vpop.f32.mrb[0].mxu0
      %v3045 = vadd.f32 %v2872, %v3044
      %v3046 = vpop.f32.mrb[0].mxu0
      %3047 = vmatprep.mubr.bf16.mxu0 0
      %3048 = vmatmul.mubr.bf16.gmra.mrb[0].mxu0 %v2909
      %v3049 = vpop.f32.mrb[0].mxu0
      %v3050 = vadd.f32 %v2872, %v3049
      %v3051 = vpop.f32.mrb[0].mxu0
      %v3052 = vpop.f32.mrb[0].mxu0
      %v3053 = vadd.f32 %v2872, %v3052
      %v3054 = vpop.f32.mrb[0].mxu0
      %3055 = vmatprep.mubr.bf16.mxu0 0
      %3056 = vmatmul.mubr.bf16.gmra.mrb[0].mxu0 %v2912
      %v3057 = vpop.f32.mrb[0].mxu0
      %v3058 = vadd.f32 %v2872, %v3057
      %v3059 = vpop.f32.mrb[0].mxu0
      %v3060 = vpop.f32.mrb[0].mxu0
      %v3061 = vadd.f32 %v2872, %v3060
      %v3062 = vpop.f32.mrb[0].mxu0
      %3063 = vmatprep.mubr.bf16.mxu0 0
      %3064 = vmatmul.mubr.bf16.gmra.mrb[0].mxu0 %v2915
      %v3065 = vpop.f32.mrb[0].mxu0
      %v3066 = vadd.f32 %v2872, %v3065
      %v3067 = vpop.f32.mrb[0].mxu0
      %v3068 = vpop.f32.mrb[0].mxu0
      %v3069 = vadd.f32 %v2872, %v3068
      %v3070 = vpop.f32.mrb[0].mxu0
      %3071 = vmatprep.mubr.bf16.mxu0 0
      %3072 = vmatmul.mubr.bf16.gmra.mrb[0].mxu0 %v2918
      %v3073 = vpop.f32.mrb[0].mxu0
      %v3074 = vadd.f32 %v2872, %v3073
      %v3075 = vpop.f32.mrb[0].mxu0
      %v3076 = vpop.f32.mrb[0].mxu0
      %v3077 = vadd.f32 %v2872, %v3076
      %v3078 = vpop.f32.mrb[0].mxu0
      %3079 = vmatprep.mubr.bf16.mxu0 0
      %3080 = vmatmul.mubr.bf16.gmra.mrb[0].mxu0 %v2921
      %v3081 = vpop.f32.mrb[0].mxu0
      %v3082 = vadd.f32 %v2872, %v3081
      %v3083 = vpop.f32.mrb[0].mxu0
      %v3084 = vpop.f32.mrb[0].mxu0
      %v3085 = vadd.f32 %v2872, %v3084
      %v3086 = vpop.f32.mrb[0].mxu0
      %3087 = vdwg.mxu0
      %v3088 = vmax.f32 %v2962, 0.0
      %v3089 = vmax.f32 %v2965, 0.0
      %v3090 = vmax.f32 %v2970, 0.0
      %v3091 = vmax.f32 %v2973, 0.0
      %v3092 = vmax.f32 %v2978, 0.0
      %v3093 = vmax.f32 %v2981, 0.0
      %v3094 = vmax.f32 %v2986, 0.0
      %v3095 = vmax.f32 %v2989, 0.0
      %v3096 = vmax.f32 %v2994, 0.0
      %v3097 = vmax.f32 %v2997, 0.0
      %v3098 = vmax.f32 %v3002, 0.0
      %v3099 = vmax.f32 %v3005, 0.0
      %v3100 = vmax.f32 %v3010, 0.0
      %v3101 = vmax.f32 %v3013, 0.0
      %v3102 = vmax.f32 %v3018, 0.0
      %v3103 = vmax.f32 %v3021, 0.0
      %v3104 = vmax.f32 %v3026, 0.0
      %v3105 = vmax.f32 %v3029, 0.0
      %v3106 = vmax.f32 %v3034, 0.0
      %v3107 = vmax.f32 %v3037, 0.0
      %v3108 = vmax.f32 %v3042, 0.0
      %v3109 = vmax.f32 %v3045, 0.0
      %v3110 = vmax.f32 %v3050, 0.0
      %v3111 = vmax.f32 %v3053, 0.0
      %v3112 = vmax.f32 %v3058, 0.0
      %v3113 = vmax.f32 %v3061, 0.0
      %v3114 = vmax.f32 %v3066, 0.0
      %v3115 = vmax.f32 %v3069, 0.0
      %v3116 = vmax.f32 %v3074, 0.0
      %v3117 = vmax.f32 %v3077, 0.0
      %v3118 = vmax.f32 %v3082, 0.0
      %v3119 = vmax.f32 %v3085, 0.0
      %3120 = vrot.lane.b32.xlu0 %v2788, 8
      %v3121 = vpop.permute.xlu0 %3120
      %3122 = vrot.lane.b32.xlu0 %v2790, 8
      %v3123 = vpop.permute.xlu0 %3122
      %3124 = vrot.lane.b32.xlu0 %v2793, 8
      %v3125 = vpop.permute.xlu0 %3124
      %3126 = vrot.lane.b32.xlu0 %v2795, 8
      %v3127 = vpop.permute.xlu0 %3126
      %3128 = vrot.lane.b32.xlu0 %v2798, 8
      %v3129 = vpop.permute.xlu0 %3128
      %3130 = vrot.lane.b32.xlu0 %v2800, 8
      %v3131 = vpop.permute.xlu0 %3130
      %3132 = vrot.lane.b32.xlu0 %v2803, 8
      %v3133 = vpop.permute.xlu0 %3132
      %3134 = vrot.lane.b32.xlu0 %v2805, 8
      %v3135 = vpop.permute.xlu0 %3134
      %3136 = vrot.lane.b32.xlu0 %v2808, 8
      %v3137 = vpop.permute.xlu0 %3136
      %3138 = vrot.lane.b32.xlu0 %v2810, 8
      %v3139 = vpop.permute.xlu0 %3138
      %3140 = vrot.lane.b32.xlu0 %v2813, 8
      %v3141 = vpop.permute.xlu0 %3140
      %3142 = vrot.lane.b32.xlu0 %v2815, 8
      %v3143 = vpop.permute.xlu0 %3142
      %3144 = vrot.lane.b32.xlu0 %v2818, 8
      %v3145 = vpop.permute.xlu0 %3144
      %3146 = vrot.lane.b32.xlu0 %v2820, 8
      %v3147 = vpop.permute.xlu0 %3146
      %3148 = vrot.lane.b32.xlu0 %v2823, 8
      %v3149 = vpop.permute.xlu0 %3148
      %3150 = vrot.lane.b32.xlu0 %v2825, 8
      %v3151 = vpop.permute.xlu0 %3150
      %3152 = vrot.lane.b32.xlu0 %v2828, 8
      %v3153 = vpop.permute.xlu0 %3152
      %3154 = vrot.lane.b32.xlu0 %v2830, 8
      %v3155 = vpop.permute.xlu0 %3154
      %3156 = vrot.lane.b32.xlu0 %v2833, 8
      %v3157 = vpop.permute.xlu0 %3156
      %3158 = vrot.lane.b32.xlu0 %v2835, 8
      %v3159 = vpop.permute.xlu0 %3158
      %3160 = vrot.lane.b32.xlu0 %v2838, 8
      %v3161 = vpop.permute.xlu0 %3160
      %3162 = vrot.lane.b32.xlu0 %v2840, 8
      %v3163 = vpop.permute.xlu0 %3162
      %3164 = vrot.lane.b32.xlu0 %v2843, 8
      %v3165 = vpop.permute.xlu0 %3164
      %3166 = vrot.lane.b32.xlu0 %v2845, 8
      %v3167 = vpop.permute.xlu0 %3166
      %3168 = vrot.lane.b32.xlu0 %v2848, 8
      %v3169 = vpop.permute.xlu0 %3168
      %3170 = vrot.lane.b32.xlu0 %v2850, 8
      %v3171 = vpop.permute.xlu0 %3170
      %3172 = vrot.lane.b32.xlu0 %v2853, 8
      %v3173 = vpop.permute.xlu0 %3172
      %3174 = vrot.lane.b32.xlu0 %v2855, 8
      %v3175 = vpop.permute.xlu0 %3174
      %3176 = vrot.lane.b32.xlu0 %v2858, 8
      %v3177 = vpop.permute.xlu0 %3176
      %3178 = vrot.lane.b32.xlu0 %v2860, 8
      %v3179 = vpop.permute.xlu0 %3178
      %3180 = vrot.lane.b32.xlu0 %v2863, 8
      %v3181 = vpop.permute.xlu0 %3180
      %3182 = vrot.lane.b32.xlu0 %v2865, 8
      %v3183 = vpop.permute.xlu0 %3182
      %vm3216 = vcmask 64512
      %v3217 = vsel %vm3216, %v3088, %v3121
      %v3218 = vsel %vm3216, %v3089, %v3123
      %v3219 = vsel %vm3216, %v3090, %v3125
      %v3220 = vsel %vm3216, %v3091, %v3127
      %v3221 = vsel %vm3216, %v3092, %v3129
      %v3222 = vsel %vm3216, %v3093, %v3131
      %v3223 = vsel %vm3216, %v3094, %v3133
      %v3224 = vsel %vm3216, %v3095, %v3135
      %v3225 = vsel %vm3216, %v3096, %v3137
      %v3226 = vsel %vm3216, %v3097, %v3139
      %v3227 = vsel %vm3216, %v3098, %v3141
      %v3228 = vsel %vm3216, %v3099, %v3143
      %v3229 = vsel %vm3216, %v3100, %v3145
      %v3230 = vsel %vm3216, %v3101, %v3147
      %v3231 = vsel %vm3216, %v3102, %v3149
      %v3232 = vsel %vm3216, %v3103, %v3151
      %v3233 = vsel %vm3216, %v3104, %v3153
      %v3234 = vsel %vm3216, %v3105, %v3155
      %v3235 = vsel %vm3216, %v3106, %v3157
      %v3236 = vsel %vm3216, %v3107, %v3159
      %v3237 = vsel %vm3216, %v3108, %v3161
      %v3238 = vsel %vm3216, %v3109, %v3163
      %v3239 = vsel %vm3216, %v3110, %v3165
      %v3240 = vsel %vm3216, %v3111, %v3167
      %v3241 = vsel %vm3216, %v3112, %v3169
      %v3242 = vsel %vm3216, %v3113, %v3171
      %v3243 = vsel %vm3216, %v3114, %v3173
      %v3244 = vsel %vm3216, %v3115, %v3175
      %v3245 = vsel %vm3216, %v3116, %v3177
      %v3246 = vsel %vm3216, %v3117, %v3179
      %v3247 = vsel %vm3216, %v3118, %v3181
      %v3248 = vsel %vm3216, %v3119, %v3183
      %v3249 = vpack.c.bf16 %v3218, %v3217
      %v3250 = vpack.c.bf16 %v3220, %v3219
      %v3251 = vpack.c.bf16 %v3222, %v3221
      %v3252 = vpack.c.bf16 %v3224, %v3223
      %v3253 = vpack.c.bf16 %v3226, %v3225
      %v3254 = vpack.c.bf16 %v3228, %v3227
      %v3255 = vpack.c.bf16 %v3230, %v3229
      %v3256 = vpack.c.bf16 %v3232, %v3231
      %v3257 = vpack.c.bf16 %v3234, %v3233
      %v3258 = vpack.c.bf16 %v3236, %v3235
      %v3259 = vpack.c.bf16 %v3238, %v3237
      %v3260 = vpack.c.bf16 %v3240, %v3239
      %v3261 = vpack.c.bf16 %v3242, %v3241
      %v3262 = vpack.c.bf16 %v3244, %v3243
      %v3263 = vpack.c.bf16 %v3246, %v3245
      %v3264 = vpack.c.bf16 %v3248, %v3247
      %v3265 = vld [vmem:[%s7] sm:$0xf]
      %v3266 = vld [vmem:[%s7 + $0x4] sm:$0x3]
      %v3267 = vld [vmem:[%s8] sm:$0x1]
      %v3269 = vlaneseq
      %v3270 = vshrl.u32 %v3269, 7
      %v3271 = vsub.s32 0, %v3270
      %v3272 = vrot.slane %v3267, %v3271
      %v3276 = vunpack.c.l.b16 %v3265
      %v3277 = vunpack.c.l.b16 %v3266
      %v3278 = vpack.c.b16 %v3277, %v3276
      %vm3279 = vcmask 97280
      %v3281 = vsel %vm3279, %v3249, 0
      %v3284 = vsel %vm3279, %v3250, 0
      %v3287 = vsel %vm3279, %v3251, 0
      %v3290 = vsel %vm3279, %v3252, 0
      %v3293 = vsel %vm3279, %v3253, 0
      %v3296 = vsel %vm3279, %v3254, 0
      %v3299 = vsel %vm3279, %v3255, 0
      %v3302 = vsel %vm3279, %v3256, 0
      %v3305 = vsel %vm3279, %v3257, 0
      %v3308 = vsel %vm3279, %v3258, 0
      %v3311 = vsel %vm3279, %v3259, 0
      %v3314 = vsel %vm3279, %v3260, 0
      %v3317 = vsel %vm3279, %v3261, 0
      %v3320 = vsel %vm3279, %v3262, 0
      %v3323 = vsel %vm3279, %v3263, 0
      %v3326 = vsel %vm3279, %v3264, 0
      %vm3328 = vcmask 1045504
      %v3330 = vsel %vm3328, %v3278, 0
      %3332 = vmatprep.subr.bf16.mxu0 0
      %3333 = vmatpush1.bf16.msra.mxu0 %v3330
      %3334 = vmatprep.subr.bf16.mxu0 0
      %3335 = vmatpush1.bf16.msra.mxu0 0
      %3336 = vmatprep.subr.bf16.mxu0 0
      %3337 = vmatpush1.bf16.msra.mxu0 0
      %3338 = vmatprep.subr.bf16.mxu0 0
      %3339 = vmatpush1.bf16.msra.mxu0 0
      %3340 = vmatprep.subr.bf16.mxu0 0
      %3341 = vmatpush1.bf16.msra.mxu0 0
      %3342 = vmatprep.subr.bf16.mxu0 0
      %3343 = vmatpush1.bf16.msra.mxu0 0
      %3344 = vmatprep.subr.bf16.mxu0 0
      %3345 = vmatpush1.bf16.msra.mxu0 0
      %3346 = vmatprep.subr.bf16.mxu0 0
      %3347 = vmatpush1.bf16.msra.mxu0 0
      %3348 = vmatprep.subr.bf16.mxu0 0
      %3349 = vmatpush1.bf16.msra.mxu0 0
      %3350 = vmatprep.subr.bf16.mxu0 0
      %3351 = vmatpush1.bf16.msra.mxu0 0
      %3352 = vmatprep.subr.bf16.mxu0 0
      %3353 = vmatpush1.bf16.msra.mxu0 0
      %3354 = vmatprep.subr.bf16.mxu0 0
      %3355 = vmatpush1.bf16.msra.mxu0 0
      %3356 = vmatprep.subr.bf16.mxu0 0
      %3357 = vmatpush1.bf16.msra.mxu0 0
      %3358 = vmatprep.subr.bf16.mxu0 0
      %3359 = vmatpush1.bf16.msra.mxu0 0
      %3360 = vmatprep.subr.bf16.mxu0 0
      %3361 = vmatpush1.bf16.msra.mxu0 0
      %3362 = vmatprep.subr.bf16.mxu0 0
      %3363 = vmatpush1.bf16.msra.mxu0 0
      %3364 = vmatprep.mubr.bf16.mxu0 0
      %3365 = vmatmul.mubr.bf16.gmra.mrb[0].mxu0 %v3281
      %v3366 = vpop.f32.mrb[0].mxu0
      %v3367 = vadd.f32 %v3272, %v3366
      %v3368 = vpop.f32.mrb[0].mxu0
      %v3369 = vpop.f32.mrb[0].mxu0
      %v3370 = vadd.f32 %v3272, %v3369
      %v3371 = vpop.f32.mrb[0].mxu0
      %3372 = vmatprep.mubr.bf16.mxu0 0
      %3373 = vmatmul.mubr.bf16.gmra.mrb[0].mxu0 %v3284
      %v3374 = vpop.f32.mrb[0].mxu0
      %v3375 = vadd.f32 %v3272, %v3374
      %v3376 = vpop.f32.mrb[0].mxu0
      %v3377 = vpop.f32.mrb[0].mxu0
      %v3378 = vadd.f32 %v3272, %v3377
      %v3379 = vpop.f32.mrb[0].mxu0
      %3380 = vmatprep.mubr.bf16.mxu0 0
      %3381 = vmatmul.mubr.bf16.gmra.mrb[0].mxu0 %v3287
      %v3382 = vpop.f32.mrb[0].mxu0
      %v3383 = vadd.f32 %v3272, %v3382
      %v3384 = vpop.f32.mrb[0].mxu0
      %v3385 = vpop.f32.mrb[0].mxu0
      %v3386 = vadd.f32 %v3272, %v3385
      %v3387 = vpop.f32.mrb[0].mxu0
      %3388 = vmatprep.mubr.bf16.mxu0 0
      %3389 = vmatmul.mubr.bf16.gmra.mrb[0].mxu0 %v3290
      %v3390 = vpop.f32.mrb[0].mxu0
      %v3391 = vadd.f32 %v3272, %v3390
      %v3392 = vpop.f32.mrb[0].mxu0
      %v3393 = vpop.f32.mrb[0].mxu0
      %v3394 = vadd.f32 %v3272, %v3393
      %v3395 = vpop.f32.mrb[0].mxu0
      %3396 = vmatprep.mubr.bf16.mxu0 0
      %3397 = vmatmul.mubr.bf16.gmra.mrb[0].mxu0 %v3293
      %v3398 = vpop.f32.mrb[0].mxu0
      %v3399 = vadd.f32 %v3272, %v3398
      %v3400 = vpop.f32.mrb[0].mxu0
      %v3401 = vpop.f32.mrb[0].mxu0
      %v3402 = vadd.f32 %v3272, %v3401
      %v3403 = vpop.f32.mrb[0].mxu0
      %3404 = vmatprep.mubr.bf16.mxu0 0
      %3405 = vmatmul.mubr.bf16.gmra.mrb[0].mxu0 %v3296
      %v3406 = vpop.f32.mrb[0].mxu0
      %v3407 = vadd.f32 %v3272, %v3406
      %v3408 = vpop.f32.mrb[0].mxu0
      %v3409 = vpop.f32.mrb[0].mxu0
      %v3410 = vadd.f32 %v3272, %v3409
      %v3411 = vpop.f32.mrb[0].mxu0
      %3412 = vmatprep.mubr.bf16.mxu0 0
      %3413 = vmatmul.mubr.bf16.gmra.mrb[0].mxu0 %v3299
      %v3414 = vpop.f32.mrb[0].mxu0
      %v3415 = vadd.f32 %v3272, %v3414
      %v3416 = vpop.f32.mrb[0].mxu0
      %v3417 = vpop.f32.mrb[0].mxu0
      %v3418 = vadd.f32 %v3272, %v3417
      %v3419 = vpop.f32.mrb[0].mxu0
      %3420 = vmatprep.mubr.bf16.mxu0 0
      %3421 = vmatmul.mubr.bf16.gmra.mrb[0].mxu0 %v3302
      %v3422 = vpop.f32.mrb[0].mxu0
      %v3423 = vadd.f32 %v3272, %v3422
      %v3424 = vpop.f32.mrb[0].mxu0
      %v3425 = vpop.f32.mrb[0].mxu0
      %v3426 = vadd.f32 %v3272, %v3425
      %v3427 = vpop.f32.mrb[0].mxu0
      %3428 = vmatprep.mubr.bf16.mxu0 0
      %3429 = vmatmul.mubr.bf16.gmra.mrb[0].mxu0 %v3305
      %v3430 = vpop.f32.mrb[0].mxu0
      %v3431 = vadd.f32 %v3272, %v3430
      %v3432 = vpop.f32.mrb[0].mxu0
      %v3433 = vpop.f32.mrb[0].mxu0
      %v3434 = vadd.f32 %v3272, %v3433
      %v3435 = vpop.f32.mrb[0].mxu0
      %3436 = vmatprep.mubr.bf16.mxu0 0
      %3437 = vmatmul.mubr.bf16.gmra.mrb[0].mxu0 %v3308
      %v3438 = vpop.f32.mrb[0].mxu0
      %v3439 = vadd.f32 %v3272, %v3438
      %v3440 = vpop.f32.mrb[0].mxu0
      %v3441 = vpop.f32.mrb[0].mxu0
      %v3442 = vadd.f32 %v3272, %v3441
      %v3443 = vpop.f32.mrb[0].mxu0
      %3444 = vmatprep.mubr.bf16.mxu0 0
      %3445 = vmatmul.mubr.bf16.gmra.mrb[0].mxu0 %v3311
      %v3446 = vpop.f32.mrb[0].mxu0
      %v3447 = vadd.f32 %v3272, %v3446
      %v3448 = vpop.f32.mrb[0].mxu0
      %v3449 = vpop.f32.mrb[0].mxu0
      %v3450 = vadd.f32 %v3272, %v3449
      %v3451 = vpop.f32.mrb[0].mxu0
      %3452 = vmatprep.mubr.bf16.mxu0 0
      %3453 = vmatmul.mubr.bf16.gmra.mrb[0].mxu0 %v3314
      %v3454 = vpop.f32.mrb[0].mxu0
      %v3455 = vadd.f32 %v3272, %v3454
      %v3456 = vpop.f32.mrb[0].mxu0
      %v3457 = vpop.f32.mrb[0].mxu0
      %v3458 = vadd.f32 %v3272, %v3457
      %v3459 = vpop.f32.mrb[0].mxu0
      %3460 = vmatprep.mubr.bf16.mxu0 0
      %3461 = vmatmul.mubr.bf16.gmra.mrb[0].mxu0 %v3317
      %v3462 = vpop.f32.mrb[0].mxu0
      %v3463 = vadd.f32 %v3272, %v3462
      %v3464 = vpop.f32.mrb[0].mxu0
      %v3465 = vpop.f32.mrb[0].mxu0
      %v3466 = vadd.f32 %v3272, %v3465
      %v3467 = vpop.f32.mrb[0].mxu0
      %3468 = vmatprep.mubr.bf16.mxu0 0
      %3469 = vmatmul.mubr.bf16.gmra.mrb[0].mxu0 %v3320
      %v3470 = vpop.f32.mrb[0].mxu0
      %v3471 = vadd.f32 %v3272, %v3470
      %v3472 = vpop.f32.mrb[0].mxu0
      %v3473 = vpop.f32.mrb[0].mxu0
      %v3474 = vadd.f32 %v3272, %v3473
      %v3475 = vpop.f32.mrb[0].mxu0
      %3476 = vmatprep.mubr.bf16.mxu0 0
      %3477 = vmatmul.mubr.bf16.gmra.mrb[0].mxu0 %v3323
      %v3478 = vpop.f32.mrb[0].mxu0
      %v3479 = vadd.f32 %v3272, %v3478
      %v3480 = vpop.f32.mrb[0].mxu0
      %v3481 = vpop.f32.mrb[0].mxu0
      %v3482 = vadd.f32 %v3272, %v3481
      %v3483 = vpop.f32.mrb[0].mxu0
      %3484 = vmatprep.mubr.bf16.mxu0 0
      %3485 = vmatmul.mubr.bf16.gmra.mrb[0].mxu0 %v3326
      %v3486 = vpop.f32.mrb[0].mxu0
      %v3487 = vadd.f32 %v3272, %v3486
      %v3488 = vpop.f32.mrb[0].mxu0
      %v3489 = vpop.f32.mrb[0].mxu0
      %v3490 = vadd.f32 %v3272, %v3489
      %v3491 = vpop.f32.mrb[0].mxu0
      %3492 = vdwg.mxu0
      %3493 = vst.msk [vmem:[%s332] sm:$0xff] %vm2874, %v3367
      %3494 = vst.msk [vmem:[%s332 + $0x8] sm:$0xff] %vm2874, %v3370
      %3495 = vst.msk [vmem:[%s332 + $0x10] sm:$0xff] %vm2874, %v3375
      %3496 = vst.msk [vmem:[%s332 + $0x18] sm:$0xff] %vm2874, %v3378
      %3497 = vst.msk [vmem:[%s332 + $0x20] sm:$0xff] %vm2874, %v3383
      %3498 = vst.msk [vmem:[%s332 + $0x28] sm:$0xff] %vm2874, %v3386
      %3499 = vst.msk [vmem:[%s332 + $0x30] sm:$0xff] %vm2874, %v3391
      %3500 = vst.msk [vmem:[%s332 + $0x38] sm:$0xff] %vm2874, %v3394
      %3501 = vst.msk [vmem:[%s332 + $0x40] sm:$0xff] %vm2874, %v3399
      %3502 = vst.msk [vmem:[%s332 + $0x48] sm:$0xff] %vm2874, %v3402
      %3503 = vst.msk [vmem:[%s332 + $0x50] sm:$0xff] %vm2874, %v3407
      %3504 = vst.msk [vmem:[%s332 + $0x58] sm:$0xff] %vm2874, %v3410
      %3505 = vst.msk [vmem:[%s332 + $0x60] sm:$0xff] %vm2874, %v3415
      %3506 = vst.msk [vmem:[%s332 + $0x68] sm:$0xff] %vm2874, %v3418
      %3507 = vst.msk [vmem:[%s332 + $0x70] sm:$0xff] %vm2874, %v3423
      %3508 = vst.msk [vmem:[%s332 + $0x78] sm:$0xff] %vm2874, %v3426
      %3509 = vst.msk [vmem:[%s332 + $0x80] sm:$0xff] %vm2874, %v3431
      %3510 = vst.msk [vmem:[%s332 + $0x88] sm:$0xff] %vm2874, %v3434
      %3511 = vst.msk [vmem:[%s332 + $0x90] sm:$0xff] %vm2874, %v3439
      %3512 = vst.msk [vmem:[%s332 + $0x98] sm:$0xff] %vm2874, %v3442
      %3513 = vst.msk [vmem:[%s332 + $0xa0] sm:$0xff] %vm2874, %v3447
      %3514 = vst.msk [vmem:[%s332 + $0xa8] sm:$0xff] %vm2874, %v3450
      %3515 = vst.msk [vmem:[%s332 + $0xb0] sm:$0xff] %vm2874, %v3455
      %3516 = vst.msk [vmem:[%s332 + $0xb8] sm:$0xff] %vm2874, %v3458
      %3517 = vst.msk [vmem:[%s332 + $0xc0] sm:$0xff] %vm2874, %v3463
      %3518 = vst.msk [vmem:[%s332 + $0xc8] sm:$0xff] %vm2874, %v3466
      %3519 = vst.msk [vmem:[%s332 + $0xd0] sm:$0xff] %vm2874, %v3471
      %3520 = vst.msk [vmem:[%s332 + $0xd8] sm:$0xff] %vm2874, %v3474
      %3521 = vst.msk [vmem:[%s332 + $0xe0] sm:$0xff] %vm2874, %v3479
      %3522 = vst.msk [vmem:[%s332 + $0xe8] sm:$0xff] %vm2874, %v3482
      %3523 = vst.msk [vmem:[%s332 + $0xf0] sm:$0xff] %vm2874, %v3487
      %3524 = vst.msk [vmem:[%s332 + $0xf8] sm:$0xff] %vm2874, %v3490
      %p3525 = scmp.lt.s32.totalorder %s20, 1
      %s3526 = scalar_select %p3525, %s20, 1
      %s3527 = smul.addr %s3526, 32
      %s3528 = smul.addr %s3527, 8
      %s3529 = scalar_lea.vmem %s9, %s3528
      // Predicated region
      $region57: #{tpu_custom_call.1} parent=55 // pred_check
        %p3530 = pneg %p232
      $region58: #{tpu_custom_call.1} parent=55 // pred_check_branch
        %3532 = sbr.rel (%p3530) target = $region60
      $region59: #{tpu_custom_call.1} parent=55 // pred_region
        _
      $region60: #{tpu_custom_call.1} parent=55 // pred_fallthru
        _
    $region56: #{tpu_custom_call.1} parent=5 // pred_fallthru
      _
    %p3533 = scmp.le.s32.totalorder 2, %s15
    // Predicated region
    $region61: #{tpu_custom_call.1} parent=5 // pred_check
      %p3534 = pneg %p3533
    $region62: #{tpu_custom_call.1} parent=5 // pred_check_branch
      %3536 = sbr.rel (%p3534) target = $region64
    $region63: #{tpu_custom_call.1} parent=5 // pred_region
      %s3537 = ssub.s32 %s15, 2
      // Predicated region
      $region65: #{tpu_custom_call.1} parent=63 // pred_check
        %p3538 = pneg %p238
      $region66: #{tpu_custom_call.1} parent=63 // pred_check_branch
        %3540 = sbr.rel (%p3538) target = $region68
      $region67: #{tpu_custom_call.1} parent=63 // pred_region
        %p3541 = scmp.lt.s32.totalorder %s21, 1
        %s3542 = scalar_select %p3541, %s21, 1
        %s3543 = smul.addr %s3542, 32
        %s3544 = smul.addr %s3543, 8
        %s3545 = scalar_lea.vmem %s9, %s3544
      $region68: #{tpu_custom_call.1} parent=63 // pred_fallthru
        _
    $region64: #{tpu_custom_call.1} parent=5 // pred_fallthru
      _
  $region6: #{tpu_custom_call.1} parent=0 // loop_footer
    %s19 = sadd.s32 1, %s15
  $region7: #{tpu_custom_call.1} parent=0 // loop_footer_branch
    %14 = sbr.rel target = $region3
  $region8: #{tpu_custom_call.1} parent=0 // loop_exit
    _

// kernel: tpu_custom_call.1
$region0: #{tpu_custom_call.1}
  #allocation0 [shape = 'u32[]', space=smem, size = 0x4, offset = 0x4, fixed_abs, tag = 'smem constant byte address 0x4 - core index']
  #allocation1 [shape = 'u32[144,128]{1,0:T(1,128)}', space=vmem, size = 0x12000, scoped, tag = 'internal scratch']
  %s0 = inlined_call_operand.vmem [shape: f32[2,18,18,4], index: 0, kind: input, shape index: {}]
  %s1 = inlined_call_operand.vmem [shape: f32[3,3,4], index: 1, kind: input, shape index: {}]
  %s2 = inlined_call_operand.vmem [shape: f32[1,4], index: 2, kind: input, shape index: {}]
  %s3 = inlined_call_operand.vmem [shape: f32[1,4], index: 3, kind: input, shape index: {}]
  %s4 = inlined_call_operand.vmem [shape: f32[1,4], index: 4, kind: input, shape index: {}]
  %s5 = inlined_call_operand.vmem [shape: bf16[4,8], index: 5, kind: input, shape index: {}]
  %s6 = inlined_call_operand.vmem [shape: f32[1,8], index: 6, kind: input, shape index: {}]
  %s7 = inlined_call_operand.vmem [shape: bf16[12,4], index: 7, kind: input, shape index: {}]
  %s8 = inlined_call_operand.vmem [shape: f32[1,4], index: 8, kind: input, shape index: {}]
  %s9 = inlined_call_operand.vmem [shape: f32[2,16,16,4], index: 9, kind: output, shape index: {}]
  %s10 = sld [smem:[#allocation0]]
  $region69: #{tpu_custom_call.1} parent=0
    _
  %s12 = ssub.s32 1, %s10
  %s13 = scalar_select 0, %s12, %s10
  loop: start=0, step=1, limit=4
  $region2: #{tpu_custom_call.1} parent=0 // loop_pre_header
    _
  $region3: #{tpu_custom_call.1} parent=0 // loop_header
    %s15 = sphi 0, %s19
    %p16 = scmp.ge.s32.totalorder %s15, 4
    %s25 = sphi 0, %s27
    %s28 = sphi 0, %s25
    %s29 = sphi 0, %s28
    %s45 = sphi 0, %s29
    %s49 = sphi 0, %s49
    %s51 = sphi 0, %s49
    %s52 = sphi 0, %s51
    %s66 = sphi 0, %s52
    %s70 = sphi 0, %s70
    %s72 = sphi 0, %s70
    %s73 = sphi 0, %s72
    %s87 = sphi 0, %s73
    %s91 = sphi 0, %s91
    %s93 = sphi 0, %s91
    %s94 = sphi 0, %s93
    %s108 = sphi 0, %s94
    %s112 = sphi 0, %s112
    %s114 = sphi 0, %s112
    %s115 = sphi 0, %s114
    %s129 = sphi 0, %s115
    %s133 = sphi 0, %s133
    %s135 = sphi 0, %s133
    %s136 = sphi 0, %s135
    %s150 = sphi 0, %s136
    %s154 = sphi 0, %s154
    %s156 = sphi 0, %s154
    %s157 = sphi 0, %s156
    %s171 = sphi 0, %s157
    %s175 = sphi 0, %s175
    %s177 = sphi 0, %s175
    %s178 = sphi 0, %s177
    %s192 = sphi 0, %s178
    %s196 = sphi 0, %s196
    %s198 = sphi 0, %s196
    %s199 = sphi 0, %s198
    %s213 = sphi 0, %s199
    %s219 = sphi 0, %s221
    %s222 = sphi 0, %s219
    %s223 = sphi 0, %s222
    %s239 = sphi 0, %s223
  $region4: #{tpu_custom_call.1} parent=0 // loop_header_branch
    %18 = sbr.rel (%p16) target = $region8
  $region5: #{tpu_custom_call.1} parent=0 // loop_body
    %s20 = ssub.s32 %s15, 1
    %s21 = ssub.s32 %s15, 2
    %s22 = sadd.s32 %s15, 1
    %s23 = ssub.s32 %s15, %s22
    %p24 = scmp.eq.s32.totalorder %s23, 0
    %s26 = sadd.s32 %s25, 1
    %s27 = scalar_select %p24, %s25, %s26
    %p30 = pneg %p24
    %p31 = scmp.eq.s32.totalorder %s15, 1
    %p32 = por %p30, %p31
    %p33 = scmp.ne.s32.totalorder %s25, %s28
    %p34 = scmp.eq.s32.totalorder %s15, 0
    %p35 = por %p33, %p34
    %p36 = scmp.ne.s32.totalorder %s25, %s28
    %p37 = scmp.eq.s32.totalorder %s20, 1
    %p38 = por %p36, %p37
    %p39 = scmp.ne.s32.totalorder %s28, %s29
    %p40 = scmp.eq.s32.totalorder %s20, 0
    %p41 = por %p39, %p40
    %p42 = scmp.ne.s32.totalorder %s28, %s29
    %p43 = scmp.eq.s32.totalorder %s21, 1
    %p44 = por %p42, %p43
    %p46 = scmp.ne.s32.totalorder %s29, %s45
    %p47 = scmp.eq.s32.totalorder %s21, 0
    %p48 = por %p46, %p47
    %s50 = sadd.s32 %s49, 1
    %p53 = scmp.eq.s32.totalorder %s15, 1
    %p54 = scmp.ne.s32.totalorder %s49, %s51
    %p55 = scmp.eq.s32.totalorder %s15, 0
    %p56 = por %p54, %p55
    %p57 = scmp.ne.s32.totalorder %s49, %s51
    %p58 = scmp.eq.s32.totalorder %s20, 1
    %p59 = por %p57, %p58
    %p60 = scmp.ne.s32.totalorder %s51, %s52
    %p61 = scmp.eq.s32.totalorder %s20, 0
    %p62 = por %p60, %p61
    %p63 = scmp.ne.s32.totalorder %s51, %s52
    %p64 = scmp.eq.s32.totalorder %s21, 1
    %p65 = por %p63, %p64
    %p67 = scmp.ne.s32.totalorder %s52, %s66
    %p68 = scmp.eq.s32.totalorder %s21, 0
    %p69 = por %p67, %p68
    %s71 = sadd.s32 %s70, 1
    %p74 = scmp.eq.s32.totalorder %s15, 1
    %p75 = scmp.ne.s32.totalorder %s70, %s72
    %p76 = scmp.eq.s32.totalorder %s15, 0
    %p77 = por %p75, %p76
    %p78 = scmp.ne.s32.totalorder %s70, %s72
    %p79 = scmp.eq.s32.totalorder %s20, 1
    %p80 = por %p78, %p79
    %p81 = scmp.ne.s32.totalorder %s72, %s73
    %p82 = scmp.eq.s32.totalorder %s20, 0
    %p83 = por %p81, %p82
    %p84 = scmp.ne.s32.totalorder %s72, %s73
    %p85 = scmp.eq.s32.totalorder %s21, 1
    %p86 = por %p84, %p85
    %p88 = scmp.ne.s32.totalorder %s73, %s87
    %p89 = scmp.eq.s32.totalorder %s21, 0
    %p90 = por %p88, %p89
    %s92 = sadd.s32 %s91, 1
    %p95 = scmp.eq.s32.totalorder %s15, 1
    %p96 = scmp.ne.s32.totalorder %s91, %s93
    %p97 = scmp.eq.s32.totalorder %s15, 0
    %p98 = por %p96, %p97
    %p99 = scmp.ne.s32.totalorder %s91, %s93
    %p100 = scmp.eq.s32.totalorder %s20, 1
    %p101 = por %p99, %p100
    %p102 = scmp.ne.s32.totalorder %s93, %s94
    %p103 = scmp.eq.s32.totalorder %s20, 0
    %p104 = por %p102, %p103
    %p105 = scmp.ne.s32.totalorder %s93, %s94
    %p106 = scmp.eq.s32.totalorder %s21, 1
    %p107 = por %p105, %p106
    %p109 = scmp.ne.s32.totalorder %s94, %s108
    %p110 = scmp.eq.s32.totalorder %s21, 0
    %p111 = por %p109, %p110
    %s113 = sadd.s32 %s112, 1
    %p116 = scmp.eq.s32.totalorder %s15, 1
    %p117 = scmp.ne.s32.totalorder %s112, %s114
    %p118 = scmp.eq.s32.totalorder %s15, 0
    %p119 = por %p117, %p118
    %p120 = scmp.ne.s32.totalorder %s112, %s114
    %p121 = scmp.eq.s32.totalorder %s20, 1
    %p122 = por %p120, %p121
    %p123 = scmp.ne.s32.totalorder %s114, %s115
    %p124 = scmp.eq.s32.totalorder %s20, 0
    %p125 = por %p123, %p124
    %p126 = scmp.ne.s32.totalorder %s114, %s115
    %p127 = scmp.eq.s32.totalorder %s21, 1
    %p128 = por %p126, %p127
    %p130 = scmp.ne.s32.totalorder %s115, %s129
    %p131 = scmp.eq.s32.totalorder %s21, 0
    %p132 = por %p130, %p131
    %s134 = sadd.s32 %s133, 1
    %p137 = scmp.eq.s32.totalorder %s15, 1
    %p138 = scmp.ne.s32.totalorder %s133, %s135
    %p139 = scmp.eq.s32.totalorder %s15, 0
    %p140 = por %p138, %p139
    %p141 = scmp.ne.s32.totalorder %s133, %s135
    %p142 = scmp.eq.s32.totalorder %s20, 1
    %p143 = por %p141, %p142
    %p144 = scmp.ne.s32.totalorder %s135, %s136
    %p145 = scmp.eq.s32.totalorder %s20, 0
    %p146 = por %p144, %p145
    %p147 = scmp.ne.s32.totalorder %s135, %s136
    %p148 = scmp.eq.s32.totalorder %s21, 1
    %p149 = por %p147, %p148
    %p151 = scmp.ne.s32.totalorder %s136, %s150
    %p152 = scmp.eq.s32.totalorder %s21, 0
    %p153 = por %p151, %p152
    %s155 = sadd.s32 %s154, 1
    %p158 = scmp.eq.s32.totalorder %s15, 1
    %p159 = scmp.ne.s32.totalorder %s154, %s156
    %p160 = scmp.eq.s32.totalorder %s15, 0
    %p161 = por %p159, %p160
    %p162 = scmp.ne.s32.totalorder %s154, %s156
    %p163 = scmp.eq.s32.totalorder %s20, 1
    %p164 = por %p162, %p163
    %p165 = scmp.ne.s32.totalorder %s156, %s157
    %p166 = scmp.eq.s32.totalorder %s20, 0
    %p167 = por %p165, %p166
    %p168 = scmp.ne.s32.totalorder %s156, %s157
    %p169 = scmp.eq.s32.totalorder %s21, 1
    %p170 = por %p168, %p169
    %p172 = scmp.ne.s32.totalorder %s157, %s171
    %p173 = scmp.eq.s32.totalorder %s21, 0
    %p174 = por %p172, %p173
    %s176 = sadd.s32 %s175, 1
    %p179 = scmp.eq.s32.totalorder %s15, 1
    %p180 = scmp.ne.s32.totalorder %s175, %s177
    %p181 = scmp.eq.s32.totalorder %s15, 0
    %p182 = por %p180, %p181
    %p183 = scmp.ne.s32.totalorder %s175, %s177
    %p184 = scmp.eq.s32.totalorder %s20, 1
    %p185 = por %p183, %p184
    %p186 = scmp.ne.s32.totalorder %s177, %s178
    %p187 = scmp.eq.s32.totalorder %s20, 0
    %p188 = por %p186, %p187
    %p189 = scmp.ne.s32.totalorder %s177, %s178
    %p190 = scmp.eq.s32.totalorder %s21, 1
    %p191 = por %p189, %p190
    %p193 = scmp.ne.s32.totalorder %s178, %s192
    %p194 = scmp.eq.s32.totalorder %s21, 0
    %p195 = por %p193, %p194
    %s197 = sadd.s32 %s196, 1
    %p200 = scmp.eq.s32.totalorder %s15, 1
    %p201 = scmp.ne.s32.totalorder %s196, %s198
    %p202 = scmp.eq.s32.totalorder %s15, 0
    %p203 = por %p201, %p202
    %p204 = scmp.ne.s32.totalorder %s196, %s198
    %p205 = scmp.eq.s32.totalorder %s20, 1
    %p206 = por %p204, %p205
    %p207 = scmp.ne.s32.totalorder %s198, %s199
    %p208 = scmp.eq.s32.totalorder %s20, 0
    %p209 = por %p207, %p208
    %p210 = scmp.ne.s32.totalorder %s198, %s199
    %p211 = scmp.eq.s32.totalorder %s21, 1
    %p212 = por %p210, %p211
    %p214 = scmp.ne.s32.totalorder %s199, %s213
    %p215 = scmp.eq.s32.totalorder %s21, 0
    %p216 = por %p214, %p215
    %s217 = ssub.s32 %s15, %s22
    %p218 = scmp.eq.s32.totalorder %s217, 0
    %s220 = sadd.s32 %s219, 1
    %s221 = scalar_select %p218, %s219, %s220
    %p224 = pneg %p218
    %p225 = scmp.eq.s32.totalorder %s15, 1
    %p226 = por %p224, %p225
    %p227 = scmp.ne.s32.totalorder %s219, %s222
    %p228 = scmp.eq.s32.totalorder %s15, 0
    %p229 = por %p227, %p228
    %p230 = scmp.ne.s32.totalorder %s219, %s222
    %p231 = scmp.eq.s32.totalorder %s20, 1
    %p232 = por %p230, %p231
    %p233 = scmp.ne.s32.totalorder %s222, %s223
    %p234 = scmp.eq.s32.totalorder %s20, 0
    %p235 = por %p233, %p234
    %p236 = scmp.ne.s32.totalorder %s222, %s223
    %p237 = scmp.eq.s32.totalorder %s21, 1
    %p238 = por %p236, %p237
    %p240 = scmp.ne.s32.totalorder %s223, %s239
    %p241 = scmp.eq.s32.totalorder %s21, 0
    %p242 = por %p240, %p241
    %p243 = scmp.le.s32.totalorder 1, %s15
    %p244 = scmp.lt.s32.totalorder %s15, 3
    %p245 = pnand %p243, %p244
    %p246 = pneg %p245
    // Predicated region
    $region9: #{tpu_custom_call.1} parent=5 // pred_check
      _
    $region10: #{tpu_custom_call.1} parent=5 // pred_check_branch
      %248 = sbr.rel (%p245) target = $region12
    $region11: #{tpu_custom_call.1} parent=5 // pred_region
      %s249 = ssub.s32 %s15, 1
      // Predicated region
      $region13: #{tpu_custom_call.1} parent=11 // pred_check
        %p250 = pneg %p62
      $region14: #{tpu_custom_call.1} parent=11 // pred_check_branch
        %252 = sbr.rel (%p250) target = $region16
      $region15: #{tpu_custom_call.1} parent=11 // pred_region
        _
      $region16: #{tpu_custom_call.1} parent=11 // pred_fallthru
        _
      // Predicated region
      $region17: #{tpu_custom_call.1} parent=11 // pred_check
        %p253 = pneg %p83
      $region18: #{tpu_custom_call.1} parent=11 // pred_check_branch
        %255 = sbr.rel (%p253) target = $region20
      $region19: #{tpu_custom_call.1} parent=11 // pred_region
        _
      $region20: #{tpu_custom_call.1} parent=11 // pred_fallthru
        _
      // Predicated region
      $region21: #{tpu_custom_call.1} parent=11 // pred_check
        %p256 = pneg %p104
      $region22: #{tpu_custom_call.1} parent=11 // pred_check_branch
        %258 = sbr.rel (%p256) target = $region24
      $region23: #{tpu_custom_call.1} parent=11 // pred_region
        _
      $region24: #{tpu_custom_call.1} parent=11 // pred_fallthru
        _
      // Predicated region
      $region25: #{tpu_custom_call.1} parent=11 // pred_check
        %p259 = pneg %p125
      $region26: #{tpu_custom_call.1} parent=11 // pred_check_branch
        %261 = sbr.rel (%p259) target = $region28
      $region27: #{tpu_custom_call.1} parent=11 // pred_region
        _
      $region28: #{tpu_custom_call.1} parent=11 // pred_fallthru
        _
      // Predicated region
      $region29: #{tpu_custom_call.1} parent=11 // pred_check
        %p262 = pneg %p146
      $region30: #{tpu_custom_call.1} parent=11 // pred_check_branch
        %264 = sbr.rel (%p262) target = $region32
      $region31: #{tpu_custom_call.1} parent=11 // pred_region
        _
      $region32: #{tpu_custom_call.1} parent=11 // pred_fallthru
        _
      // Predicated region
      $region33: #{tpu_custom_call.1} parent=11 // pred_check
        %p265 = pneg %p167
      $region34: #{tpu_custom_call.1} parent=11 // pred_check_branch
        %267 = sbr.rel (%p265) target = $region36
      $region35: #{tpu_custom_call.1} parent=11 // pred_region
        _
      $region36: #{tpu_custom_call.1} parent=11 // pred_fallthru
        _
      // Predicated region
      $region37: #{tpu_custom_call.1} parent=11 // pred_check
        %p268 = pneg %p188
      $region38: #{tpu_custom_call.1} parent=11 // pred_check_branch
        %270 = sbr.rel (%p268) target = $region40
      $region39: #{tpu_custom_call.1} parent=11 // pred_region
        _
      $region40: #{tpu_custom_call.1} parent=11 // pred_fallthru
        _
      // Predicated region
      $region41: #{tpu_custom_call.1} parent=11 // pred_check
        %p271 = pneg %p209
      $region42: #{tpu_custom_call.1} parent=11 // pred_check_branch
        %273 = sbr.rel (%p271) target = $region44
      $region43: #{tpu_custom_call.1} parent=11 // pred_region
        _
      $region44: #{tpu_custom_call.1} parent=11 // pred_fallthru
        _
    $region12: #{tpu_custom_call.1} parent=5 // pred_fallthru
      _
    %p274 = scmp.lt.s32.totalorder %s15, 2
    // Predicated region
    $region45: #{tpu_custom_call.1} parent=5 // pred_check
      %p275 = pneg %p274
    $region46: #{tpu_custom_call.1} parent=5 // pred_check_branch
      %277 = sbr.rel (%p275) target = $region48
    $region47: #{tpu_custom_call.1} parent=5 // pred_region
      // Predicated region
      $region49: #{tpu_custom_call.1} parent=47 // pred_check
        %p278 = pneg %p35
      $region50: #{tpu_custom_call.1} parent=47 // pred_check_branch
        %280 = sbr.rel (%p278) target = $region52
      $region51: #{tpu_custom_call.1} parent=47 // pred_region
        %p281 = scmp.lt.s32.totalorder %s15, 1
        %s282 = scalar_select %p281, %s15, 1
        %s283 = smul.addr %s282, 54
        %s284 = smul.addr %s283, 8
        %s285 = scalar_lea.vmem %s0, %s284
      $region52: #{tpu_custom_call.1} parent=47 // pred_fallthru
        _
    $region48: #{tpu_custom_call.1} parent=5 // pred_fallthru
      _
    %p286 = scmp.le.s32.totalorder 1, %s15
    %p287 = scmp.lt.s32.totalorder %s15, 3
    %p288 = pnand %p286, %p287
    %p289 = pneg %p288
    // Predicated region
    $region53: #{tpu_custom_call.1} parent=5 // pred_check
      _
    $region54: #{tpu_custom_call.1} parent=5 // pred_check_branch
      %291 = sbr.rel (%p288) target = $region56
    $region55: #{tpu_custom_call.1} parent=5 // pred_region
      %s292 = ssub.s32 %s15, 1
      %p293 = scmp.lt.s32.totalorder %s20, 1
      %s294 = scalar_select %p293, %s20, 1
      %s295 = smul.addr %s294, 54
      %s296 = smul.addr %s295, 8
      %s297 = scalar_lea.vmem %s0, %s296
      %p298 = pneg %p41
      %p299 = pneg %p38
      %p300 = pneg %p62
      %p301 = pneg %p59
      %p302 = pneg %p83
      %p303 = pneg %p80
      %p304 = pneg %p104
      %p305 = pneg %p101
      %p306 = pneg %p125
      %p307 = pneg %p122
      %p308 = pneg %p146
      %p309 = pneg %p143
      %p310 = pneg %p167
      %p311 = pneg %p164
      %p312 = pneg %p188
      %p313 = pneg %p185
      %p314 = pneg %p209
      %p315 = pneg %p206
      %p316 = pneg %p235
      %p317 = pneg %p232
      %p318 = scmp.lt.s32.totalorder %s20, 1
      %s319 = scalar_select %p318, %s20, 1
      %s320 = smul.addr %s319, 32
      %s321 = smul.addr %s320, 8
      %s322 = scalar_lea.vmem %s9, %s321
      %p323 = scmp.lt.s32.totalorder %s20, 1
      %s324 = scalar_select %p323, %s20, 1
      %s325 = smul.addr %s324, 54
      %s326 = smul.addr %s325, 8
      %s327 = scalar_lea.vmem %s0, %s326
      %p328 = scmp.lt.s32.totalorder %s20, 1
      %s329 = scalar_select %p328, %s20, 1
      %s330 = smul.addr %s329, 32
      %s331 = smul.addr %s330, 8
      %s332 = scalar_lea.vmem %s9, %s331
      %v334 = vld [vmem:[%s327] sm:$0xff]
      %v335 = vld [vmem:[%s327 + $0x8] sm:$0xff]
      %v336 = vld [vmem:[%s327 + $0x10] sm:$0x3]
      %v337 = vld [vmem:[%s327 + $0x18] sm:$0xff]
      %v338 = vld [vmem:[%s327 + $0x20] sm:$0xff]
      %v339 = vld [vmem:[%s327 + $0x28] sm:$0x3]
      %v340 = vld [vmem:[%s327 + $0x30] sm:$0xff]
      %v341 = vld [vmem:[%s327 + $0x38] sm:$0xff]
      %v342 = vld [vmem:[%s327 + $0x40] sm:$0x3]
      %v343 = vld [vmem:[%s327 + $0x48] sm:$0xff]
      %v344 = vld [vmem:[%s327 + $0x50] sm:$0xff]
      %v345 = vld [vmem:[%s327 + $0x58] sm:$0x3]
      %v346 = vld [vmem:[%s327 + $0x60] sm:$0xff]
      %v347 = vld [vmem:[%s327 + $0x68] sm:$0xff]
      %v348 = vld [vmem:[%s327 + $0x70] sm:$0x3]
      %v349 = vld [vmem:[%s327 + $0x78] sm:$0xff]
      %v350 = vld [vmem:[%s327 + $0x80] sm:$0xff]
      %v351 = vld [vmem:[%s327 + $0x88] sm:$0x3]
      %v352 = vld [vmem:[%s327 + $0x90] sm:$0xff]
      %v353 = vld [vmem:[%s327 + $0x98] sm:$0xff]
      %v354 = vld [vmem:[%s327 + $0xa0] sm:$0x3]
      %v355 = vld [vmem:[%s327 + $0xa8] sm:$0xff]
      %v356 = vld [vmem:[%s327 + $0xb0] sm:$0xff]
      %v357 = vld [vmem:[%s327 + $0xb8] sm:$0x3]
      %v358 = vld [vmem:[%s327 + $0xc0] sm:$0xff]
      %v359 = vld [vmem:[%s327 + $0xc8] sm:$0xff]
      %v360 = vld [vmem:[%s327 + $0xd0] sm:$0x3]
      %v361 = vld [vmem:[%s327 + $0xd8] sm:$0xff]
      %v362 = vld [vmem:[%s327 + $0xe0] sm:$0xff]
      %v363 = vld [vmem:[%s327 + $0xe8] sm:$0x3]
      %v364 = vld [vmem:[%s327 + $0xf0] sm:$0xff]
      %v365 = vld [vmem:[%s327 + $0xf8] sm:$0xff]
      %v366 = vld [vmem:[%s327 + $0x100] sm:$0x3]
      %v367 = vld [vmem:[%s327 + $0x108] sm:$0xff]
      %v368 = vld [vmem:[%s327 + $0x110] sm:$0xff]
      %v369 = vld [vmem:[%s327 + $0x118] sm:$0x3]
      %v370 = vld [vmem:[%s327 + $0x120] sm:$0xff]
      %v371 = vld [vmem:[%s327 + $0x128] sm:$0xff]
      %v372 = vld [vmem:[%s327 + $0x130] sm:$0x3]
      %v373 = vld [vmem:[%s327 + $0x138] sm:$0xff]
      %v374 = vld [vmem:[%s327 + $0x140] sm:$0xff]
      %v375 = vld [vmem:[%s327 + $0x148] sm:$0x3]
      %v376 = vld [vmem:[%s327 + $0x150] sm:$0xff]
      %v377 = vld [vmem:[%s327 + $0x158] sm:$0xff]
      %v378 = vld [vmem:[%s327 + $0x160] sm:$0x3]
      %v379 = vld [vmem:[%s327 + $0x168] sm:$0xff]
      %v380 = vld [vmem:[%s327 + $0x170] sm:$0xff]
      %v381 = vld [vmem:[%s327 + $0x178] sm:$0x3]
      %v382 = vld [vmem:[%s327 + $0x180] sm:$0xff]
      %v383 = vld [vmem:[%s327 + $0x188] sm:$0xff]
      %v384 = vld [vmem:[%s327 + $0x190] sm:$0x3]
      %v385 = vld [vmem:[%s327 + $0x198] sm:$0xff]
      %v386 = vld [vmem:[%s327 + $0x1a0] sm:$0xff]
      %v387 = vld [vmem:[%s327 + $0x1a8] sm:$0x3]
      %v388 = vld [vmem:[%s1] sm:$0x7]
      %v389 = vld [vmem:[%s1 + $0x4] sm:$0x7]
      %v390 = vld [vmem:[%s1 + $0x8] sm:$0x7]
      %v391 = vlaneseq
      %v392 = vshrl.u32 %v391, 7
      %v393 = vsub.s32 1, %v392
      %v394 = vrot.slane %v389, %v393
      %v395 = vmul.f32 %v337, %v394
      %v396 = vmul.f32 %v338, %v394
      %v397 = vmul.f32 %v339, %v394
      %v398 = vmul.f32 %v340, %v394
      %v399 = vmul.f32 %v341, %v394
      %v400 = vmul.f32 %v342, %v394
      %v401 = vmul.f32 %v343, %v394
      %v402 = vmul.f32 %v344, %v394
      %v403 = vmul.f32 %v345, %v394
      %v404 = vmul.f32 %v346, %v394
      %v405 = vmul.f32 %v347, %v394
      %v406 = vmul.f32 %v348, %v394
      %v407 = vmul.f32 %v349, %v394
      %v408 = vmul.f32 %v350, %v394
      %v409 = vmul.f32 %v351, %v394
      %v410 = vmul.f32 %v352, %v394
      %v411 = vmul.f32 %v353, %v394
      %v412 = vmul.f32 %v354, %v394
      %v413 = vmul.f32 %v355, %v394
      %v414 = vmul.f32 %v356, %v394
      %v415 = vmul.f32 %v357, %v394
      %v416 = vmul.f32 %v358, %v394
      %v417 = vmul.f32 %v359, %v394
      %v418 = vmul.f32 %v360, %v394
      %v419 = vmul.f32 %v361, %v394
      %v420 = vmul.f32 %v362, %v394
      %v421 = vmul.f32 %v363, %v394
      %v422 = vmul.f32 %v364, %v394
      %v423 = vmul.f32 %v365, %v394
      %v424 = vmul.f32 %v366, %v394
      %v425 = vmul.f32 %v367, %v394
      %v426 = vmul.f32 %v368, %v394
      %v427 = vmul.f32 %v369, %v394
      %v428 = vmul.f32 %v370, %v394
      %v429 = vmul.f32 %v371, %v394
      %v430 = vmul.f32 %v372, %v394
      %v431 = vmul.f32 %v373, %v394
      %v432 = vmul.f32 %v374, %v394
      %v433 = vmul.f32 %v375, %v394
      %v434 = vmul.f32 %v376, %v394
      %v435 = vmul.f32 %v377, %v394
      %v436 = vmul.f32 %v378, %v394
      %v437 = vmul.f32 %v379, %v394
      %v438 = vmul.f32 %v380, %v394
      %v439 = vmul.f32 %v381, %v394
      %v440 = vmul.f32 %v382, %v394
      %v441 = vmul.f32 %v383, %v394
      %v442 = vmul.f32 %v384, %v394
      %v443 = vlaneseq
      %v444 = vshrl.u32 %v443, 7
      %v445 = vsub.s32 0, %v444
      %v446 = vrot.slane %v388, %v445
      %v447 = vmul.f32 %v334, %v446
      %v448 = vmul.f32 %v335, %v446
      %v449 = vmul.f32 %v337, %v446
      %v450 = vmul.f32 %v338, %v446
      %v451 = vmul.f32 %v340, %v446
      %v452 = vmul.f32 %v341, %v446
      %v453 = vmul.f32 %v343, %v446
      %v454 = vmul.f32 %v344, %v446
      %v455 = vmul.f32 %v346, %v446
      %v456 = vmul.f32 %v347, %v446
      %v457 = vmul.f32 %v349, %v446
      %v458 = vmul.f32 %v350, %v446
      %v459 = vmul.f32 %v352, %v446
      %v460 = vmul.f32 %v353, %v446
      %v461 = vmul.f32 %v355, %v446
      %v462 = vmul.f32 %v356, %v446
      %v463 = vmul.f32 %v358, %v446
      %v464 = vmul.f32 %v359, %v446
      %v465 = vmul.f32 %v361, %v446
      %v466 = vmul.f32 %v362, %v446
      %v467 = vmul.f32 %v364, %v446
      %v468 = vmul.f32 %v365, %v446
      %v469 = vmul.f32 %v367, %v446
      %v470 = vmul.f32 %v368, %v446
      %v471 = vmul.f32 %v370, %v446
      %v472 = vmul.f32 %v371, %v446
      %v473 = vmul.f32 %v373, %v446
      %v474 = vmul.f32 %v374, %v446
      %v475 = vmul.f32 %v376, %v446
      %v476 = vmul.f32 %v377, %v446
      %v477 = vmul.f32 %v379, %v446
      %v478 = vmul.f32 %v380, %v446
      %vm511 = vcmask 1040384
      %v512 = vrot.slane %v447, 7
      %v513 = vrot.slane %v448, 7
      %v514 = vsel %vm511, %v512, %v513
      %v515 = vrot.slane %v449, 7
      %v516 = vrot.slane %v450, 7
      %v517 = vsel %vm511, %v515, %v516
      %v518 = vrot.slane %v451, 7
      %v519 = vrot.slane %v452, 7
      %v520 = vsel %vm511, %v518, %v519
      %v521 = vrot.slane %v453, 7
      %v522 = vrot.slane %v454, 7
      %v523 = vsel %vm511, %v521, %v522
      %v524 = vrot.slane %v455, 7
      %v525 = vrot.slane %v456, 7
      %v526 = vsel %vm511, %v524, %v525
      %v527 = vrot.slane %v457, 7
      %v528 = vrot.slane %v458, 7
      %v529 = vsel %vm511, %v527, %v528
      %v530 = vrot.slane %v459, 7
      %v531 = vrot.slane %v460, 7
      %v532 = vsel %vm511, %v530, %v531
      %v533 = vrot.slane %v461, 7
      %v534 = vrot.slane %v462, 7
      %v535 = vsel %vm511, %v533, %v534
      %v536 = vrot.slane %v463, 7
      %v537 = vrot.slane %v464, 7
      %v538 = vsel %vm511, %v536, %v537
      %v539 = vrot.slane %v465, 7
      %v540 = vrot.slane %v466, 7
      %v541 = vsel %vm511, %v539, %v540
      %v542 = vrot.slane %v467, 7
      %v543 = vrot.slane %v468, 7
      %v544 = vsel %vm511, %v542, %v543
      %v545 = vrot.slane %v469, 7
      %v546 = vrot.slane %v470, 7
      %v547 = vsel %vm511, %v545, %v546
      %v548 = vrot.slane %v471, 7
      %v549 = vrot.slane %v472, 7
      %v550 = vsel %vm511, %v548, %v549
      %v551 = vrot.slane %v473, 7
      %v552 = vrot.slane %v474, 7
      %v553 = vsel %vm511, %v551, %v552
      %v554 = vrot.slane %v475, 7
      %v555 = vrot.slane %v476, 7
      %v556 = vsel %vm511, %v554, %v555
      %v557 = vrot.slane %v477, 7
      %v558 = vrot.slane %v478, 7
      %v559 = vsel %vm511, %v557, %v558
      %v608 = vadd.f32 %v395, %v512
      %v609 = vadd.f32 %v396, %v514
      %v610 = vadd.f32 %v397, %v513
      %v611 = vadd.f32 %v398, %v515
      %v612 = vadd.f32 %v399, %v517
      %v613 = vadd.f32 %v400, %v516
      %v614 = vadd.f32 %v401, %v518
      %v615 = vadd.f32 %v402, %v520
      %v616 = vadd.f32 %v403, %v519
      %v617 = vadd.f32 %v404, %v521
      %v618 = vadd.f32 %v405, %v523
      %v619 = vadd.f32 %v406, %v522
      %v620 = vadd.f32 %v407, %v524
      %v621 = vadd.f32 %v408, %v526
      %v622 = vadd.f32 %v409, %v525
      %v623 = vadd.f32 %v410, %v527
      %v624 = vadd.f32 %v411, %v529
      %v625 = vadd.f32 %v412, %v528
      %v626 = vadd.f32 %v413, %v530
      %v627 = vadd.f32 %v414, %v532
      %v628 = vadd.f32 %v415, %v531
      %v629 = vadd.f32 %v416, %v533
      %v630 = vadd.f32 %v417, %v535
      %v631 = vadd.f32 %v418, %v534
      %v632 = vadd.f32 %v419, %v536
      %v633 = vadd.f32 %v420, %v538
      %v634 = vadd.f32 %v421, %v537
      %v635 = vadd.f32 %v422, %v539
      %v636 = vadd.f32 %v423, %v541
      %v637 = vadd.f32 %v424, %v540
      %v638 = vadd.f32 %v425, %v542
      %v639 = vadd.f32 %v426, %v544
      %v640 = vadd.f32 %v427, %v543
      %v641 = vadd.f32 %v428, %v545
      %v642 = vadd.f32 %v429, %v547
      %v643 = vadd.f32 %v430, %v546
      %v644 = vadd.f32 %v431, %v548
      %v645 = vadd.f32 %v432, %v550
      %v646 = vadd.f32 %v433, %v549
      %v647 = vadd.f32 %v434, %v551
      %v648 = vadd.f32 %v435, %v553
      %v649 = vadd.f32 %v436, %v552
      %v650 = vadd.f32 %v437, %v554
      %v651 = vadd.f32 %v438, %v556
      %v652 = vadd.f32 %v439, %v555
      %v653 = vadd.f32 %v440, %v557
      %v654 = vadd.f32 %v441, %v559
      %v655 = vadd.f32 %v442, %v558
      %v656 = vlaneseq
      %v657 = vshrl.u32 %v656, 7
      %v658 = vsub.s32 1, %v657
      %v659 = vrot.slane %v388, %v658
      %v660 = vmul.f32 %v334, %v659
      %v661 = vmul.f32 %v335, %v659
      %v662 = vmul.f32 %v336, %v659
      %v663 = vmul.f32 %v337, %v659
      %v664 = vmul.f32 %v338, %v659
      %v665 = vmul.f32 %v339, %v659
      %v666 = vmul.f32 %v340, %v659
      %v667 = vmul.f32 %v341, %v659
      %v668 = vmul.f32 %v342, %v659
      %v669 = vmul.f32 %v343, %v659
      %v670 = vmul.f32 %v344, %v659
      %v671 = vmul.f32 %v345, %v659
      %v672 = vmul.f32 %v346, %v659
      %v673 = vmul.f32 %v347, %v659
      %v674 = vmul.f32 %v348, %v659
      %v675 = vmul.f32 %v349, %v659
      %v676 = vmul.f32 %v350, %v659
      %v677 = vmul.f32 %v351, %v659
      %v678 = vmul.f32 %v352, %v659
      %v679 = vmul.f32 %v353, %v659
      %v680 = vmul.f32 %v354, %v659
      %v681 = vmul.f32 %v355, %v659
      %v682 = vmul.f32 %v356, %v659
      %v683 = vmul.f32 %v357, %v659
      %v684 = vmul.f32 %v358, %v659
      %v685 = vmul.f32 %v359, %v659
      %v686 = vmul.f32 %v360, %v659
      %v687 = vmul.f32 %v361, %v659
      %v688 = vmul.f32 %v362, %v659
      %v689 = vmul.f32 %v363, %v659
      %v690 = vmul.f32 %v364, %v659
      %v691 = vmul.f32 %v365, %v659
      %v692 = vmul.f32 %v366, %v659
      %v693 = vmul.f32 %v367, %v659
      %v694 = vmul.f32 %v368, %v659
      %v695 = vmul.f32 %v369, %v659
      %v696 = vmul.f32 %v370, %v659
      %v697 = vmul.f32 %v371, %v659
      %v698 = vmul.f32 %v372, %v659
      %v699 = vmul.f32 %v373, %v659
      %v700 = vmul.f32 %v374, %v659
      %v701 = vmul.f32 %v375, %v659
      %v702 = vmul.f32 %v376, %v659
      %v703 = vmul.f32 %v377, %v659
      %v704 = vmul.f32 %v378, %v659
      %v705 = vmul.f32 %v379, %v659
      %v706 = vmul.f32 %v380, %v659
      %v707 = vmul.f32 %v381, %v659
      %v708 = vadd.f32 %v608, %v660
      %v709 = vadd.f32 %v609, %v661
      %v710 = vadd.f32 %v610, %v662
      %v711 = vadd.f32 %v611, %v663
      %v712 = vadd.f32 %v612, %v664
      %v713 = vadd.f32 %v613, %v665
      %v714 = vadd.f32 %v614, %v666
      %v715 = vadd.f32 %v615, %v667
      %v716 = vadd.f32 %v616, %v668
      %v717 = vadd.f32 %v617, %v669
      %v718 = vadd.f32 %v618, %v670
      %v719 = vadd.f32 %v619, %v671
      %v720 = vadd.f32 %v620, %v672
      %v721 = vadd.f32 %v621, %v673
      %v722 = vadd.f32 %v622, %v674
      %v723 = vadd.f32 %v623, %v675
      %v724 = vadd.f32 %v624, %v676
      %v725 = vadd.f32 %v625, %v677
      %v726 = vadd.f32 %v626, %v678
      %v727 = vadd.f32 %v627, %v679
      %v728 = vadd.f32 %v628, %v680
      %v729 = vadd.f32 %v629, %v681
      %v730 = vadd.f32 %v630, %v682
      %v731 = vadd.f32 %v631, %v683
      %v732 = vadd.f32 %v632, %v684
      %v733 = vadd.f32 %v633, %v685
      %v734 = vadd.f32 %v634, %v686
      %v735 = vadd.f32 %v635, %v687
      %v736 = vadd.f32 %v636, %v688
      %v737 = vadd.f32 %v637, %v689
      %v738 = vadd.f32 %v638, %v690
      %v739 = vadd.f32 %v639, %v691
      %v740 = vadd.f32 %v640, %v692
      %v741 = vadd.f32 %v641, %v693
      %v742 = vadd.f32 %v642, %v694
      %v743 = vadd.f32 %v643, %v695
      %v744 = vadd.f32 %v644, %v696
      %v745 = vadd.f32 %v645, %v697
      %v746 = vadd.f32 %v646, %v698
      %v747 = vadd.f32 %v647, %v699
      %v748 = vadd.f32 %v648, %v700
      %v749 = vadd.f32 %v649, %v701
      %v750 = vadd.f32 %v650, %v702
      %v751 = vadd.f32 %v651, %v703
      %v752 = vadd.f32 %v652, %v704
      %v753 = vadd.f32 %v653, %v705
      %v754 = vadd.f32 %v654, %v706
      %v755 = vadd.f32 %v655, %v707
      %v756 = vlaneseq
      %v757 = vshrl.u32 %v756, 7
      %v758 = vsub.s32 2, %v757
      %v759 = vrot.slane %v388, %v758
      %v760 = vmul.f32 %v334, %v759
      %v761 = vmul.f32 %v335, %v759
      %v762 = vmul.f32 %v336, %v759
      %v763 = vmul.f32 %v337, %v759
      %v764 = vmul.f32 %v338, %v759
      %v765 = vmul.f32 %v339, %v759
      %v766 = vmul.f32 %v340, %v759
      %v767 = vmul.f32 %v341, %v759
      %v768 = vmul.f32 %v342, %v759
      %v769 = vmul.f32 %v343, %v759
      %v770 = vmul.f32 %v344, %v759
      %v771 = vmul.f32 %v345, %v759
      %v772 = vmul.f32 %v346, %v759
      %v773 = vmul.f32 %v347, %v759
      %v774 = vmul.f32 %v348, %v759
      %v775 = vmul.f32 %v349, %v759
      %v776 = vmul.f32 %v350, %v759
      %v777 = vmul.f32 %v351, %v759
      %v778 = vmul.f32 %v352, %v759
      %v779 = vmul.f32 %v353, %v759
      %v780 = vmul.f32 %v354, %v759
      %v781 = vmul.f32 %v355, %v759
      %v782 = vmul.f32 %v356, %v759
      %v783 = vmul.f32 %v357, %v759
      %v784 = vmul.f32 %v358, %v759
      %v785 = vmul.f32 %v359, %v759
      %v786 = vmul.f32 %v360, %v759
      %v787 = vmul.f32 %v361, %v759
      %v788 = vmul.f32 %v362, %v759
      %v789 = vmul.f32 %v363, %v759
      %v790 = vmul.f32 %v364, %v759
      %v791 = vmul.f32 %v365, %v759
      %v792 = vmul.f32 %v366, %v759
      %v793 = vmul.f32 %v367, %v759
      %v794 = vmul.f32 %v368, %v759
      %v795 = vmul.f32 %v369, %v759
      %v796 = vmul.f32 %v370, %v759
      %v797 = vmul.f32 %v371, %v759
      %v798 = vmul.f32 %v372, %v759
      %v799 = vmul.f32 %v373, %v759
      %v800 = vmul.f32 %v374, %v759
      %v801 = vmul.f32 %v375, %v759
      %v802 = vmul.f32 %v376, %v759
      %v803 = vmul.f32 %v377, %v759
      %v804 = vmul.f32 %v378, %v759
      %v805 = vmul.f32 %v379, %v759
      %v806 = vmul.f32 %v380, %v759
      %v807 = vmul.f32 %v381, %v759
      %vm856 = vcmask 1046528
      %v857 = vrot.slane %v760, 1
      %v858 = vrot.slane %v761, 1
      %v859 = vsel %vm856, %v857, %v858
      %v860 = vrot.slane %v762, 1
      %v861 = vsel %vm856, %v858, %v860
      %v862 = vrot.slane %v763, 1
      %v863 = vrot.slane %v764, 1
      %v864 = vsel %vm856, %v862, %v863
      %v865 = vrot.slane %v765, 1
      %v866 = vsel %vm856, %v863, %v865
      %v867 = vrot.slane %v766, 1
      %v868 = vrot.slane %v767, 1
      %v869 = vsel %vm856, %v867, %v868
      %v870 = vrot.slane %v768, 1
      %v871 = vsel %vm856, %v868, %v870
      %v872 = vrot.slane %v769, 1
      %v873 = vrot.slane %v770, 1
      %v874 = vsel %vm856, %v872, %v873
      %v875 = vrot.slane %v771, 1
      %v876 = vsel %vm856, %v873, %v875
      %v877 = vrot.slane %v772, 1
      %v878 = vrot.slane %v773, 1
      %v879 = vsel %vm856, %v877, %v878
      %v880 = vrot.slane %v774, 1
      %v881 = vsel %vm856, %v878, %v880
      %v882 = vrot.slane %v775, 1
      %v883 = vrot.slane %v776, 1
      %v884 = vsel %vm856, %v882, %v883
      %v885 = vrot.slane %v777, 1
      %v886 = vsel %vm856, %v883, %v885
      %v887 = vrot.slane %v778, 1
      %v888 = vrot.slane %v779, 1
      %v889 = vsel %vm856, %v887, %v888
      %v890 = vrot.slane %v780, 1
      %v891 = vsel %vm856, %v888, %v890
      %v892 = vrot.slane %v781, 1
      %v893 = vrot.slane %v782, 1
      %v894 = vsel %vm856, %v892, %v893
      %v895 = vrot.slane %v783, 1
      %v896 = vsel %vm856, %v893, %v895
      %v897 = vrot.slane %v784, 1
      %v898 = vrot.slane %v785, 1
      %v899 = vsel %vm856, %v897, %v898
      %v900 = vrot.slane %v786, 1
      %v901 = vsel %vm856, %v898, %v900
      %v902 = vrot.slane %v787, 1
      %v903 = vrot.slane %v788, 1
      %v904 = vsel %vm856, %v902, %v903
      %v905 = vrot.slane %v789, 1
      %v906 = vsel %vm856, %v903, %v905
      %v907 = vrot.slane %v790, 1
      %v908 = vrot.slane %v791, 1
      %v909 = vsel %vm856, %v907, %v908
      %v910 = vrot.slane %v792, 1
      %v911 = vsel %vm856, %v908, %v910
      %v912 = vrot.slane %v793, 1
      %v913 = vrot.slane %v794, 1
      %v914 = vsel %vm856, %v912, %v913
      %v915 = vrot.slane %v795, 1
      %v916 = vsel %vm856, %v913, %v915
      %v917 = vrot.slane %v796, 1
      %v918 = vrot.slane %v797, 1
      %v919 = vsel %vm856, %v917, %v918
      %v920 = vrot.slane %v798, 1
      %v921 = vsel %vm856, %v918, %v920
      %v922 = vrot.slane %v799, 1
      %v923 = vrot.slane %v800, 1
      %v924 = vsel %vm856, %v922, %v923
      %v925 = vrot.slane %v801, 1
      %v926 = vsel %vm856, %v923, %v925
      %v927 = vrot.slane %v802, 1
      %v928 = vrot.slane %v803, 1
      %v929 = vsel %vm856, %v927, %v928
      %v930 = vrot.slane %v804, 1
      %v931 = vsel %vm856, %v928, %v930
      %v932 = vrot.slane %v805, 1
      %v933 = vrot.slane %v806, 1
      %v934 = vsel %vm856, %v932, %v933
      %v935 = vrot.slane %v807, 1
      %v936 = vsel %vm856, %v933, %v935
      %v985 = vadd.f32 %v708, %v859
      %v986 = vadd.f32 %v709, %v861
      %v987 = vadd.f32 %v710, %v860
      %v988 = vadd.f32 %v711, %v864
      %v989 = vadd.f32 %v712, %v866
      %v990 = vadd.f32 %v713, %v865
      %v991 = vadd.f32 %v714, %v869
      %v992 = vadd.f32 %v715, %v871
      %v993 = vadd.f32 %v716, %v870
      %v994 = vadd.f32 %v717, %v874
      %v995 = vadd.f32 %v718, %v876
      %v996 = vadd.f32 %v719, %v875
      %v997 = vadd.f32 %v720, %v879
      %v998 = vadd.f32 %v721, %v881
      %v999 = vadd.f32 %v722, %v880
      %v1000 = vadd.f32 %v723, %v884
      %v1001 = vadd.f32 %v724, %v886
      %v1002 = vadd.f32 %v725, %v885
      %v1003 = vadd.f32 %v726, %v889
      %v1004 = vadd.f32 %v727, %v891
      %v1005 = vadd.f32 %v728, %v890
      %v1006 = vadd.f32 %v729, %v894
      %v1007 = vadd.f32 %v730, %v896
      %v1008 = vadd.f32 %v731, %v895
      %v1009 = vadd.f32 %v732, %v899
      %v1010 = vadd.f32 %v733, %v901
      %v1011 = vadd.f32 %v734, %v900
      %v1012 = vadd.f32 %v735, %v904
      %v1013 = vadd.f32 %v736, %v906
      %v1014 = vadd.f32 %v737, %v905
      %v1015 = vadd.f32 %v738, %v909
      %v1016 = vadd.f32 %v739, %v911
      %v1017 = vadd.f32 %v740, %v910
      %v1018 = vadd.f32 %v741, %v914
      %v1019 = vadd.f32 %v742, %v916
      %v1020 = vadd.f32 %v743, %v915
      %v1021 = vadd.f32 %v744, %v919
      %v1022 = vadd.f32 %v745, %v921
      %v1023 = vadd.f32 %v746, %v920
      %v1024 = vadd.f32 %v747, %v924
      %v1025 = vadd.f32 %v748, %v926
      %v1026 = vadd.f32 %v749, %v925
      %v1027 = vadd.f32 %v750, %v929
      %v1028 = vadd.f32 %v751, %v931
      %v1029 = vadd.f32 %v752, %v930
      %v1030 = vadd.f32 %v753, %v934
      %v1031 = vadd.f32 %v754, %v936
      %v1032 = vadd.f32 %v755, %v935
      %v1033 = vlaneseq
      %v1034 = vshrl.u32 %v1033, 7
      %v1035 = vsub.s32 0, %v1034
      %v1036 = vrot.slane %v389, %v1035
      %v1037 = vmul.f32 %v337, %v1036
      %v1038 = vmul.f32 %v338, %v1036
      %v1039 = vmul.f32 %v340, %v1036
      %v1040 = vmul.f32 %v341, %v1036
      %v1041 = vmul.f32 %v343, %v1036
      %v1042 = vmul.f32 %v344, %v1036
      %v1043 = vmul.f32 %v346, %v1036
      %v1044 = vmul.f32 %v347, %v1036
      %v1045 = vmul.f32 %v349, %v1036
      %v1046 = vmul.f32 %v350, %v1036
      %v1047 = vmul.f32 %v352, %v1036
      %v1048 = vmul.f32 %v353, %v1036
      %v1049 = vmul.f32 %v355, %v1036
      %v1050 = vmul.f32 %v356, %v1036
      %v1051 = vmul.f32 %v358, %v1036
      %v1052 = vmul.f32 %v359, %v1036
      %v1053 = vmul.f32 %v361, %v1036
      %v1054 = vmul.f32 %v362, %v1036
      %v1055 = vmul.f32 %v364, %v1036
      %v1056 = vmul.f32 %v365, %v1036
      %v1057 = vmul.f32 %v367, %v1036
      %v1058 = vmul.f32 %v368, %v1036
      %v1059 = vmul.f32 %v370, %v1036
      %v1060 = vmul.f32 %v371, %v1036
      %v1061 = vmul.f32 %v373, %v1036
      %v1062 = vmul.f32 %v374, %v1036
      %v1063 = vmul.f32 %v376, %v1036
      %v1064 = vmul.f32 %v377, %v1036
      %v1065 = vmul.f32 %v379, %v1036
      %v1066 = vmul.f32 %v380, %v1036
      %v1067 = vmul.f32 %v382, %v1036
      %v1068 = vmul.f32 %v383, %v1036
      %v1101 = vrot.slane %v1037, 7
      %v1102 = vrot.slane %v1038, 7
      %v1103 = vsel %vm511, %v1101, %v1102
      %v1104 = vrot.slane %v1039, 7
      %v1105 = vrot.slane %v1040, 7
      %v1106 = vsel %vm511, %v1104, %v1105
      %v1107 = vrot.slane %v1041, 7
      %v1108 = vrot.slane %v1042, 7
      %v1109 = vsel %vm511, %v1107, %v1108
      %v1110 = vrot.slane %v1043, 7
      %v1111 = vrot.slane %v1044, 7
      %v1112 = vsel %vm511, %v1110, %v1111
      %v1113 = vrot.slane %v1045, 7
      %v1114 = vrot.slane %v1046, 7
      %v1115 = vsel %vm511, %v1113, %v1114
      %v1116 = vrot.slane %v1047, 7
      %v1117 = vrot.slane %v1048, 7
      %v1118 = vsel %vm511, %v1116, %v1117
      %v1119 = vrot.slane %v1049, 7
      %v1120 = vrot.slane %v1050, 7
      %v1121 = vsel %vm511, %v1119, %v1120
      %v1122 = vrot.slane %v1051, 7
      %v1123 = vrot.slane %v1052, 7
      %v1124 = vsel %vm511, %v1122, %v1123
      %v1125 = vrot.slane %v1053, 7
      %v1126 = vrot.slane %v1054, 7
      %v1127 = vsel %vm511, %v1125, %v1126
      %v1128 = vrot.slane %v1055, 7
      %v1129 = vrot.slane %v1056, 7
      %v1130 = vsel %vm511, %v1128, %v1129
      %v1131 = vrot.slane %v1057, 7
      %v1132 = vrot.slane %v1058, 7
      %v1133 = vsel %vm511, %v1131, %v1132
      %v1134 = vrot.slane %v1059, 7
      %v1135 = vrot.slane %v1060, 7
      %v1136 = vsel %vm511, %v1134, %v1135
      %v1137 = vrot.slane %v1061, 7
      %v1138 = vrot.slane %v1062, 7
      %v1139 = vsel %vm511, %v1137, %v1138
      %v1140 = vrot.slane %v1063, 7
      %v1141 = vrot.slane %v1064, 7
      %v1142 = vsel %vm511, %v1140, %v1141
      %v1143 = vrot.slane %v1065, 7
      %v1144 = vrot.slane %v1066, 7
      %v1145 = vsel %vm511, %v1143, %v1144
      %v1146 = vrot.slane %v1067, 7
      %v1147 = vrot.slane %v1068, 7
      %v1148 = vsel %vm511, %v1146, %v1147
      %v1197 = vadd.f32 %v985, %v1101
      %v1198 = vadd.f32 %v986, %v1103
      %v1199 = vadd.f32 %v987, %v1102
      %v1200 = vadd.f32 %v988, %v1104
      %v1201 = vadd.f32 %v989, %v1106
      %v1202 = vadd.f32 %v990, %v1105
      %v1203 = vadd.f32 %v991, %v1107
      %v1204 = vadd.f32 %v992, %v1109
      %v1205 = vadd.f32 %v993, %v1108
      %v1206 = vadd.f32 %v994, %v1110
      %v1207 = vadd.f32 %v995, %v1112
      %v1208 = vadd.f32 %v996, %v1111
      %v1209 = vadd.f32 %v997, %v1113
      %v1210 = vadd.f32 %v998, %v1115
      %v1211 = vadd.f32 %v999, %v1114
      %v1212 = vadd.f32 %v1000, %v1116
      %v1213 = vadd.f32 %v1001, %v1118
      %v1214 = vadd.f32 %v1002, %v1117
      %v1215 = vadd.f32 %v1003, %v1119
      %v1216 = vadd.f32 %v1004, %v1121
      %v1217 = vadd.f32 %v1005, %v1120
      %v1218 = vadd.f32 %v1006, %v1122
      %v1219 = vadd.f32 %v1007, %v1124
      %v1220 = vadd.f32 %v1008, %v1123
      %v1221 = vadd.f32 %v1009, %v1125
      %v1222 = vadd.f32 %v1010, %v1127
      %v1223 = vadd.f32 %v1011, %v1126
      %v1224 = vadd.f32 %v1012, %v1128
      %v1225 = vadd.f32 %v1013, %v1130
      %v1226 = vadd.f32 %v1014, %v1129
      %v1227 = vadd.f32 %v1015, %v1131
      %v1228 = vadd.f32 %v1016, %v1133
      %v1229 = vadd.f32 %v1017, %v1132
      %v1230 = vadd.f32 %v1018, %v1134
      %v1231 = vadd.f32 %v1019, %v1136
      %v1232 = vadd.f32 %v1020, %v1135
      %v1233 = vadd.f32 %v1021, %v1137
      %v1234 = vadd.f32 %v1022, %v1139
      %v1235 = vadd.f32 %v1023, %v1138
      %v1236 = vadd.f32 %v1024, %v1140
      %v1237 = vadd.f32 %v1025, %v1142
      %v1238 = vadd.f32 %v1026, %v1141
      %v1239 = vadd.f32 %v1027, %v1143
      %v1240 = vadd.f32 %v1028, %v1145
      %v1241 = vadd.f32 %v1029, %v1144
      %v1242 = vadd.f32 %v1030, %v1146
      %v1243 = vadd.f32 %v1031, %v1148
      %v1244 = vadd.f32 %v1032, %v1147
      %v1245 = vlaneseq
      %v1246 = vshrl.u32 %v1245, 7
      %v1247 = vsub.s32 2, %v1246
      %v1248 = vrot.slane %v389, %v1247
      %v1249 = vmul.f32 %v337, %v1248
      %v1250 = vmul.f32 %v338, %v1248
      %v1251 = vmul.f32 %v339, %v1248
      %v1252 = vmul.f32 %v340, %v1248
      %v1253 = vmul.f32 %v341, %v1248
      %v1254 = vmul.f32 %v342, %v1248
      %v1255 = vmul.f32 %v343, %v1248
      %v1256 = vmul.f32 %v344, %v1248
      %v1257 = vmul.f32 %v345, %v1248
      %v1258 = vmul.f32 %v346, %v1248
      %v1259 = vmul.f32 %v347, %v1248
      %v1260 = vmul.f32 %v348, %v1248
      %v1261 = vmul.f32 %v349, %v1248
      %v1262 = vmul.f32 %v350, %v1248
      %v1263 = vmul.f32 %v351, %v1248
      %v1264 = vmul.f32 %v352, %v1248
      %v1265 = vmul.f32 %v353, %v1248
      %v1266 = vmul.f32 %v354, %v1248
      %v1267 = vmul.f32 %v355, %v1248
      %v1268 = vmul.f32 %v356, %v1248
      %v1269 = vmul.f32 %v357, %v1248
      %v1270 = vmul.f32 %v358, %v1248
      %v1271 = vmul.f32 %v359, %v1248
      %v1272 = vmul.f32 %v360, %v1248
      %v1273 = vmul.f32 %v361, %v1248
      %v1274 = vmul.f32 %v362, %v1248
      %v1275 = vmul.f32 %v363, %v1248
      %v1276 = vmul.f32 %v364, %v1248
      %v1277 = vmul.f32 %v365, %v1248
      %v1278 = vmul.f32 %v366, %v1248
      %v1279 = vmul.f32 %v367, %v1248
      %v1280 = vmul.f32 %v368, %v1248
      %v1281 = vmul.f32 %v369, %v1248
      %v1282 = vmul.f32 %v370, %v1248
      %v1283 = vmul.f32 %v371, %v1248
      %v1284 = vmul.f32 %v372, %v1248
      %v1285 = vmul.f32 %v373, %v1248
      %v1286 = vmul.f32 %v374, %v1248
      %v1287 = vmul.f32 %v375, %v1248
      %v1288 = vmul.f32 %v376, %v1248
      %v1289 = vmul.f32 %v377, %v1248
      %v1290 = vmul.f32 %v378, %v1248
      %v1291 = vmul.f32 %v379, %v1248
      %v1292 = vmul.f32 %v380, %v1248
      %v1293 = vmul.f32 %v381, %v1248
      %v1294 = vmul.f32 %v382, %v1248
      %v1295 = vmul.f32 %v383, %v1248
      %v1296 = vmul.f32 %v384, %v1248
      %v1345 = vrot.slane %v1249, 1
      %v1346 = vrot.slane %v1250, 1
      %v1347 = vsel %vm856, %v1345, %v1346
      %v1348 = vrot.slane %v1251, 1
      %v1349 = vsel %vm856, %v1346, %v1348
      %v1350 = vrot.slane %v1252, 1
      %v1351 = vrot.slane %v1253, 1
      %v1352 = vsel %vm856, %v1350, %v1351
      %v1353 = vrot.slane %v1254, 1
      %v1354 = vsel %vm856, %v1351, %v1353
      %v1355 = vrot.slane %v1255, 1
      %v1356 = vrot.slane %v1256, 1
      %v1357 = vsel %vm856, %v1355, %v1356
      %v1358 = vrot.slane %v1257, 1
      %v1359 = vsel %vm856, %v1356, %v1358
      %v1360 = vrot.slane %v1258, 1
      %v1361 = vrot.slane %v1259, 1
      %v1362 = vsel %vm856, %v1360, %v1361
      %v1363 = vrot.slane %v1260, 1
      %v1364 = vsel %vm856, %v1361, %v1363
      %v1365 = vrot.slane %v1261, 1
      %v1366 = vrot.slane %v1262, 1
      %v1367 = vsel %vm856, %v1365, %v1366
      %v1368 = vrot.slane %v1263, 1
      %v1369 = vsel %vm856, %v1366, %v1368
      %v1370 = vrot.slane %v1264, 1
      %v1371 = vrot.slane %v1265, 1
      %v1372 = vsel %vm856, %v1370, %v1371
      %v1373 = vrot.slane %v1266, 1
      %v1374 = vsel %vm856, %v1371, %v1373
      %v1375 = vrot.slane %v1267, 1
      %v1376 = vrot.slane %v1268, 1
      %v1377 = vsel %vm856, %v1375, %v1376
      %v1378 = vrot.slane %v1269, 1
      %v1379 = vsel %vm856, %v1376, %v1378
      %v1380 = vrot.slane %v1270, 1
      %v1381 = vrot.slane %v1271, 1
      %v1382 = vsel %vm856, %v1380, %v1381
      %v1383 = vrot.slane %v1272, 1
      %v1384 = vsel %vm856, %v1381, %v1383
      %v1385 = vrot.slane %v1273, 1
      %v1386 = vrot.slane %v1274, 1
      %v1387 = vsel %vm856, %v1385, %v1386
      %v1388 = vrot.slane %v1275, 1
      %v1389 = vsel %vm856, %v1386, %v1388
      %v1390 = vrot.slane %v1276, 1
      %v1391 = vrot.slane %v1277, 1
      %v1392 = vsel %vm856, %v1390, %v1391
      %v1393 = vrot.slane %v1278, 1
      %v1394 = vsel %vm856, %v1391, %v1393
      %v1395 = vrot.slane %v1279, 1
      %v1396 = vrot.slane %v1280, 1
      %v1397 = vsel %vm856, %v1395, %v1396
      %v1398 = vrot.slane %v1281, 1
      %v1399 = vsel %vm856, %v1396, %v1398
      %v1400 = vrot.slane %v1282, 1
      %v1401 = vrot.slane %v1283, 1
      %v1402 = vsel %vm856, %v1400, %v1401
      %v1403 = vrot.slane %v1284, 1
      %v1404 = vsel %vm856, %v1401, %v1403
      %v1405 = vrot.slane %v1285, 1
      %v1406 = vrot.slane %v1286, 1
      %v1407 = vsel %vm856, %v1405, %v1406
      %v1408 = vrot.slane %v1287, 1
      %v1409 = vsel %vm856, %v1406, %v1408
      %v1410 = vrot.slane %v1288, 1
      %v1411 = vrot.slane %v1289, 1
      %v1412 = vsel %vm856, %v1410, %v1411
      %v1413 = vrot.slane %v1290, 1
      %v1414 = vsel %vm856, %v1411, %v1413
      %v1415 = vrot.slane %v1291, 1
      %v1416 = vrot.slane %v1292, 1
      %v1417 = vsel %vm856, %v1415, %v1416
      %v1418 = vrot.slane %v1293, 1
      %v1419 = vsel %vm856, %v1416, %v1418
      %v1420 = vrot.slane %v1294, 1
      %v1421 = vrot.slane %v1295, 1
      %v1422 = vsel %vm856, %v1420, %v1421
      %v1423 = vrot.slane %v1296, 1
      %v1424 = vsel %vm856, %v1421, %v1423
      %v1473 = vadd.f32 %v1197, %v1347
      %v1474 = vadd.f32 %v1198, %v1349
      %v1475 = vadd.f32 %v1199, %v1348
      %v1476 = vadd.f32 %v1200, %v1352
      %v1477 = vadd.f32 %v1201, %v1354
      %v1478 = vadd.f32 %v1202, %v1353
      %v1479 = vadd.f32 %v1203, %v1357
      %v1480 = vadd.f32 %v1204, %v1359
      %v1481 = vadd.f32 %v1205, %v1358
      %v1482 = vadd.f32 %v1206, %v1362
      %v1483 = vadd.f32 %v1207, %v1364
      %v1484 = vadd.f32 %v1208, %v1363
      %v1485 = vadd.f32 %v1209, %v1367
      %v1486 = vadd.f32 %v1210, %v1369
      %v1487 = vadd.f32 %v1211, %v1368
      %v1488 = vadd.f32 %v1212, %v1372
      %v1489 = vadd.f32 %v1213, %v1374
      %v1490 = vadd.f32 %v1214, %v1373
      %v1491 = vadd.f32 %v1215, %v1377
      %v1492 = vadd.f32 %v1216, %v1379
      %v1493 = vadd.f32 %v1217, %v1378
      %v1494 = vadd.f32 %v1218, %v1382
      %v1495 = vadd.f32 %v1219, %v1384
      %v1496 = vadd.f32 %v1220, %v1383
      %v1497 = vadd.f32 %v1221, %v1387
      %v1498 = vadd.f32 %v1222, %v1389
      %v1499 = vadd.f32 %v1223, %v1388
      %v1500 = vadd.f32 %v1224, %v1392
      %v1501 = vadd.f32 %v1225, %v1394
      %v1502 = vadd.f32 %v1226, %v1393
      %v1503 = vadd.f32 %v1227, %v1397
      %v1504 = vadd.f32 %v1228, %v1399
      %v1505 = vadd.f32 %v1229, %v1398
      %v1506 = vadd.f32 %v1230, %v1402
      %v1507 = vadd.f32 %v1231, %v1404
      %v1508 = vadd.f32 %v1232, %v1403
      %v1509 = vadd.f32 %v1233, %v1407
      %v1510 = vadd.f32 %v1234, %v1409
      %v1511 = vadd.f32 %v1235, %v1408
      %v1512 = vadd.f32 %v1236, %v1412
      %v1513 = vadd.f32 %v1237, %v1414
      %v1514 = vadd.f32 %v1238, %v1413
      %v1515 = vadd.f32 %v1239, %v1417
      %v1516 = vadd.f32 %v1240, %v1419
      %v1517 = vadd.f32 %v1241, %v1418
      %v1518 = vadd.f32 %v1242, %v1422
      %v1519 = vadd.f32 %v1243, %v1424
      %v1520 = vadd.f32 %v1244, %v1423
      %v1521 = vlaneseq
      %v1522 = vshrl.u32 %v1521, 7
      %v1523 = vsub.s32 0, %v1522
      %v1524 = vrot.slane %v390, %v1523
      %v1525 = vmul.f32 %v340, %v1524
      %v1526 = vmul.f32 %v341, %v1524
      %v1527 = vmul.f32 %v343, %v1524
      %v1528 = vmul.f32 %v344, %v1524
      %v1529 = vmul.f32 %v346, %v1524
      %v1530 = vmul.f32 %v347, %v1524
      %v1531 = vmul.f32 %v349, %v1524
      %v1532 = vmul.f32 %v350, %v1524
      %v1533 = vmul.f32 %v352, %v1524
      %v1534 = vmul.f32 %v353, %v1524
      %v1535 = vmul.f32 %v355, %v1524
      %v1536 = vmul.f32 %v356, %v1524
      %v1537 = vmul.f32 %v358, %v1524
      %v1538 = vmul.f32 %v359, %v1524
      %v1539 = vmul.f32 %v361, %v1524
      %v1540 = vmul.f32 %v362, %v1524
      %v1541 = vmul.f32 %v364, %v1524
      %v1542 = vmul.f32 %v365, %v1524
      %v1543 = vmul.f32 %v367, %v1524
      %v1544 = vmul.f32 %v368, %v1524
      %v1545 = vmul.f32 %v370, %v1524
      %v1546 = vmul.f32 %v371, %v1524
      %v1547 = vmul.f32 %v373, %v1524
      %v1548 = vmul.f32 %v374, %v1524
      %v1549 = vmul.f32 %v376, %v1524
      %v1550 = vmul.f32 %v377, %v1524
      %v1551 = vmul.f32 %v379, %v1524
      %v1552 = vmul.f32 %v380, %v1524
      %v1553 = vmul.f32 %v382, %v1524
      %v1554 = vmul.f32 %v383, %v1524
      %v1555 = vmul.f32 %v385, %v1524
      %v1556 = vmul.f32 %v386, %v1524
      %v1589 = vrot.slane %v1525, 7
      %v1590 = vrot.slane %v1526, 7
      %v1591 = vsel %vm511, %v1589, %v1590
      %v1592 = vrot.slane %v1527, 7
      %v1593 = vrot.slane %v1528, 7
      %v1594 = vsel %vm511, %v1592, %v1593
      %v1595 = vrot.slane %v1529, 7
      %v1596 = vrot.slane %v1530, 7
      %v1597 = vsel %vm511, %v1595, %v1596
      %v1598 = vrot.slane %v1531, 7
      %v1599 = vrot.slane %v1532, 7
      %v1600 = vsel %vm511, %v1598, %v1599
      %v1601 = vrot.slane %v1533, 7
      %v1602 = vrot.slane %v1534, 7
      %v1603 = vsel %vm511, %v1601, %v1602
      %v1604 = vrot.slane %v1535, 7
      %v1605 = vrot.slane %v1536, 7
      %v1606 = vsel %vm511, %v1604, %v1605
      %v1607 = vrot.slane %v1537, 7
      %v1608 = vrot.slane %v1538, 7
      %v1609 = vsel %vm511, %v1607, %v1608
      %v1610 = vrot.slane %v1539, 7
      %v1611 = vrot.slane %v1540, 7
      %v1612 = vsel %vm511, %v1610, %v1611
      %v1613 = vrot.slane %v1541, 7
      %v1614 = vrot.slane %v1542, 7
      %v1615 = vsel %vm511, %v1613, %v1614
      %v1616 = vrot.slane %v1543, 7
      %v1617 = vrot.slane %v1544, 7
      %v1618 = vsel %vm511, %v1616, %v1617
      %v1619 = vrot.slane %v1545, 7
      %v1620 = vrot.slane %v1546, 7
      %v1621 = vsel %vm511, %v1619, %v1620
      %v1622 = vrot.slane %v1547, 7
      %v1623 = vrot.slane %v1548, 7
      %v1624 = vsel %vm511, %v1622, %v1623
      %v1625 = vrot.slane %v1549, 7
      %v1626 = vrot.slane %v1550, 7
      %v1627 = vsel %vm511, %v1625, %v1626
      %v1628 = vrot.slane %v1551, 7
      %v1629 = vrot.slane %v1552, 7
      %v1630 = vsel %vm511, %v1628, %v1629
      %v1631 = vrot.slane %v1553, 7
      %v1632 = vrot.slane %v1554, 7
      %v1633 = vsel %vm511, %v1631, %v1632
      %v1634 = vrot.slane %v1555, 7
      %v1635 = vrot.slane %v1556, 7
      %v1636 = vsel %vm511, %v1634, %v1635
      %v1685 = vadd.f32 %v1473, %v1589
      %v1686 = vadd.f32 %v1474, %v1591
      %v1687 = vadd.f32 %v1475, %v1590
      %v1688 = vadd.f32 %v1476, %v1592
      %v1689 = vadd.f32 %v1477, %v1594
      %v1690 = vadd.f32 %v1478, %v1593
      %v1691 = vadd.f32 %v1479, %v1595
      %v1692 = vadd.f32 %v1480, %v1597
      %v1693 = vadd.f32 %v1481, %v1596
      %v1694 = vadd.f32 %v1482, %v1598
      %v1695 = vadd.f32 %v1483, %v1600
      %v1696 = vadd.f32 %v1484, %v1599
      %v1697 = vadd.f32 %v1485, %v1601
      %v1698 = vadd.f32 %v1486, %v1603
      %v1699 = vadd.f32 %v1487, %v1602
      %v1700 = vadd.f32 %v1488, %v1604
      %v1701 = vadd.f32 %v1489, %v1606
      %v1702 = vadd.f32 %v1490, %v1605
      %v1703 = vadd.f32 %v1491, %v1607
      %v1704 = vadd.f32 %v1492, %v1609
      %v1705 = vadd.f32 %v1493, %v1608
      %v1706 = vadd.f32 %v1494, %v1610
      %v1707 = vadd.f32 %v1495, %v1612
      %v1708 = vadd.f32 %v1496, %v1611
      %v1709 = vadd.f32 %v1497, %v1613
      %v1710 = vadd.f32 %v1498, %v1615
      %v1711 = vadd.f32 %v1499, %v1614
      %v1712 = vadd.f32 %v1500, %v1616
      %v1713 = vadd.f32 %v1501, %v1618
      %v1714 = vadd.f32 %v1502, %v1617
      %v1715 = vadd.f32 %v1503, %v1619
      %v1716 = vadd.f32 %v1504, %v1621
      %v1717 = vadd.f32 %v1505, %v1620
      %v1718 = vadd.f32 %v1506, %v1622
      %v1719 = vadd.f32 %v1507, %v1624
      %v1720 = vadd.f32 %v1508, %v1623
      %v1721 = vadd.f32 %v1509, %v1625
      %v1722 = vadd.f32 %v1510, %v1627
      %v1723 = vadd.f32 %v1511, %v1626
      %v1724 = vadd.f32 %v1512, %v1628
      %v1725 = vadd.f32 %v1513, %v1630
      %v1726 = vadd.f32 %v1514, %v1629
      %v1727 = vadd.f32 %v1515, %v1631
      %v1728 = vadd.f32 %v1516, %v1633
      %v1729 = vadd.f32 %v1517, %v1632
      %v1730 = vadd.f32 %v1518, %v1634
      %v1731 = vadd.f32 %v1519, %v1636
      %v1732 = vadd.f32 %v1520, %v1635
      %v1733 = vlaneseq
      %v1734 = vshrl.u32 %v1733, 7
      %v1735 = vsub.s32 1, %v1734
      %v1736 = vrot.slane %v390, %v1735
      %v1737 = vmul.f32 %v340, %v1736
      %v1738 = vmul.f32 %v341, %v1736
      %v1739 = vmul.f32 %v342, %v1736
      %v1740 = vmul.f32 %v343, %v1736
      %v1741 = vmul.f32 %v344, %v1736
      %v1742 = vmul.f32 %v345, %v1736
      %v1743 = vmul.f32 %v346, %v1736
      %v1744 = vmul.f32 %v347, %v1736
      %v1745 = vmul.f32 %v348, %v1736
      %v1746 = vmul.f32 %v349, %v1736
      %v1747 = vmul.f32 %v350, %v1736
      %v1748 = vmul.f32 %v351, %v1736
      %v1749 = vmul.f32 %v352, %v1736
      %v1750 = vmul.f32 %v353, %v1736
      %v1751 = vmul.f32 %v354, %v1736
      %v1752 = vmul.f32 %v355, %v1736
      %v1753 = vmul.f32 %v356, %v1736
      %v1754 = vmul.f32 %v357, %v1736
      %v1755 = vmul.f32 %v358, %v1736
      %v1756 = vmul.f32 %v359, %v1736
      %v1757 = vmul.f32 %v360, %v1736
      %v1758 = vmul.f32 %v361, %v1736
      %v1759 = vmul.f32 %v362, %v1736
      %v1760 = vmul.f32 %v363, %v1736
      %v1761 = vmul.f32 %v364, %v1736
      %v1762 = vmul.f32 %v365, %v1736
      %v1763 = vmul.f32 %v366, %v1736
      %v1764 = vmul.f32 %v367, %v1736
      %v1765 = vmul.f32 %v368, %v1736
      %v1766 = vmul.f32 %v369, %v1736
      %v1767 = vmul.f32 %v370, %v1736
      %v1768 = vmul.f32 %v371, %v1736
      %v1769 = vmul.f32 %v372, %v1736
      %v1770 = vmul.f32 %v373, %v1736
      %v1771 = vmul.f32 %v374, %v1736
      %v1772 = vmul.f32 %v375, %v1736
      %v1773 = vmul.f32 %v376, %v1736
      %v1774 = vmul.f32 %v377, %v1736
      %v1775 = vmul.f32 %v378, %v1736
      %v1776 = vmul.f32 %v379, %v1736
      %v1777 = vmul.f32 %v380, %v1736
      %v1778 = vmul.f32 %v381, %v1736
      %v1779 = vmul.f32 %v382, %v1736
      %v1780 = vmul.f32 %v383, %v1736
      %v1781 = vmul.f32 %v384, %v1736
      %v1782 = vmul.f32 %v385, %v1736
      %v1783 = vmul.f32 %v386, %v1736
      %v1784 = vmul.f32 %v387, %v1736
      %v1785 = vadd.f32 %v1685, %v1737
      %v1786 = vadd.f32 %v1686, %v1738
      %v1787 = vadd.f32 %v1687, %v1739
      %v1788 = vadd.f32 %v1688, %v1740
      %v1789 = vadd.f32 %v1689, %v1741
      %v1790 = vadd.f32 %v1690, %v1742
      %v1791 = vadd.f32 %v1691, %v1743
      %v1792 = vadd.f32 %v1692, %v1744
      %v1793 = vadd.f32 %v1693, %v1745
      %v1794 = vadd.f32 %v1694, %v1746
      %v1795 = vadd.f32 %v1695, %v1747
      %v1796 = vadd.f32 %v1696, %v1748
      %v1797 = vadd.f32 %v1697, %v1749
      %v1798 = vadd.f32 %v1698, %v1750
      %v1799 = vadd.f32 %v1699, %v1751
      %v1800 = vadd.f32 %v1700, %v1752
      %v1801 = vadd.f32 %v1701, %v1753
      %v1802 = vadd.f32 %v1702, %v1754
      %v1803 = vadd.f32 %v1703, %v1755
      %v1804 = vadd.f32 %v1704, %v1756
      %v1805 = vadd.f32 %v1705, %v1757
      %v1806 = vadd.f32 %v1706, %v1758
      %v1807 = vadd.f32 %v1707, %v1759
      %v1808 = vadd.f32 %v1708, %v1760
      %v1809 = vadd.f32 %v1709, %v1761
      %v1810 = vadd.f32 %v1710, %v1762
      %v1811 = vadd.f32 %v1711, %v1763
      %v1812 = vadd.f32 %v1712, %v1764
      %v1813 = vadd.f32 %v1713, %v1765
      %v1814 = vadd.f32 %v1714, %v1766
      %v1815 = vadd.f32 %v1715, %v1767
      %v1816 = vadd.f32 %v1716, %v1768
      %v1817 = vadd.f32 %v1717, %v1769
      %v1818 = vadd.f32 %v1718, %v1770
      %v1819 = vadd.f32 %v1719, %v1771
      %v1820 = vadd.f32 %v1720, %v1772
      %v1821 = vadd.f32 %v1721, %v1773
      %v1822 = vadd.f32 %v1722, %v1774
      %v1823 = vadd.f32 %v1723, %v1775
      %v1824 = vadd.f32 %v1724, %v1776
      %v1825 = vadd.f32 %v1725, %v1777
      %v1826 = vadd.f32 %v1726, %v1778
      %v1827 = vadd.f32 %v1727, %v1779
      %v1828 = vadd.f32 %v1728, %v1780
      %v1829 = vadd.f32 %v1729, %v1781
      %v1830 = vadd.f32 %v1730, %v1782
      %v1831 = vadd.f32 %v1731, %v1783
      %v1832 = vadd.f32 %v1732, %v1784
      %v1833 = vlaneseq
      %v1834 = vshrl.u32 %v1833, 7
      %v1835 = vsub.s32 2, %v1834
      %v1836 = vrot.slane %v390, %v1835
      %v1837 = vmul.f32 %v340, %v1836
      %v1838 = vmul.f32 %v341, %v1836
      %v1839 = vmul.f32 %v342, %v1836
      %v1840 = vmul.f32 %v343, %v1836
      %v1841 = vmul.f32 %v344, %v1836
      %v1842 = vmul.f32 %v345, %v1836
      %v1843 = vmul.f32 %v346, %v1836
      %v1844 = vmul.f32 %v347, %v1836
      %v1845 = vmul.f32 %v348, %v1836
      %v1846 = vmul.f32 %v349, %v1836
      %v1847 = vmul.f32 %v350, %v1836
      %v1848 = vmul.f32 %v351, %v1836
      %v1849 = vmul.f32 %v352, %v1836
      %v1850 = vmul.f32 %v353, %v1836
      %v1851 = vmul.f32 %v354, %v1836
      %v1852 = vmul.f32 %v355, %v1836
      %v1853 = vmul.f32 %v356, %v1836
      %v1854 = vmul.f32 %v357, %v1836
      %v1855 = vmul.f32 %v358, %v1836
      %v1856 = vmul.f32 %v359, %v1836
      %v1857 = vmul.f32 %v360, %v1836
      %v1858 = vmul.f32 %v361, %v1836
      %v1859 = vmul.f32 %v362, %v1836
      %v1860 = vmul.f32 %v363, %v1836
      %v1861 = vmul.f32 %v364, %v1836
      %v1862 = vmul.f32 %v365, %v1836
      %v1863 = vmul.f32 %v366, %v1836
      %v1864 = vmul.f32 %v367, %v1836
      %v1865 = vmul.f32 %v368, %v1836
      %v1866 = vmul.f32 %v369, %v1836
      %v1867 = vmul.f32 %v370, %v1836
      %v1868 = vmul.f32 %v371, %v1836
      %v1869 = vmul.f32 %v372, %v1836
      %v1870 = vmul.f32 %v373, %v1836
      %v1871 = vmul.f32 %v374, %v1836
      %v1872 = vmul.f32 %v375, %v1836
      %v1873 = vmul.f32 %v376, %v1836
      %v1874 = vmul.f32 %v377, %v1836
      %v1875 = vmul.f32 %v378, %v1836
      %v1876 = vmul.f32 %v379, %v1836
      %v1877 = vmul.f32 %v380, %v1836
      %v1878 = vmul.f32 %v381, %v1836
      %v1879 = vmul.f32 %v382, %v1836
      %v1880 = vmul.f32 %v383, %v1836
      %v1881 = vmul.f32 %v384, %v1836
      %v1882 = vmul.f32 %v385, %v1836
      %v1883 = vmul.f32 %v386, %v1836
      %v1884 = vmul.f32 %v387, %v1836
      %v1933 = vrot.slane %v1837, 1
      %v1934 = vrot.slane %v1838, 1
      %v1935 = vsel %vm856, %v1933, %v1934
      %v1936 = vrot.slane %v1839, 1
      %v1937 = vsel %vm856, %v1934, %v1936
      %v1938 = vrot.slane %v1840, 1
      %v1939 = vrot.slane %v1841, 1
      %v1940 = vsel %vm856, %v1938, %v1939
      %v1941 = vrot.slane %v1842, 1
      %v1942 = vsel %vm856, %v1939, %v1941
      %v1943 = vrot.slane %v1843, 1
      %v1944 = vrot.slane %v1844, 1
      %v1945 = vsel %vm856, %v1943, %v1944
      %v1946 = vrot.slane %v1845, 1
      %v1947 = vsel %vm856, %v1944, %v1946
      %v1948 = vrot.slane %v1846, 1
      %v1949 = vrot.slane %v1847, 1
      %v1950 = vsel %vm856, %v1948, %v1949
      %v1951 = vrot.slane %v1848, 1
      %v1952 = vsel %vm856, %v1949, %v1951
      %v1953 = vrot.slane %v1849, 1
      %v1954 = vrot.slane %v1850, 1
      %v1955 = vsel %vm856, %v1953, %v1954
      %v1956 = vrot.slane %v1851, 1
      %v1957 = vsel %vm856, %v1954, %v1956
      %v1958 = vrot.slane %v1852, 1
      %v1959 = vrot.slane %v1853, 1
      %v1960 = vsel %vm856, %v1958, %v1959
      %v1961 = vrot.slane %v1854, 1
      %v1962 = vsel %vm856, %v1959, %v1961
      %v1963 = vrot.slane %v1855, 1
      %v1964 = vrot.slane %v1856, 1
      %v1965 = vsel %vm856, %v1963, %v1964
      %v1966 = vrot.slane %v1857, 1
      %v1967 = vsel %vm856, %v1964, %v1966
      %v1968 = vrot.slane %v1858, 1
      %v1969 = vrot.slane %v1859, 1
      %v1970 = vsel %vm856, %v1968, %v1969
      %v1971 = vrot.slane %v1860, 1
      %v1972 = vsel %vm856, %v1969, %v1971
      %v1973 = vrot.slane %v1861, 1
      %v1974 = vrot.slane %v1862, 1
      %v1975 = vsel %vm856, %v1973, %v1974
      %v1976 = vrot.slane %v1863, 1
      %v1977 = vsel %vm856, %v1974, %v1976
      %v1978 = vrot.slane %v1864, 1
      %v1979 = vrot.slane %v1865, 1
      %v1980 = vsel %vm856, %v1978, %v1979
      %v1981 = vrot.slane %v1866, 1
      %v1982 = vsel %vm856, %v1979, %v1981
      %v1983 = vrot.slane %v1867, 1
      %v1984 = vrot.slane %v1868, 1
      %v1985 = vsel %vm856, %v1983, %v1984
      %v1986 = vrot.slane %v1869, 1
      %v1987 = vsel %vm856, %v1984, %v1986
      %v1988 = vrot.slane %v1870, 1
      %v1989 = vrot.slane %v1871, 1
      %v1990 = vsel %vm856, %v1988, %v1989
      %v1991 = vrot.slane %v1872, 1
      %v1992 = vsel %vm856, %v1989, %v1991
      %v1993 = vrot.slane %v1873, 1
      %v1994 = vrot.slane %v1874, 1
      %v1995 = vsel %vm856, %v1993, %v1994
      %v1996 = vrot.slane %v1875, 1
      %v1997 = vsel %vm856, %v1994, %v1996
      %v1998 = vrot.slane %v1876, 1
      %v1999 = vrot.slane %v1877, 1
      %v2000 = vsel %vm856, %v1998, %v1999
      %v2001 = vrot.slane %v1878, 1
      %v2002 = vsel %vm856, %v1999, %v2001
      %v2003 = vrot.slane %v1879, 1
      %v2004 = vrot.slane %v1880, 1
      %v2005 = vsel %vm856, %v2003, %v2004
      %v2006 = vrot.slane %v1881, 1
      %v2007 = vsel %vm856, %v2004, %v2006
      %v2008 = vrot.slane %v1882, 1
      %v2009 = vrot.slane %v1883, 1
      %v2010 = vsel %vm856, %v2008, %v2009
      %v2011 = vrot.slane %v1884, 1
      %v2012 = vsel %vm856, %v2009, %v2011
      %v2061 = vadd.f32 %v1785, %v1935
      %v2062 = vadd.f32 %v1786, %v1937
      %v2063 = vadd.f32 %v1787, %v1936
      %v2064 = vadd.f32 %v1788, %v1940
      %v2065 = vadd.f32 %v1789, %v1942
      %v2066 = vadd.f32 %v1790, %v1941
      %v2067 = vadd.f32 %v1791, %v1945
      %v2068 = vadd.f32 %v1792, %v1947
      %v2069 = vadd.f32 %v1793, %v1946
      %v2070 = vadd.f32 %v1794, %v1950
      %v2071 = vadd.f32 %v1795, %v1952
      %v2072 = vadd.f32 %v1796, %v1951
      %v2073 = vadd.f32 %v1797, %v1955
      %v2074 = vadd.f32 %v1798, %v1957
      %v2075 = vadd.f32 %v1799, %v1956
      %v2076 = vadd.f32 %v1800, %v1960
      %v2077 = vadd.f32 %v1801, %v1962
      %v2078 = vadd.f32 %v1802, %v1961
      %v2079 = vadd.f32 %v1803, %v1965
      %v2080 = vadd.f32 %v1804, %v1967
      %v2081 = vadd.f32 %v1805, %v1966
      %v2082 = vadd.f32 %v1806, %v1970
      %v2083 = vadd.f32 %v1807, %v1972
      %v2084 = vadd.f32 %v1808, %v1971
      %v2085 = vadd.f32 %v1809, %v1975
      %v2086 = vadd.f32 %v1810, %v1977
      %v2087 = vadd.f32 %v1811, %v1976
      %v2088 = vadd.f32 %v1812, %v1980
      %v2089 = vadd.f32 %v1813, %v1982
      %v2090 = vadd.f32 %v1814, %v1981
      %v2091 = vadd.f32 %v1815, %v1985
      %v2092 = vadd.f32 %v1816, %v1987
      %v2093 = vadd.f32 %v1817, %v1986
      %v2094 = vadd.f32 %v1818, %v1990
      %v2095 = vadd.f32 %v1819, %v1992
      %v2096 = vadd.f32 %v1820, %v1991
      %v2097 = vadd.f32 %v1821, %v1995
      %v2098 = vadd.f32 %v1822, %v1997
      %v2099 = vadd.f32 %v1823, %v1996
      %v2100 = vadd.f32 %v1824, %v2000
      %v2101 = vadd.f32 %v1825, %v2002
      %v2102 = vadd.f32 %v1826, %v2001
      %v2103 = vadd.f32 %v1827, %v2005
      %v2104 = vadd.f32 %v1828, %v2007
      %v2105 = vadd.f32 %v1829, %v2006
      %v2106 = vadd.f32 %v1830, %v2010
      %v2107 = vadd.f32 %v1831, %v2012
      %v2108 = vadd.f32 %v1832, %v2011
      %v2109 = vld [vmem:[%s2] sm:$0x1]
      %v2111 = vlaneseq
      %v2112 = vshrl.u32 %v2111, 7
      %v2113 = vsub.s32 0, %v2112
      %v2114 = vrot.slane %v2109, %v2113
      %v2116 = vadd.f32 %v2061, %v2114
      %v2117 = vadd.f32 %v2062, %v2114
      %v2118 = vadd.f32 %v2063, %v2114
      %v2119 = vadd.f32 %v2064, %v2114
      %v2120 = vadd.f32 %v2065, %v2114
      %v2121 = vadd.f32 %v2066, %v2114
      %v2122 = vadd.f32 %v2067, %v2114
      %v2123 = vadd.f32 %v2068, %v2114
      %v2124 = vadd.f32 %v2069, %v2114
      %v2125 = vadd.f32 %v2070, %v2114
      %v2126 = vadd.f32 %v2071, %v2114
      %v2127 = vadd.f32 %v2072, %v2114
      %v2128 = vadd.f32 %v2073, %v2114
      %v2129 = vadd.f32 %v2074, %v2114
      %v2130 = vadd.f32 %v2075, %v2114
      %v2131 = vadd.f32 %v2076, %v2114
      %v2132 = vadd.f32 %v2077, %v2114
      %v2133 = vadd.f32 %v2078, %v2114
      %v2134 = vadd.f32 %v2079, %v2114
      %v2135 = vadd.f32 %v2080, %v2114
      %v2136 = vadd.f32 %v2081, %v2114
      %v2137 = vadd.f32 %v2082, %v2114
      %v2138 = vadd.f32 %v2083, %v2114
      %v2139 = vadd.f32 %v2084, %v2114
      %v2140 = vadd.f32 %v2085, %v2114
      %v2141 = vadd.f32 %v2086, %v2114
      %v2142 = vadd.f32 %v2087, %v2114
      %v2143 = vadd.f32 %v2088, %v2114
      %v2144 = vadd.f32 %v2089, %v2114
      %v2145 = vadd.f32 %v2090, %v2114
      %v2146 = vadd.f32 %v2091, %v2114
      %v2147 = vadd.f32 %v2092, %v2114
      %v2148 = vadd.f32 %v2093, %v2114
      %v2149 = vadd.f32 %v2094, %v2114
      %v2150 = vadd.f32 %v2095, %v2114
      %v2151 = vadd.f32 %v2096, %v2114
      %v2152 = vadd.f32 %v2097, %v2114
      %v2153 = vadd.f32 %v2098, %v2114
      %v2154 = vadd.f32 %v2099, %v2114
      %v2155 = vadd.f32 %v2100, %v2114
      %v2156 = vadd.f32 %v2101, %v2114
      %v2157 = vadd.f32 %v2102, %v2114
      %v2158 = vadd.f32 %v2103, %v2114
      %v2159 = vadd.f32 %v2104, %v2114
      %v2160 = vadd.f32 %v2105, %v2114
      %v2161 = vadd.f32 %v2106, %v2114
      %v2162 = vadd.f32 %v2107, %v2114
      %v2163 = vadd.f32 %v2108, %v2114
      %v2164 = vmul.f32 %v2116, 0.5
      %v2165 = vmul.f32 %v2117, 0.5
      %v2166 = vmul.f32 %v2118, 0.5
      %v2167 = vmul.f32 %v2119, 0.5
      %v2168 = vmul.f32 %v2120, 0.5
      %v2169 = vmul.f32 %v2121, 0.5
      %v2170 = vmul.f32 %v2122, 0.5
      %v2171 = vmul.f32 %v2123, 0.5
      %v2172 = vmul.f32 %v2124, 0.5
      %v2173 = vmul.f32 %v2125, 0.5
      %v2174 = vmul.f32 %v2126, 0.5
      %v2175 = vmul.f32 %v2127, 0.5
      %v2176 = vmul.f32 %v2128, 0.5
      %v2177 = vmul.f32 %v2129, 0.5
      %v2178 = vmul.f32 %v2130, 0.5
      %v2179 = vmul.f32 %v2131, 0.5
      %v2180 = vmul.f32 %v2132, 0.5
      %v2181 = vmul.f32 %v2133, 0.5
      %v2182 = vmul.f32 %v2134, 0.5
      %v2183 = vmul.f32 %v2135, 0.5
      %v2184 = vmul.f32 %v2136, 0.5
      %v2185 = vmul.f32 %v2137, 0.5
      %v2186 = vmul.f32 %v2138, 0.5
      %v2187 = vmul.f32 %v2139, 0.5
      %v2188 = vmul.f32 %v2140, 0.5
      %v2189 = vmul.f32 %v2141, 0.5
      %v2190 = vmul.f32 %v2142, 0.5
      %v2191 = vmul.f32 %v2143, 0.5
      %v2192 = vmul.f32 %v2144, 0.5
      %v2193 = vmul.f32 %v2145, 0.5
      %v2194 = vmul.f32 %v2146, 0.5
      %v2195 = vmul.f32 %v2147, 0.5
      %v2196 = vmul.f32 %v2148, 0.5
      %v2197 = vmul.f32 %v2149, 0.5
      %v2198 = vmul.f32 %v2150, 0.5
      %v2199 = vmul.f32 %v2151, 0.5
      %v2200 = vmul.f32 %v2152, 0.5
      %v2201 = vmul.f32 %v2153, 0.5
      %v2202 = vmul.f32 %v2154, 0.5
      %v2203 = vmul.f32 %v2155, 0.5
      %v2204 = vmul.f32 %v2156, 0.5
      %v2205 = vmul.f32 %v2157, 0.5
      %v2206 = vmul.f32 %v2158, 0.5
      %v2207 = vmul.f32 %v2159, 0.5
      %v2208 = vmul.f32 %v2160, 0.5
      %v2209 = vmul.f32 %v2161, 0.5
      %v2210 = vmul.f32 %v2162, 0.5
      %v2211 = vmul.f32 %v2163, 0.5
      %v2212 = vmul.f32 %v2116, 0.044715
      %v2213 = vmul.f32 %v2117, 0.044715
      %v2214 = vmul.f32 %v2118, 0.044715
      %v2215 = vmul.f32 %v2119, 0.044715
      %v2216 = vmul.f32 %v2120, 0.044715
      %v2217 = vmul.f32 %v2121, 0.044715
      %v2218 = vmul.f32 %v2122, 0.044715
      %v2219 = vmul.f32 %v2123, 0.044715
      %v2220 = vmul.f32 %v2124, 0.044715
      %v2221 = vmul.f32 %v2125, 0.044715
      %v2222 = vmul.f32 %v2126, 0.044715
      %v2223 = vmul.f32 %v2127, 0.044715
      %v2224 = vmul.f32 %v2128, 0.044715
      %v2225 = vmul.f32 %v2129, 0.044715
      %v2226 = vmul.f32 %v2130, 0.044715
      %v2227 = vmul.f32 %v2131, 0.044715
      %v2228 = vmul.f32 %v2132, 0.044715
      %v2229 = vmul.f32 %v2133, 0.044715
      %v2230 = vmul.f32 %v2134, 0.044715
      %v2231 = vmul.f32 %v2135, 0.044715
      %v2232 = vmul.f32 %v2136, 0.044715
      %v2233 = vmul.f32 %v2137, 0.044715
      %v2234 = vmul.f32 %v2138, 0.044715
      %v2235 = vmul.f32 %v2139, 0.044715
      %v2236 = vmul.f32 %v2140, 0.044715
      %v2237 = vmul.f32 %v2141, 0.044715
      %v2238 = vmul.f32 %v2142, 0.044715
      %v2239 = vmul.f32 %v2143, 0.044715
      %v2240 = vmul.f32 %v2144, 0.044715
      %v2241 = vmul.f32 %v2145, 0.044715
      %v2242 = vmul.f32 %v2146, 0.044715
      %v2243 = vmul.f32 %v2147, 0.044715
      %v2244 = vmul.f32 %v2148, 0.044715
      %v2245 = vmul.f32 %v2149, 0.044715
      %v2246 = vmul.f32 %v2150, 0.044715
      %v2247 = vmul.f32 %v2151, 0.044715
      %v2248 = vmul.f32 %v2152, 0.044715
      %v2249 = vmul.f32 %v2153, 0.044715
      %v2250 = vmul.f32 %v2154, 0.044715
      %v2251 = vmul.f32 %v2155, 0.044715
      %v2252 = vmul.f32 %v2156, 0.044715
      %v2253 = vmul.f32 %v2157, 0.044715
      %v2254 = vmul.f32 %v2158, 0.044715
      %v2255 = vmul.f32 %v2159, 0.044715
      %v2256 = vmul.f32 %v2160, 0.044715
      %v2257 = vmul.f32 %v2161, 0.044715
      %v2258 = vmul.f32 %v2162, 0.044715
      %v2259 = vmul.f32 %v2163, 0.044715
      %v2260 = vmul.f32 %v2212, %v2116
      %v2261 = vmul.f32 %v2213, %v2117
      %v2262 = vmul.f32 %v2214, %v2118
      %v2263 = vmul.f32 %v2215, %v2119
      %v2264 = vmul.f32 %v2216, %v2120
      %v2265 = vmul.f32 %v2217, %v2121
      %v2266 = vmul.f32 %v2218, %v2122
      %v2267 = vmul.f32 %v2219, %v2123
      %v2268 = vmul.f32 %v2220, %v2124
      %v2269 = vmul.f32 %v2221, %v2125
      %v2270 = vmul.f32 %v2222, %v2126
      %v2271 = vmul.f32 %v2223, %v2127
      %v2272 = vmul.f32 %v2224, %v2128
      %v2273 = vmul.f32 %v2225, %v2129
      %v2274 = vmul.f32 %v2226, %v2130
      %v2275 = vmul.f32 %v2227, %v2131
      %v2276 = vmul.f32 %v2228, %v2132
      %v2277 = vmul.f32 %v2229, %v2133
      %v2278 = vmul.f32 %v2230, %v2134
      %v2279 = vmul.f32 %v2231, %v2135
      %v2280 = vmul.f32 %v2232, %v2136
      %v2281 = vmul.f32 %v2233, %v2137
      %v2282 = vmul.f32 %v2234, %v2138
      %v2283 = vmul.f32 %v2235, %v2139
      %v2284 = vmul.f32 %v2236, %v2140
      %v2285 = vmul.f32 %v2237, %v2141
      %v2286 = vmul.f32 %v2238, %v2142
      %v2287 = vmul.f32 %v2239, %v2143
      %v2288 = vmul.f32 %v2240, %v2144
      %v2289 = vmul.f32 %v2241, %v2145
      %v2290 = vmul.f32 %v2242, %v2146
      %v2291 = vmul.f32 %v2243, %v2147
      %v2292 = vmul.f32 %v2244, %v2148
      %v2293 = vmul.f32 %v2245, %v2149
      %v2294 = vmul.f32 %v2246, %v2150
      %v2295 = vmul.f32 %v2247, %v2151
      %v2296 = vmul.f32 %v2248, %v2152
      %v2297 = vmul.f32 %v2249, %v2153
      %v2298 = vmul.f32 %v2250, %v2154
      %v2299 = vmul.f32 %v2251, %v2155
      %v2300 = vmul.f32 %v2252, %v2156
      %v2301 = vmul.f32 %v2253, %v2157
      %v2302 = vmul.f32 %v2254, %v2158
      %v2303 = vmul.f32 %v2255, %v2159
      %v2304 = vmul.f32 %v2256, %v2160
      %v2305 = vmul.f32 %v2257, %v2161
      %v2306 = vmul.f32 %v2258, %v2162
      %v2307 = vmul.f32 %v2259, %v2163
      %v2308 = vmul.f32 %v2260, %v2116
      %v2309 = vmul.f32 %v2261, %v2117
      %v2310 = vmul.f32 %v2262, %v2118
      %v2311 = vmul.f32 %v2263, %v2119
      %v2312 = vmul.f32 %v2264, %v2120
      %v2313 = vmul.f32 %v2265, %v2121
      %v2314 = vmul.f32 %v2266, %v2122
      %v2315 = vmul.f32 %v2267, %v2123
      %v2316 = vmul.f32 %v2268, %v2124
      %v2317 = vmul.f32 %v2269, %v2125
      %v2318 = vmul.f32 %v2270, %v2126
      %v2319 = vmul.f32 %v2271, %v2127
      %v2320 = vmul.f32 %v2272, %v2128
      %v2321 = vmul.f32 %v2273, %v2129
      %v2322 = vmul.f32 %v2274, %v2130
      %v2323 = vmul.f32 %v2275, %v2131
      %v2324 = vmul.f32 %v2276, %v2132
      %v2325 = vmul.f32 %v2277, %v2133
      %v2326 = vmul.f32 %v2278, %v2134
      %v2327 = vmul.f32 %v2279, %v2135
      %v2328 = vmul.f32 %v2280, %v2136
      %v2329 = vmul.f32 %v2281, %v2137
      %v2330 = vmul.f32 %v2282, %v2138
      %v2331 = vmul.f32 %v2283, %v2139
      %v2332 = vmul.f32 %v2284, %v2140
      %v2333 = vmul.f32 %v2285, %v2141
      %v2334 = vmul.f32 %v2286, %v2142
      %v2335 = vmul.f32 %v2287, %v2143
      %v2336 = vmul.f32 %v2288, %v2144
      %v2337 = vmul.f32 %v2289, %v2145
      %v2338 = vmul.f32 %v2290, %v2146
      %v2339 = vmul.f32 %v2291, %v2147
      %v2340 = vmul.f32 %v2292, %v2148
      %v2341 = vmul.f32 %v2293, %v2149
      %v2342 = vmul.f32 %v2294, %v2150
      %v2343 = vmul.f32 %v2295, %v2151
      %v2344 = vmul.f32 %v2296, %v2152
      %v2345 = vmul.f32 %v2297, %v2153
      %v2346 = vmul.f32 %v2298, %v2154
      %v2347 = vmul.f32 %v2299, %v2155
      %v2348 = vmul.f32 %v2300, %v2156
      %v2349 = vmul.f32 %v2301, %v2157
      %v2350 = vmul.f32 %v2302, %v2158
      %v2351 = vmul.f32 %v2303, %v2159
      %v2352 = vmul.f32 %v2304, %v2160
      %v2353 = vmul.f32 %v2305, %v2161
      %v2354 = vmul.f32 %v2306, %v2162
      %v2355 = vmul.f32 %v2307, %v2163
      %v2356 = vadd.f32 %v2116, %v2308
      %v2357 = vadd.f32 %v2117, %v2309
      %v2358 = vadd.f32 %v2118, %v2310
      %v2359 = vadd.f32 %v2119, %v2311
      %v2360 = vadd.f32 %v2120, %v2312
      %v2361 = vadd.f32 %v2121, %v2313
      %v2362 = vadd.f32 %v2122, %v2314
      %v2363 = vadd.f32 %v2123, %v2315
      %v2364 = vadd.f32 %v2124, %v2316
      %v2365 = vadd.f32 %v2125, %v2317
      %v2366 = vadd.f32 %v2126, %v2318
      %v2367 = vadd.f32 %v2127, %v2319
      %v2368 = vadd.f32 %v2128, %v2320
      %v2369 = vadd.f32 %v2129, %v2321
      %v2370 = vadd.f32 %v2130, %v2322
      %v2371 = vadd.f32 %v2131, %v2323
      %v2372 = vadd.f32 %v2132, %v2324
      %v2373 = vadd.f32 %v2133, %v2325
      %v2374 = vadd.f32 %v2134, %v2326
      %v2375 = vadd.f32 %v2135, %v2327
      %v2376 = vadd.f32 %v2136, %v2328
      %v2377 = vadd.f32 %v2137, %v2329
      %v2378 = vadd.f32 %v2138, %v2330
      %v2379 = vadd.f32 %v2139, %v2331
      %v2380 = vadd.f32 %v2140, %v2332
      %v2381 = vadd.f32 %v2141, %v2333
      %v2382 = vadd.f32 %v2142, %v2334
      %v2383 = vadd.f32 %v2143, %v2335
      %v2384 = vadd.f32 %v2144, %v2336
      %v2385 = vadd.f32 %v2145, %v2337
      %v2386 = vadd.f32 %v2146, %v2338
      %v2387 = vadd.f32 %v2147, %v2339
      %v2388 = vadd.f32 %v2148, %v2340
      %v2389 = vadd.f32 %v2149, %v2341
      %v2390 = vadd.f32 %v2150, %v2342
      %v2391 = vadd.f32 %v2151, %v2343
      %v2392 = vadd.f32 %v2152, %v2344
      %v2393 = vadd.f32 %v2153, %v2345
      %v2394 = vadd.f32 %v2154, %v2346
      %v2395 = vadd.f32 %v2155, %v2347
      %v2396 = vadd.f32 %v2156, %v2348
      %v2397 = vadd.f32 %v2157, %v2349
      %v2398 = vadd.f32 %v2158, %v2350
      %v2399 = vadd.f32 %v2159, %v2351
      %v2400 = vadd.f32 %v2160, %v2352
      %v2401 = vadd.f32 %v2161, %v2353
      %v2402 = vadd.f32 %v2162, %v2354
      %v2403 = vadd.f32 %v2163, %v2355
      %v2404 = vmul.f32 %v2356, 0.7978846
      %v2405 = vmul.f32 %v2357, 0.7978846
      %v2406 = vmul.f32 %v2358, 0.7978846
      %v2407 = vmul.f32 %v2359, 0.7978846
      %v2408 = vmul.f32 %v2360, 0.7978846
      %v2409 = vmul.f32 %v2361, 0.7978846
      %v2410 = vmul.f32 %v2362, 0.7978846
      %v2411 = vmul.f32 %v2363, 0.7978846
      %v2412 = vmul.f32 %v2364, 0.7978846
      %v2413 = vmul.f32 %v2365, 0.7978846
      %v2414 = vmul.f32 %v2366, 0.7978846
      %v2415 = vmul.f32 %v2367, 0.7978846
      %v2416 = vmul.f32 %v2368, 0.7978846
      %v2417 = vmul.f32 %v2369, 0.7978846
      %v2418 = vmul.f32 %v2370, 0.7978846
      %v2419 = vmul.f32 %v2371, 0.7978846
      %v2420 = vmul.f32 %v2372, 0.7978846
      %v2421 = vmul.f32 %v2373, 0.7978846
      %v2422 = vmul.f32 %v2374, 0.7978846
      %v2423 = vmul.f32 %v2375, 0.7978846
      %v2424 = vmul.f32 %v2376, 0.7978846
      %v2425 = vmul.f32 %v2377, 0.7978846
      %v2426 = vmul.f32 %v2378, 0.7978846
      %v2427 = vmul.f32 %v2379, 0.7978846
      %v2428 = vmul.f32 %v2380, 0.7978846
      %v2429 = vmul.f32 %v2381, 0.7978846
      %v2430 = vmul.f32 %v2382, 0.7978846
      %v2431 = vmul.f32 %v2383, 0.7978846
      %v2432 = vmul.f32 %v2384, 0.7978846
      %v2433 = vmul.f32 %v2385, 0.7978846
      %v2434 = vmul.f32 %v2386, 0.7978846
      %v2435 = vmul.f32 %v2387, 0.7978846
      %v2436 = vmul.f32 %v2388, 0.7978846
      %v2437 = vmul.f32 %v2389, 0.7978846
      %v2438 = vmul.f32 %v2390, 0.7978846
      %v2439 = vmul.f32 %v2391, 0.7978846
      %v2440 = vmul.f32 %v2392, 0.7978846
      %v2441 = vmul.f32 %v2393, 0.7978846
      %v2442 = vmul.f32 %v2394, 0.7978846
      %v2443 = vmul.f32 %v2395, 0.7978846
      %v2444 = vmul.f32 %v2396, 0.7978846
      %v2445 = vmul.f32 %v2397, 0.7978846
      %v2446 = vmul.f32 %v2398, 0.7978846
      %v2447 = vmul.f32 %v2399, 0.7978846
      %v2448 = vmul.f32 %v2400, 0.7978846
      %v2449 = vmul.f32 %v2401, 0.7978846
      %v2450 = vmul.f32 %v2402, 0.7978846
      %v2451 = vmul.f32 %v2403, 0.7978846
      %v2452 = vtanh.pop %v2404
      %v2453 = vtanh.pop %v2405
      %v2454 = vtanh.pop %v2406
      %v2455 = vtanh.pop %v2407
      %v2456 = vtanh.pop %v2408
      %v2457 = vtanh.pop %v2409
      %v2458 = vtanh.pop %v2410
      %v2459 = vtanh.pop %v2411
      %v2460 = vtanh.pop %v2412
      %v2461 = vtanh.pop %v2413
      %v2462 = vtanh.pop %v2414
      %v2463 = vtanh.pop %v2415
      %v2464 = vtanh.pop %v2416
      %v2465 = vtanh.pop %v2417
      %v2466 = vtanh.pop %v2418
      %v2467 = vtanh.pop %v2419
      %v2468 = vtanh.pop %v2420
      %v2469 = vtanh.pop %v2421
      %v2470 = vtanh.pop %v2422
      %v2471 = vtanh.pop %v2423
      %v2472 = vtanh.pop %v2424
      %v2473 = vtanh.pop %v2425
      %v2474 = vtanh.pop %v2426
      %v2475 = vtanh.pop %v2427
      %v2476 = vtanh.pop %v2428
      %v2477 = vtanh.pop %v2429
      %v2478 = vtanh.pop %v2430
      %v2479 = vtanh.pop %v2431
      %v2480 = vtanh.pop %v2432
      %v2481 = vtanh.pop %v2433
      %v2482 = vtanh.pop %v2434
      %v2483 = vtanh.pop %v2435
      %v2484 = vtanh.pop %v2436
      %v2485 = vtanh.pop %v2437
      %v2486 = vtanh.pop %v2438
      %v2487 = vtanh.pop %v2439
      %v2488 = vtanh.pop %v2440
      %v2489 = vtanh.pop %v2441
      %v2490 = vtanh.pop %v2442
      %v2491 = vtanh.pop %v2443
      %v2492 = vtanh.pop %v2444
      %v2493 = vtanh.pop %v2445
      %v2494 = vtanh.pop %v2446
      %v2495 = vtanh.pop %v2447
      %v2496 = vtanh.pop %v2448
      %v2497 = vtanh.pop %v2449
      %v2498 = vtanh.pop %v2450
      %v2499 = vtanh.pop %v2451
      %v2500 = vadd.f32 %v2452, 1.0
      %v2501 = vadd.f32 %v2453, 1.0
      %v2502 = vadd.f32 %v2454, 1.0
      %v2503 = vadd.f32 %v2455, 1.0
      %v2504 = vadd.f32 %v2456, 1.0
      %v2505 = vadd.f32 %v2457, 1.0
      %v2506 = vadd.f32 %v2458, 1.0
      %v2507 = vadd.f32 %v2459, 1.0
      %v2508 = vadd.f32 %v2460, 1.0
      %v2509 = vadd.f32 %v2461, 1.0
      %v2510 = vadd.f32 %v2462, 1.0
      %v2511 = vadd.f32 %v2463, 1.0
      %v2512 = vadd.f32 %v2464, 1.0
      %v2513 = vadd.f32 %v2465, 1.0
      %v2514 = vadd.f32 %v2466, 1.0
      %v2515 = vadd.f32 %v2467, 1.0
      %v2516 = vadd.f32 %v2468, 1.0
      %v2517 = vadd.f32 %v2469, 1.0
      %v2518 = vadd.f32 %v2470, 1.0
      %v2519 = vadd.f32 %v2471, 1.0
      %v2520 = vadd.f32 %v2472, 1.0
      %v2521 = vadd.f32 %v2473, 1.0
      %v2522 = vadd.f32 %v2474, 1.0
      %v2523 = vadd.f32 %v2475, 1.0
      %v2524 = vadd.f32 %v2476, 1.0
      %v2525 = vadd.f32 %v2477, 1.0
      %v2526 = vadd.f32 %v2478, 1.0
      %v2527 = vadd.f32 %v2479, 1.0
      %v2528 = vadd.f32 %v2480, 1.0
      %v2529 = vadd.f32 %v2481, 1.0
      %v2530 = vadd.f32 %v2482, 1.0
      %v2531 = vadd.f32 %v2483, 1.0
      %v2532 = vadd.f32 %v2484, 1.0
      %v2533 = vadd.f32 %v2485, 1.0
      %v2534 = vadd.f32 %v2486, 1.0
      %v2535 = vadd.f32 %v2487, 1.0
      %v2536 = vadd.f32 %v2488, 1.0
      %v2537 = vadd.f32 %v2489, 1.0
      %v2538 = vadd.f32 %v2490, 1.0
      %v2539 = vadd.f32 %v2491, 1.0
      %v2540 = vadd.f32 %v2492, 1.0
      %v2541 = vadd.f32 %v2493, 1.0
      %v2542 = vadd.f32 %v2494, 1.0
      %v2543 = vadd.f32 %v2495, 1.0
      %v2544 = vadd.f32 %v2496, 1.0
      %v2545 = vadd.f32 %v2497, 1.0
      %v2546 = vadd.f32 %v2498, 1.0
      %v2547 = vadd.f32 %v2499, 1.0
      %v2548 = vmul.f32 %v2164, %v2500
      %v2549 = vmul.f32 %v2165, %v2501
      %v2550 = vmul.f32 %v2166, %v2502
      %v2551 = vmul.f32 %v2167, %v2503
      %v2552 = vmul.f32 %v2168, %v2504
      %v2553 = vmul.f32 %v2169, %v2505
      %v2554 = vmul.f32 %v2170, %v2506
      %v2555 = vmul.f32 %v2171, %v2507
      %v2556 = vmul.f32 %v2172, %v2508
      %v2557 = vmul.f32 %v2173, %v2509
      %v2558 = vmul.f32 %v2174, %v2510
      %v2559 = vmul.f32 %v2175, %v2511
      %v2560 = vmul.f32 %v2176, %v2512
      %v2561 = vmul.f32 %v2177, %v2513
      %v2562 = vmul.f32 %v2178, %v2514
      %v2563 = vmul.f32 %v2179, %v2515
      %v2564 = vmul.f32 %v2180, %v2516
      %v2565 = vmul.f32 %v2181, %v2517
      %v2566 = vmul.f32 %v2182, %v2518
      %v2567 = vmul.f32 %v2183, %v2519
      %v2568 = vmul.f32 %v2184, %v2520
      %v2569 = vmul.f32 %v2185, %v2521
      %v2570 = vmul.f32 %v2186, %v2522
      %v2571 = vmul.f32 %v2187, %v2523
      %v2572 = vmul.f32 %v2188, %v2524
      %v2573 = vmul.f32 %v2189, %v2525
      %v2574 = vmul.f32 %v2190, %v2526
      %v2575 = vmul.f32 %v2191, %v2527
      %v2576 = vmul.f32 %v2192, %v2528
      %v2577 = vmul.f32 %v2193, %v2529
      %v2578 = vmul.f32 %v2194, %v2530
      %v2579 = vmul.f32 %v2195, %v2531
      %v2580 = vmul.f32 %v2196, %v2532
      %v2581 = vmul.f32 %v2197, %v2533
      %v2582 = vmul.f32 %v2198, %v2534
      %v2583 = vmul.f32 %v2199, %v2535
      %v2584 = vmul.f32 %v2200, %v2536
      %v2585 = vmul.f32 %v2201, %v2537
      %v2586 = vmul.f32 %v2202, %v2538
      %v2587 = vmul.f32 %v2203, %v2539
      %v2588 = vmul.f32 %v2204, %v2540
      %v2589 = vmul.f32 %v2205, %v2541
      %v2590 = vmul.f32 %v2206, %v2542
      %v2591 = vmul.f32 %v2207, %v2543
      %v2592 = vmul.f32 %v2208, %v2544
      %v2593 = vmul.f32 %v2209, %v2545
      %v2594 = vmul.f32 %v2210, %v2546
      %v2595 = vmul.f32 %v2211, %v2547
      %v2596 = vld [vmem:[%s3] sm:$0x1]
      %v2598 = vlaneseq
      %v2599 = vshrl.u32 %v2598, 7
      %v2600 = vsub.s32 0, %v2599
      %v2601 = vrot.slane %v2596, %v2600
      %v2603 = vmul.f32 %v2548, %v2601
      %v2604 = vmul.f32 %v2549, %v2601
      %v2605 = vmul.f32 %v2550, %v2601
      %v2606 = vmul.f32 %v2551, %v2601
      %v2607 = vmul.f32 %v2552, %v2601
      %v2608 = vmul.f32 %v2553, %v2601
      %v2609 = vmul.f32 %v2554, %v2601
      %v2610 = vmul.f32 %v2555, %v2601
      %v2611 = vmul.f32 %v2556, %v2601
      %v2612 = vmul.f32 %v2557, %v2601
      %v2613 = vmul.f32 %v2558, %v2601
      %v2614 = vmul.f32 %v2559, %v2601
      %v2615 = vmul.f32 %v2560, %v2601
      %v2616 = vmul.f32 %v2561, %v2601
      %v2617 = vmul.f32 %v2562, %v2601
      %v2618 = vmul.f32 %v2563, %v2601
      %v2619 = vmul.f32 %v2564, %v2601
      %v2620 = vmul.f32 %v2565, %v2601
      %v2621 = vmul.f32 %v2566, %v2601
      %v2622 = vmul.f32 %v2567, %v2601
      %v2623 = vmul.f32 %v2568, %v2601
      %v2624 = vmul.f32 %v2569, %v2601
      %v2625 = vmul.f32 %v2570, %v2601
      %v2626 = vmul.f32 %v2571, %v2601
      %v2627 = vmul.f32 %v2572, %v2601
      %v2628 = vmul.f32 %v2573, %v2601
      %v2629 = vmul.f32 %v2574, %v2601
      %v2630 = vmul.f32 %v2575, %v2601
      %v2631 = vmul.f32 %v2576, %v2601
      %v2632 = vmul.f32 %v2577, %v2601
      %v2633 = vmul.f32 %v2578, %v2601
      %v2634 = vmul.f32 %v2579, %v2601
      %v2635 = vmul.f32 %v2580, %v2601
      %v2636 = vmul.f32 %v2581, %v2601
      %v2637 = vmul.f32 %v2582, %v2601
      %v2638 = vmul.f32 %v2583, %v2601
      %v2639 = vmul.f32 %v2584, %v2601
      %v2640 = vmul.f32 %v2585, %v2601
      %v2641 = vmul.f32 %v2586, %v2601
      %v2642 = vmul.f32 %v2587, %v2601
      %v2643 = vmul.f32 %v2588, %v2601
      %v2644 = vmul.f32 %v2589, %v2601
      %v2645 = vmul.f32 %v2590, %v2601
      %v2646 = vmul.f32 %v2591, %v2601
      %v2647 = vmul.f32 %v2592, %v2601
      %v2648 = vmul.f32 %v2593, %v2601
      %v2649 = vmul.f32 %v2594, %v2601
      %v2650 = vmul.f32 %v2595, %v2601
      %v2651 = vld [vmem:[%s4] sm:$0x1]
      %v2653 = vlaneseq
      %v2654 = vshrl.u32 %v2653, 7
      %v2655 = vsub.s32 0, %v2654
      %v2656 = vrot.slane %v2651, %v2655
      %v2658 = vadd.f32 %v2603, %v2656
      %v2659 = vadd.f32 %v2604, %v2656
      %v2660 = vadd.f32 %v2605, %v2656
      %v2661 = vadd.f32 %v2606, %v2656
      %v2662 = vadd.f32 %v2607, %v2656
      %v2663 = vadd.f32 %v2608, %v2656
      %v2664 = vadd.f32 %v2609, %v2656
      %v2665 = vadd.f32 %v2610, %v2656
      %v2666 = vadd.f32 %v2611, %v2656
      %v2667 = vadd.f32 %v2612, %v2656
      %v2668 = vadd.f32 %v2613, %v2656
      %v2669 = vadd.f32 %v2614, %v2656
      %v2670 = vadd.f32 %v2615, %v2656
      %v2671 = vadd.f32 %v2616, %v2656
      %v2672 = vadd.f32 %v2617, %v2656
      %v2673 = vadd.f32 %v2618, %v2656
      %v2674 = vadd.f32 %v2619, %v2656
      %v2675 = vadd.f32 %v2620, %v2656
      %v2676 = vadd.f32 %v2621, %v2656
      %v2677 = vadd.f32 %v2622, %v2656
      %v2678 = vadd.f32 %v2623, %v2656
      %v2679 = vadd.f32 %v2624, %v2656
      %v2680 = vadd.f32 %v2625, %v2656
      %v2681 = vadd.f32 %v2626, %v2656
      %v2682 = vadd.f32 %v2627, %v2656
      %v2683 = vadd.f32 %v2628, %v2656
      %v2684 = vadd.f32 %v2629, %v2656
      %v2685 = vadd.f32 %v2630, %v2656
      %v2686 = vadd.f32 %v2631, %v2656
      %v2687 = vadd.f32 %v2632, %v2656
      %v2688 = vadd.f32 %v2633, %v2656
      %v2689 = vadd.f32 %v2634, %v2656
      %v2690 = vadd.f32 %v2635, %v2656
      %v2691 = vadd.f32 %v2636, %v2656
      %v2692 = vadd.f32 %v2637, %v2656
      %v2693 = vadd.f32 %v2638, %v2656
      %v2694 = vadd.f32 %v2639, %v2656
      %v2695 = vadd.f32 %v2640, %v2656
      %v2696 = vadd.f32 %v2641, %v2656
      %v2697 = vadd.f32 %v2642, %v2656
      %v2698 = vadd.f32 %v2643, %v2656
      %v2699 = vadd.f32 %v2644, %v2656
      %v2700 = vadd.f32 %v2645, %v2656
      %v2701 = vadd.f32 %v2646, %v2656
      %v2702 = vadd.f32 %v2647, %v2656
      %v2703 = vadd.f32 %v2648, %v2656
      %v2704 = vadd.f32 %v2649, %v2656
      %v2705 = vadd.f32 %v2650, %v2656
      %v2706 = vadd.f32 %v337, %v2658
      %v2707 = vadd.f32 %v338, %v2659
      %v2708 = vadd.f32 %v339, %v2660
      %v2709 = vadd.f32 %v340, %v2661
      %v2710 = vadd.f32 %v341, %v2662
      %v2711 = vadd.f32 %v342, %v2663
      %v2712 = vadd.f32 %v343, %v2664
      %v2713 = vadd.f32 %v344, %v2665
      %v2714 = vadd.f32 %v345, %v2666
      %v2715 = vadd.f32 %v346, %v2667
      %v2716 = vadd.f32 %v347, %v2668
      %v2717 = vadd.f32 %v348, %v2669
      %v2718 = vadd.f32 %v349, %v2670
      %v2719 = vadd.f32 %v350, %v2671
      %v2720 = vadd.f32 %v351, %v2672
      %v2721 = vadd.f32 %v352, %v2673
      %v2722 = vadd.f32 %v353, %v2674
      %v2723 = vadd.f32 %v354, %v2675
      %v2724 = vadd.f32 %v355, %v2676
      %v2725 = vadd.f32 %v356, %v2677
      %v2726 = vadd.f32 %v357, %v2678
      %v2727 = vadd.f32 %v358, %v2679
      %v2728 = vadd.f32 %v359, %v2680
      %v2729 = vadd.f32 %v360, %v2681
      %v2730 = vadd.f32 %v361, %v2682
      %v2731 = vadd.f32 %v362, %v2683
      %v2732 = vadd.f32 %v363, %v2684
      %v2733 = vadd.f32 %v364, %v2685
      %v2734 = vadd.f32 %v365, %v2686
      %v2735 = vadd.f32 %v366, %v2687
      %v2736 = vadd.f32 %v367, %v2688
      %v2737 = vadd.f32 %v368, %v2689
      %v2738 = vadd.f32 %v369, %v2690
      %v2739 = vadd.f32 %v370, %v2691
      %v2740 = vadd.f32 %v371, %v2692
      %v2741 = vadd.f32 %v372, %v2693
      %v2742 = vadd.f32 %v373, %v2694
      %v2743 = vadd.f32 %v374, %v2695
      %v2744 = vadd.f32 %v375, %v2696
      %v2745 = vadd.f32 %v376, %v2697
      %v2746 = vadd.f32 %v377, %v2698
      %v2747 = vadd.f32 %v378, %v2699
      %v2748 = vadd.f32 %v379, %v2700
      %v2749 = vadd.f32 %v380, %v2701
      %v2750 = vadd.f32 %v381, %v2702
      %v2751 = vadd.f32 %v382, %v2703
      %v2752 = vadd.f32 %v383, %v2704
      %v2753 = vadd.f32 %v384, %v2705
      %v2802 = vrot.slane %v2706, 1
      %v2803 = vrot.slane %v2707, 1
      %v2804 = vsel %vm856, %v2802, %v2803
      %v2805 = vrot.slane %v2708, 1
      %v2806 = vsel %vm856, %v2803, %v2805
      %v2807 = vrot.slane %v2709, 1
      %v2808 = vrot.slane %v2710, 1
      %v2809 = vsel %vm856, %v2807, %v2808
      %v2810 = vrot.slane %v2711, 1
      %v2811 = vsel %vm856, %v2808, %v2810
      %v2812 = vrot.slane %v2712, 1
      %v2813 = vrot.slane %v2713, 1
      %v2814 = vsel %vm856, %v2812, %v2813
      %v2815 = vrot.slane %v2714, 1
      %v2816 = vsel %vm856, %v2813, %v2815
      %v2817 = vrot.slane %v2715, 1
      %v2818 = vrot.slane %v2716, 1
      %v2819 = vsel %vm856, %v2817, %v2818
      %v2820 = vrot.slane %v2717, 1
      %v2821 = vsel %vm856, %v2818, %v2820
      %v2822 = vrot.slane %v2718, 1
      %v2823 = vrot.slane %v2719, 1
      %v2824 = vsel %vm856, %v2822, %v2823
      %v2825 = vrot.slane %v2720, 1
      %v2826 = vsel %vm856, %v2823, %v2825
      %v2827 = vrot.slane %v2721, 1
      %v2828 = vrot.slane %v2722, 1
      %v2829 = vsel %vm856, %v2827, %v2828
      %v2830 = vrot.slane %v2723, 1
      %v2831 = vsel %vm856, %v2828, %v2830
      %v2832 = vrot.slane %v2724, 1
      %v2833 = vrot.slane %v2725, 1
      %v2834 = vsel %vm856, %v2832, %v2833
      %v2835 = vrot.slane %v2726, 1
      %v2836 = vsel %vm856, %v2833, %v2835
      %v2837 = vrot.slane %v2727, 1
      %v2838 = vrot.slane %v2728, 1
      %v2839 = vsel %vm856, %v2837, %v2838
      %v2840 = vrot.slane %v2729, 1
      %v2841 = vsel %vm856, %v2838, %v2840
      %v2842 = vrot.slane %v2730, 1
      %v2843 = vrot.slane %v2731, 1
      %v2844 = vsel %vm856, %v2842, %v2843
      %v2845 = vrot.slane %v2732, 1
      %v2846 = vsel %vm856, %v2843, %v2845
      %v2847 = vrot.slane %v2733, 1
      %v2848 = vrot.slane %v2734, 1
      %v2849 = vsel %vm856, %v2847, %v2848
      %v2850 = vrot.slane %v2735, 1
      %v2851 = vsel %vm856, %v2848, %v2850
      %v2852 = vrot.slane %v2736, 1
      %v2853 = vrot.slane %v2737, 1
      %v2854 = vsel %vm856, %v2852, %v2853
      %v2855 = vrot.slane %v2738, 1
      %v2856 = vsel %vm856, %v2853, %v2855
      %v2857 = vrot.slane %v2739, 1
      %v2858 = vrot.slane %v2740, 1
      %v2859 = vsel %vm856, %v2857, %v2858
      %v2860 = vrot.slane %v2741, 1
      %v2861 = vsel %vm856, %v2858, %v2860
      %v2862 = vrot.slane %v2742, 1
      %v2863 = vrot.slane %v2743, 1
      %v2864 = vsel %vm856, %v2862, %v2863
      %v2865 = vrot.slane %v2744, 1
      %v2866 = vsel %vm856, %v2863, %v2865
      %v2867 = vrot.slane %v2745, 1
      %v2868 = vrot.slane %v2746, 1
      %v2869 = vsel %vm856, %v2867, %v2868
      %v2870 = vrot.slane %v2747, 1
      %v2871 = vsel %vm856, %v2868, %v2870
      %v2872 = vrot.slane %v2748, 1
      %v2873 = vrot.slane %v2749, 1
      %v2874 = vsel %vm856, %v2872, %v2873
      %v2875 = vrot.slane %v2750, 1
      %v2876 = vsel %vm856, %v2873, %v2875
      %v2877 = vrot.slane %v2751, 1
      %v2878 = vrot.slane %v2752, 1
      %v2879 = vsel %vm856, %v2877, %v2878
      %v2880 = vrot.slane %v2753, 1
      %v2881 = vsel %vm856, %v2878, %v2880
      %v2914 = vpack.c.bf16 %v2806, %v2804
      %v2915 = vpack.c.bf16 %v2811, %v2809
      %v2916 = vpack.c.bf16 %v2816, %v2814
      %v2917 = vpack.c.bf16 %v2821, %v2819
      %v2918 = vpack.c.bf16 %v2826, %v2824
      %v2919 = vpack.c.bf16 %v2831, %v2829
      %v2920 = vpack.c.bf16 %v2836, %v2834
      %v2921 = vpack.c.bf16 %v2841, %v2839
      %v2922 = vpack.c.bf16 %v2846, %v2844
      %v2923 = vpack.c.bf16 %v2851, %v2849
      %v2924 = vpack.c.bf16 %v2856, %v2854
      %v2925 = vpack.c.bf16 %v2861, %v2859
      %v2926 = vpack.c.bf16 %v2866, %v2864
      %v2927 = vpack.c.bf16 %v2871, %v2869
      %v2928 = vpack.c.bf16 %v2876, %v2874
      %v2929 = vpack.c.bf16 %v2881, %v2879
      %v2978 = vrot.slane %v337, 1
      %v2979 = vrot.slane %v338, 1
      %v2980 = vsel %vm856, %v2978, %v2979
      %v2981 = vrot.slane %v339, 1
      %v2982 = vsel %vm856, %v2979, %v2981
      %v2983 = vrot.slane %v340, 1
      %v2984 = vrot.slane %v341, 1
      %v2985 = vsel %vm856, %v2983, %v2984
      %v2986 = vrot.slane %v342, 1
      %v2987 = vsel %vm856, %v2984, %v2986
      %v2988 = vrot.slane %v343, 1
      %v2989 = vrot.slane %v344, 1
      %v2990 = vsel %vm856, %v2988, %v2989
      %v2991 = vrot.slane %v345, 1
      %v2992 = vsel %vm856, %v2989, %v2991
      %v2993 = vrot.slane %v346, 1
      %v2994 = vrot.slane %v347, 1
      %v2995 = vsel %vm856, %v2993, %v2994
      %v2996 = vrot.slane %v348, 1
      %v2997 = vsel %vm856, %v2994, %v2996
      %v2998 = vrot.slane %v349, 1
      %v2999 = vrot.slane %v350, 1
      %v3000 = vsel %vm856, %v2998, %v2999
      %v3001 = vrot.slane %v351, 1
      %v3002 = vsel %vm856, %v2999, %v3001
      %v3003 = vrot.slane %v352, 1
      %v3004 = vrot.slane %v353, 1
      %v3005 = vsel %vm856, %v3003, %v3004
      %v3006 = vrot.slane %v354, 1
      %v3007 = vsel %vm856, %v3004, %v3006
      %v3008 = vrot.slane %v355, 1
      %v3009 = vrot.slane %v356, 1
      %v3010 = vsel %vm856, %v3008, %v3009
      %v3011 = vrot.slane %v357, 1
      %v3012 = vsel %vm856, %v3009, %v3011
      %v3013 = vrot.slane %v358, 1
      %v3014 = vrot.slane %v359, 1
      %v3015 = vsel %vm856, %v3013, %v3014
      %v3016 = vrot.slane %v360, 1
      %v3017 = vsel %vm856, %v3014, %v3016
      %v3018 = vrot.slane %v361, 1
      %v3019 = vrot.slane %v362, 1
      %v3020 = vsel %vm856, %v3018, %v3019
      %v3021 = vrot.slane %v363, 1
      %v3022 = vsel %vm856, %v3019, %v3021
      %v3023 = vrot.slane %v364, 1
      %v3024 = vrot.slane %v365, 1
      %v3025 = vsel %vm856, %v3023, %v3024
      %v3026 = vrot.slane %v366, 1
      %v3027 = vsel %vm856, %v3024, %v3026
      %v3028 = vrot.slane %v367, 1
      %v3029 = vrot.slane %v368, 1
      %v3030 = vsel %vm856, %v3028, %v3029
      %v3031 = vrot.slane %v369, 1
      %v3032 = vsel %vm856, %v3029, %v3031
      %v3033 = vrot.slane %v370, 1
      %v3034 = vrot.slane %v371, 1
      %v3035 = vsel %vm856, %v3033, %v3034
      %v3036 = vrot.slane %v372, 1
      %v3037 = vsel %vm856, %v3034, %v3036
      %v3038 = vrot.slane %v373, 1
      %v3039 = vrot.slane %v374, 1
      %v3040 = vsel %vm856, %v3038, %v3039
      %v3041 = vrot.slane %v375, 1
      %v3042 = vsel %vm856, %v3039, %v3041
      %v3043 = vrot.slane %v376, 1
      %v3044 = vrot.slane %v377, 1
      %v3045 = vsel %vm856, %v3043, %v3044
      %v3046 = vrot.slane %v378, 1
      %v3047 = vsel %vm856, %v3044, %v3046
      %v3048 = vrot.slane %v379, 1
      %v3049 = vrot.slane %v380, 1
      %v3050 = vsel %vm856, %v3048, %v3049
      %v3051 = vrot.slane %v381, 1
      %v3052 = vsel %vm856, %v3049, %v3051
      %v3053 = vrot.slane %v382, 1
      %v3054 = vrot.slane %v383, 1
      %v3055 = vsel %vm856, %v3053, %v3054
      %v3056 = vrot.slane %v384, 1
      %v3057 = vsel %vm856, %v3054, %v3056
      %v3058 = vld [vmem:[%s5] sm:$0x3]
      %v3059 = vld [vmem:[%s6] sm:$0x1]
      %v3061 = vlaneseq
      %v3062 = vshrl.u32 %v3061, 7
      %v3063 = vsub.s32 0, %v3062
      %v3064 = vrot.slane %v3059, %v3063
      %vm3066 = vcmask 31744
      %v3068 = vsel %vm3066, %v2914, 0
      %v3071 = vsel %vm3066, %v2915, 0
      %v3074 = vsel %vm3066, %v2916, 0
      %v3077 = vsel %vm3066, %v2917, 0
      %v3080 = vsel %vm3066, %v2918, 0
      %v3083 = vsel %vm3066, %v2919, 0
      %v3086 = vsel %vm3066, %v2920, 0
      %v3089 = vsel %vm3066, %v2921, 0
      %v3092 = vsel %vm3066, %v2922, 0
      %v3095 = vsel %vm3066, %v2923, 0
      %v3098 = vsel %vm3066, %v2924, 0
      %v3101 = vsel %vm3066, %v2925, 0
      %v3104 = vsel %vm3066, %v2926, 0
      %v3107 = vsel %vm3066, %v2927, 0
      %v3110 = vsel %vm3066, %v2928, 0
      %v3113 = vsel %vm3066, %v2929, 0
      %vm3115 = vcmask 1041408
      %v3117 = vsel %vm3115, %v3058, 0
      %3119 = vmatprep.subr.bf16.mxu0 0
      %3120 = vmatpush1.bf16.msra.mxu0 %v3117
      %3121 = vmatprep.subr.bf16.mxu0 0
      %3122 = vmatpush1.bf16.msra.mxu0 0
      %3123 = vmatprep.subr.bf16.mxu0 0
      %3124 = vmatpush1.bf16.msra.mxu0 0
      %3125 = vmatprep.subr.bf16.mxu0 0
      %3126 = vmatpush1.bf16.msra.mxu0 0
      %3127 = vmatprep.subr.bf16.mxu0 0
      %3128 = vmatpush1.bf16.msra.mxu0 0
      %3129 = vmatprep.subr.bf16.mxu0 0
      %3130 = vmatpush1.bf16.msra.mxu0 0
      %3131 = vmatprep.subr.bf16.mxu0 0
      %3132 = vmatpush1.bf16.msra.mxu0 0
      %3133 = vmatprep.subr.bf16.mxu0 0
      %3134 = vmatpush1.bf16.msra.mxu0 0
      %3135 = vmatprep.subr.bf16.mxu0 0
      %3136 = vmatpush1.bf16.msra.mxu0 0
      %3137 = vmatprep.subr.bf16.mxu0 0
      %3138 = vmatpush1.bf16.msra.mxu0 0
      %3139 = vmatprep.subr.bf16.mxu0 0
      %3140 = vmatpush1.bf16.msra.mxu0 0
      %3141 = vmatprep.subr.bf16.mxu0 0
      %3142 = vmatpush1.bf16.msra.mxu0 0
      %3143 = vmatprep.subr.bf16.mxu0 0
      %3144 = vmatpush1.bf16.msra.mxu0 0
      %3145 = vmatprep.subr.bf16.mxu0 0
      %3146 = vmatpush1.bf16.msra.mxu0 0
      %3147 = vmatprep.subr.bf16.mxu0 0
      %3148 = vmatpush1.bf16.msra.mxu0 0
      %3149 = vmatprep.subr.bf16.mxu0 0
      %3150 = vmatpush1.bf16.msra.mxu0 0
      %3151 = vmatprep.mubr.bf16.mxu0 0
      %3152 = vmatmul.mubr.bf16.gmra.mrb[0].mxu0 %v3068
      %v3153 = vpop.f32.mrb[0].mxu0
      %v3154 = vadd.f32 %v3064, %v3153
      %v3155 = vpop.f32.mrb[0].mxu0
      %v3156 = vpop.f32.mrb[0].mxu0
      %v3157 = vadd.f32 %v3064, %v3156
      %v3158 = vpop.f32.mrb[0].mxu0
      %3159 = vmatprep.mubr.bf16.mxu0 0
      %3160 = vmatmul.mubr.bf16.gmra.mrb[0].mxu0 %v3071
      %v3161 = vpop.f32.mrb[0].mxu0
      %v3162 = vadd.f32 %v3064, %v3161
      %v3163 = vpop.f32.mrb[0].mxu0
      %v3164 = vpop.f32.mrb[0].mxu0
      %v3165 = vadd.f32 %v3064, %v3164
      %v3166 = vpop.f32.mrb[0].mxu0
      %3167 = vmatprep.mubr.bf16.mxu0 0
      %3168 = vmatmul.mubr.bf16.gmra.mrb[0].mxu0 %v3074
      %v3169 = vpop.f32.mrb[0].mxu0
      %v3170 = vadd.f32 %v3064, %v3169
      %v3171 = vpop.f32.mrb[0].mxu0
      %v3172 = vpop.f32.mrb[0].mxu0
      %v3173 = vadd.f32 %v3064, %v3172
      %v3174 = vpop.f32.mrb[0].mxu0
      %3175 = vmatprep.mubr.bf16.mxu0 0
      %3176 = vmatmul.mubr.bf16.gmra.mrb[0].mxu0 %v3077
      %v3177 = vpop.f32.mrb[0].mxu0
      %v3178 = vadd.f32 %v3064, %v3177
      %v3179 = vpop.f32.mrb[0].mxu0
      %v3180 = vpop.f32.mrb[0].mxu0
      %v3181 = vadd.f32 %v3064, %v3180
      %v3182 = vpop.f32.mrb[0].mxu0
      %3183 = vmatprep.mubr.bf16.mxu0 0
      %3184 = vmatmul.mubr.bf16.gmra.mrb[0].mxu0 %v3080
      %v3185 = vpop.f32.mrb[0].mxu0
      %v3186 = vadd.f32 %v3064, %v3185
      %v3187 = vpop.f32.mrb[0].mxu0
      %v3188 = vpop.f32.mrb[0].mxu0
      %v3189 = vadd.f32 %v3064, %v3188
      %v3190 = vpop.f32.mrb[0].mxu0
      %3191 = vmatprep.mubr.bf16.mxu0 0
      %3192 = vmatmul.mubr.bf16.gmra.mrb[0].mxu0 %v3083
      %v3193 = vpop.f32.mrb[0].mxu0
      %v3194 = vadd.f32 %v3064, %v3193
      %v3195 = vpop.f32.mrb[0].mxu0
      %v3196 = vpop.f32.mrb[0].mxu0
      %v3197 = vadd.f32 %v3064, %v3196
      %v3198 = vpop.f32.mrb[0].mxu0
      %3199 = vmatprep.mubr.bf16.mxu0 0
      %3200 = vmatmul.mubr.bf16.gmra.mrb[0].mxu0 %v3086
      %v3201 = vpop.f32.mrb[0].mxu0
      %v3202 = vadd.f32 %v3064, %v3201
      %v3203 = vpop.f32.mrb[0].mxu0
      %v3204 = vpop.f32.mrb[0].mxu0
      %v3205 = vadd.f32 %v3064, %v3204
      %v3206 = vpop.f32.mrb[0].mxu0
      %3207 = vmatprep.mubr.bf16.mxu0 0
      %3208 = vmatmul.mubr.bf16.gmra.mrb[0].mxu0 %v3089
      %v3209 = vpop.f32.mrb[0].mxu0
      %v3210 = vadd.f32 %v3064, %v3209
      %v3211 = vpop.f32.mrb[0].mxu0
      %v3212 = vpop.f32.mrb[0].mxu0
      %v3213 = vadd.f32 %v3064, %v3212
      %v3214 = vpop.f32.mrb[0].mxu0
      %3215 = vmatprep.mubr.bf16.mxu0 0
      %3216 = vmatmul.mubr.bf16.gmra.mrb[0].mxu0 %v3092
      %v3217 = vpop.f32.mrb[0].mxu0
      %v3218 = vadd.f32 %v3064, %v3217
      %v3219 = vpop.f32.mrb[0].mxu0
      %v3220 = vpop.f32.mrb[0].mxu0
      %v3221 = vadd.f32 %v3064, %v3220
      %v3222 = vpop.f32.mrb[0].mxu0
      %3223 = vmatprep.mubr.bf16.mxu0 0
      %3224 = vmatmul.mubr.bf16.gmra.mrb[0].mxu0 %v3095
      %v3225 = vpop.f32.mrb[0].mxu0
      %v3226 = vadd.f32 %v3064, %v3225
      %v3227 = vpop.f32.mrb[0].mxu0
      %v3228 = vpop.f32.mrb[0].mxu0
      %v3229 = vadd.f32 %v3064, %v3228
      %v3230 = vpop.f32.mrb[0].mxu0
      %3231 = vmatprep.mubr.bf16.mxu0 0
      %3232 = vmatmul.mubr.bf16.gmra.mrb[0].mxu0 %v3098
      %v3233 = vpop.f32.mrb[0].mxu0
      %v3234 = vadd.f32 %v3064, %v3233
      %v3235 = vpop.f32.mrb[0].mxu0
      %v3236 = vpop.f32.mrb[0].mxu0
      %v3237 = vadd.f32 %v3064, %v3236
      %v3238 = vpop.f32.mrb[0].mxu0
      %3239 = vmatprep.mubr.bf16.mxu0 0
      %3240 = vmatmul.mubr.bf16.gmra.mrb[0].mxu0 %v3101
      %v3241 = vpop.f32.mrb[0].mxu0
      %v3242 = vadd.f32 %v3064, %v3241
      %v3243 = vpop.f32.mrb[0].mxu0
      %v3244 = vpop.f32.mrb[0].mxu0
      %v3245 = vadd.f32 %v3064, %v3244
      %v3246 = vpop.f32.mrb[0].mxu0
      %3247 = vmatprep.mubr.bf16.mxu0 0
      %3248 = vmatmul.mubr.bf16.gmra.mrb[0].mxu0 %v3104
      %v3249 = vpop.f32.mrb[0].mxu0
      %v3250 = vadd.f32 %v3064, %v3249
      %v3251 = vpop.f32.mrb[0].mxu0
      %v3252 = vpop.f32.mrb[0].mxu0
      %v3253 = vadd.f32 %v3064, %v3252
      %v3254 = vpop.f32.mrb[0].mxu0
      %3255 = vmatprep.mubr.bf16.mxu0 0
      %3256 = vmatmul.mubr.bf16.gmra.mrb[0].mxu0 %v3107
      %v3257 = vpop.f32.mrb[0].mxu0
      %v3258 = vadd.f32 %v3064, %v3257
      %v3259 = vpop.f32.mrb[0].mxu0
      %v3260 = vpop.f32.mrb[0].mxu0
      %v3261 = vadd.f32 %v3064, %v3260
      %v3262 = vpop.f32.mrb[0].mxu0
      %3263 = vmatprep.mubr.bf16.mxu0 0
      %3264 = vmatmul.mubr.bf16.gmra.mrb[0].mxu0 %v3110
      %v3265 = vpop.f32.mrb[0].mxu0
      %v3266 = vadd.f32 %v3064, %v3265
      %v3267 = vpop.f32.mrb[0].mxu0
      %v3268 = vpop.f32.mrb[0].mxu0
      %v3269 = vadd.f32 %v3064, %v3268
      %v3270 = vpop.f32.mrb[0].mxu0
      %3271 = vmatprep.mubr.bf16.mxu0 0
      %3272 = vmatmul.mubr.bf16.gmra.mrb[0].mxu0 %v3113
      %v3273 = vpop.f32.mrb[0].mxu0
      %v3274 = vadd.f32 %v3064, %v3273
      %v3275 = vpop.f32.mrb[0].mxu0
      %v3276 = vpop.f32.mrb[0].mxu0
      %v3277 = vadd.f32 %v3064, %v3276
      %v3278 = vpop.f32.mrb[0].mxu0
      %3279 = vdwg.mxu0
      %v3280 = vmax.f32 %v3154, 0.0
      %v3281 = vmax.f32 %v3157, 0.0
      %v3282 = vmax.f32 %v3162, 0.0
      %v3283 = vmax.f32 %v3165, 0.0
      %v3284 = vmax.f32 %v3170, 0.0
      %v3285 = vmax.f32 %v3173, 0.0
      %v3286 = vmax.f32 %v3178, 0.0
      %v3287 = vmax.f32 %v3181, 0.0
      %v3288 = vmax.f32 %v3186, 0.0
      %v3289 = vmax.f32 %v3189, 0.0
      %v3290 = vmax.f32 %v3194, 0.0
      %v3291 = vmax.f32 %v3197, 0.0
      %v3292 = vmax.f32 %v3202, 0.0
      %v3293 = vmax.f32 %v3205, 0.0
      %v3294 = vmax.f32 %v3210, 0.0
      %v3295 = vmax.f32 %v3213, 0.0
      %v3296 = vmax.f32 %v3218, 0.0
      %v3297 = vmax.f32 %v3221, 0.0
      %v3298 = vmax.f32 %v3226, 0.0
      %v3299 = vmax.f32 %v3229, 0.0
      %v3300 = vmax.f32 %v3234, 0.0
      %v3301 = vmax.f32 %v3237, 0.0
      %v3302 = vmax.f32 %v3242, 0.0
      %v3303 = vmax.f32 %v3245, 0.0
      %v3304 = vmax.f32 %v3250, 0.0
      %v3305 = vmax.f32 %v3253, 0.0
      %v3306 = vmax.f32 %v3258, 0.0
      %v3307 = vmax.f32 %v3261, 0.0
      %v3308 = vmax.f32 %v3266, 0.0
      %v3309 = vmax.f32 %v3269, 0.0
      %v3310 = vmax.f32 %v3274, 0.0
      %v3311 = vmax.f32 %v3277, 0.0
      %3312 = vrot.lane.b32.xlu0 %v2980, 8
      %v3313 = vpop.permute.xlu0 %3312
      %3314 = vrot.lane.b32.xlu0 %v2982, 8
      %v3315 = vpop.permute.xlu0 %3314
      %3316 = vrot.lane.b32.xlu0 %v2985, 8
      %v3317 = vpop.permute.xlu0 %3316
      %3318 = vrot.lane.b32.xlu0 %v2987, 8
      %v3319 = vpop.permute.xlu0 %3318
      %3320 = vrot.lane.b32.xlu0 %v2990, 8
      %v3321 = vpop.permute.xlu0 %3320
      %3322 = vrot.lane.b32.xlu0 %v2992, 8
      %v3323 = vpop.permute.xlu0 %3322
      %3324 = vrot.lane.b32.xlu0 %v2995, 8
      %v3325 = vpop.permute.xlu0 %3324
      %3326 = vrot.lane.b32.xlu0 %v2997, 8
      %v3327 = vpop.permute.xlu0 %3326
      %3328 = vrot.lane.b32.xlu0 %v3000, 8
      %v3329 = vpop.permute.xlu0 %3328
      %3330 = vrot.lane.b32.xlu0 %v3002, 8
      %v3331 = vpop.permute.xlu0 %3330
      %3332 = vrot.lane.b32.xlu0 %v3005, 8
      %v3333 = vpop.permute.xlu0 %3332
      %3334 = vrot.lane.b32.xlu0 %v3007, 8
      %v3335 = vpop.permute.xlu0 %3334
      %3336 = vrot.lane.b32.xlu0 %v3010, 8
      %v3337 = vpop.permute.xlu0 %3336
      %3338 = vrot.lane.b32.xlu0 %v3012, 8
      %v3339 = vpop.permute.xlu0 %3338
      %3340 = vrot.lane.b32.xlu0 %v3015, 8
      %v3341 = vpop.permute.xlu0 %3340
      %3342 = vrot.lane.b32.xlu0 %v3017, 8
      %v3343 = vpop.permute.xlu0 %3342
      %3344 = vrot.lane.b32.xlu0 %v3020, 8
      %v3345 = vpop.permute.xlu0 %3344
      %3346 = vrot.lane.b32.xlu0 %v3022, 8
      %v3347 = vpop.permute.xlu0 %3346
      %3348 = vrot.lane.b32.xlu0 %v3025, 8
      %v3349 = vpop.permute.xlu0 %3348
      %3350 = vrot.lane.b32.xlu0 %v3027, 8
      %v3351 = vpop.permute.xlu0 %3350
      %3352 = vrot.lane.b32.xlu0 %v3030, 8
      %v3353 = vpop.permute.xlu0 %3352
      %3354 = vrot.lane.b32.xlu0 %v3032, 8
      %v3355 = vpop.permute.xlu0 %3354
      %3356 = vrot.lane.b32.xlu0 %v3035, 8
      %v3357 = vpop.permute.xlu0 %3356
      %3358 = vrot.lane.b32.xlu0 %v3037, 8
      %v3359 = vpop.permute.xlu0 %3358
      %3360 = vrot.lane.b32.xlu0 %v3040, 8
      %v3361 = vpop.permute.xlu0 %3360
      %3362 = vrot.lane.b32.xlu0 %v3042, 8
      %v3363 = vpop.permute.xlu0 %3362
      %3364 = vrot.lane.b32.xlu0 %v3045, 8
      %v3365 = vpop.permute.xlu0 %3364
      %3366 = vrot.lane.b32.xlu0 %v3047, 8
      %v3367 = vpop.permute.xlu0 %3366
      %3368 = vrot.lane.b32.xlu0 %v3050, 8
      %v3369 = vpop.permute.xlu0 %3368
      %3370 = vrot.lane.b32.xlu0 %v3052, 8
      %v3371 = vpop.permute.xlu0 %3370
      %3372 = vrot.lane.b32.xlu0 %v3055, 8
      %v3373 = vpop.permute.xlu0 %3372
      %3374 = vrot.lane.b32.xlu0 %v3057, 8
      %v3375 = vpop.permute.xlu0 %3374
      %vm3408 = vcmask 64512
      %v3409 = vsel %vm3408, %v3280, %v3313
      %v3410 = vsel %vm3408, %v3281, %v3315
      %v3411 = vsel %vm3408, %v3282, %v3317
      %v3412 = vsel %vm3408, %v3283, %v3319
      %v3413 = vsel %vm3408, %v3284, %v3321
      %v3414 = vsel %vm3408, %v3285, %v3323
      %v3415 = vsel %vm3408, %v3286, %v3325
      %v3416 = vsel %vm3408, %v3287, %v3327
      %v3417 = vsel %vm3408, %v3288, %v3329
      %v3418 = vsel %vm3408, %v3289, %v3331
      %v3419 = vsel %vm3408, %v3290, %v3333
      %v3420 = vsel %vm3408, %v3291, %v3335
      %v3421 = vsel %vm3408, %v3292, %v3337
      %v3422 = vsel %vm3408, %v3293, %v3339
      %v3423 = vsel %vm3408, %v3294, %v3341
      %v3424 = vsel %vm3408, %v3295, %v3343
      %v3425 = vsel %vm3408, %v3296, %v3345
      %v3426 = vsel %vm3408, %v3297, %v3347
      %v3427 = vsel %vm3408, %v3298, %v3349
      %v3428 = vsel %vm3408, %v3299, %v3351
      %v3429 = vsel %vm3408, %v3300, %v3353
      %v3430 = vsel %vm3408, %v3301, %v3355
      %v3431 = vsel %vm3408, %v3302, %v3357
      %v3432 = vsel %vm3408, %v3303, %v3359
      %v3433 = vsel %vm3408, %v3304, %v3361
      %v3434 = vsel %vm3408, %v3305, %v3363
      %v3435 = vsel %vm3408, %v3306, %v3365
      %v3436 = vsel %vm3408, %v3307, %v3367
      %v3437 = vsel %vm3408, %v3308, %v3369
      %v3438 = vsel %vm3408, %v3309, %v3371
      %v3439 = vsel %vm3408, %v3310, %v3373
      %v3440 = vsel %vm3408, %v3311, %v3375
      %v3441 = vpack.c.bf16 %v3410, %v3409
      %v3442 = vpack.c.bf16 %v3412, %v3411
      %v3443 = vpack.c.bf16 %v3414, %v3413
      %v3444 = vpack.c.bf16 %v3416, %v3415
      %v3445 = vpack.c.bf16 %v3418, %v3417
      %v3446 = vpack.c.bf16 %v3420, %v3419
      %v3447 = vpack.c.bf16 %v3422, %v3421
      %v3448 = vpack.c.bf16 %v3424, %v3423
      %v3449 = vpack.c.bf16 %v3426, %v3425
      %v3450 = vpack.c.bf16 %v3428, %v3427
      %v3451 = vpack.c.bf16 %v3430, %v3429
      %v3452 = vpack.c.bf16 %v3432, %v3431
      %v3453 = vpack.c.bf16 %v3434, %v3433
      %v3454 = vpack.c.bf16 %v3436, %v3435
      %v3455 = vpack.c.bf16 %v3438, %v3437
      %v3456 = vpack.c.bf16 %v3440, %v3439
      %v3457 = vld [vmem:[%s7] sm:$0xf]
      %v3458 = vld [vmem:[%s7 + $0x4] sm:$0x3]
      %v3459 = vld [vmem:[%s8] sm:$0x1]
      %v3461 = vlaneseq
      %v3462 = vshrl.u32 %v3461, 7
      %v3463 = vsub.s32 0, %v3462
      %v3464 = vrot.slane %v3459, %v3463
      %v3468 = vunpack.c.l.b16 %v3457
      %v3469 = vunpack.c.l.b16 %v3458
      %v3470 = vpack.c.b16 %v3469, %v3468
      %vm3471 = vcmask 97280
      %v3473 = vsel %vm3471, %v3441, 0
      %v3476 = vsel %vm3471, %v3442, 0
      %v3479 = vsel %vm3471, %v3443, 0
      %v3482 = vsel %vm3471, %v3444, 0
      %v3485 = vsel %vm3471, %v3445, 0
      %v3488 = vsel %vm3471, %v3446, 0
      %v3491 = vsel %vm3471, %v3447, 0
      %v3494 = vsel %vm3471, %v3448, 0
      %v3497 = vsel %vm3471, %v3449, 0
      %v3500 = vsel %vm3471, %v3450, 0
      %v3503 = vsel %vm3471, %v3451, 0
      %v3506 = vsel %vm3471, %v3452, 0
      %v3509 = vsel %vm3471, %v3453, 0
      %v3512 = vsel %vm3471, %v3454, 0
      %v3515 = vsel %vm3471, %v3455, 0
      %v3518 = vsel %vm3471, %v3456, 0
      %vm3520 = vcmask 1045504
      %v3522 = vsel %vm3520, %v3470, 0
      %3524 = vmatprep.subr.bf16.mxu0 0
      %3525 = vmatpush1.bf16.msra.mxu0 %v3522
      %3526 = vmatprep.subr.bf16.mxu0 0
      %3527 = vmatpush1.bf16.msra.mxu0 0
      %3528 = vmatprep.subr.bf16.mxu0 0
      %3529 = vmatpush1.bf16.msra.mxu0 0
      %3530 = vmatprep.subr.bf16.mxu0 0
      %3531 = vmatpush1.bf16.msra.mxu0 0
      %3532 = vmatprep.subr.bf16.mxu0 0
      %3533 = vmatpush1.bf16.msra.mxu0 0
      %3534 = vmatprep.subr.bf16.mxu0 0
      %3535 = vmatpush1.bf16.msra.mxu0 0
      %3536 = vmatprep.subr.bf16.mxu0 0
      %3537 = vmatpush1.bf16.msra.mxu0 0
      %3538 = vmatprep.subr.bf16.mxu0 0
      %3539 = vmatpush1.bf16.msra.mxu0 0
      %3540 = vmatprep.subr.bf16.mxu0 0
      %3541 = vmatpush1.bf16.msra.mxu0 0
      %3542 = vmatprep.subr.bf16.mxu0 0
      %3543 = vmatpush1.bf16.msra.mxu0 0
      %3544 = vmatprep.subr.bf16.mxu0 0
      %3545 = vmatpush1.bf16.msra.mxu0 0
      %3546 = vmatprep.subr.bf16.mxu0 0
      %3547 = vmatpush1.bf16.msra.mxu0 0
      %3548 = vmatprep.subr.bf16.mxu0 0
      %3549 = vmatpush1.bf16.msra.mxu0 0
      %3550 = vmatprep.subr.bf16.mxu0 0
      %3551 = vmatpush1.bf16.msra.mxu0 0
      %3552 = vmatprep.subr.bf16.mxu0 0
      %3553 = vmatpush1.bf16.msra.mxu0 0
      %3554 = vmatprep.subr.bf16.mxu0 0
      %3555 = vmatpush1.bf16.msra.mxu0 0
      %3556 = vmatprep.mubr.bf16.mxu0 0
      %3557 = vmatmul.mubr.bf16.gmra.mrb[0].mxu0 %v3473
      %v3558 = vpop.f32.mrb[0].mxu0
      %v3559 = vadd.f32 %v3464, %v3558
      %v3560 = vpop.f32.mrb[0].mxu0
      %v3561 = vpop.f32.mrb[0].mxu0
      %v3562 = vadd.f32 %v3464, %v3561
      %v3563 = vpop.f32.mrb[0].mxu0
      %3564 = vmatprep.mubr.bf16.mxu0 0
      %3565 = vmatmul.mubr.bf16.gmra.mrb[0].mxu0 %v3476
      %v3566 = vpop.f32.mrb[0].mxu0
      %v3567 = vadd.f32 %v3464, %v3566
      %v3568 = vpop.f32.mrb[0].mxu0
      %v3569 = vpop.f32.mrb[0].mxu0
      %v3570 = vadd.f32 %v3464, %v3569
      %v3571 = vpop.f32.mrb[0].mxu0
      %3572 = vmatprep.mubr.bf16.mxu0 0
      %3573 = vmatmul.mubr.bf16.gmra.mrb[0].mxu0 %v3479
      %v3574 = vpop.f32.mrb[0].mxu0
      %v3575 = vadd.f32 %v3464, %v3574
      %v3576 = vpop.f32.mrb[0].mxu0
      %v3577 = vpop.f32.mrb[0].mxu0
      %v3578 = vadd.f32 %v3464, %v3577
      %v3579 = vpop.f32.mrb[0].mxu0
      %3580 = vmatprep.mubr.bf16.mxu0 0
      %3581 = vmatmul.mubr.bf16.gmra.mrb[0].mxu0 %v3482
      %v3582 = vpop.f32.mrb[0].mxu0
      %v3583 = vadd.f32 %v3464, %v3582
      %v3584 = vpop.f32.mrb[0].mxu0
      %v3585 = vpop.f32.mrb[0].mxu0
      %v3586 = vadd.f32 %v3464, %v3585
      %v3587 = vpop.f32.mrb[0].mxu0
      %3588 = vmatprep.mubr.bf16.mxu0 0
      %3589 = vmatmul.mubr.bf16.gmra.mrb[0].mxu0 %v3485
      %v3590 = vpop.f32.mrb[0].mxu0
      %v3591 = vadd.f32 %v3464, %v3590
      %v3592 = vpop.f32.mrb[0].mxu0
      %v3593 = vpop.f32.mrb[0].mxu0
      %v3594 = vadd.f32 %v3464, %v3593
      %v3595 = vpop.f32.mrb[0].mxu0
      %3596 = vmatprep.mubr.bf16.mxu0 0
      %3597 = vmatmul.mubr.bf16.gmra.mrb[0].mxu0 %v3488
      %v3598 = vpop.f32.mrb[0].mxu0
      %v3599 = vadd.f32 %v3464, %v3598
      %v3600 = vpop.f32.mrb[0].mxu0
      %v3601 = vpop.f32.mrb[0].mxu0
      %v3602 = vadd.f32 %v3464, %v3601
      %v3603 = vpop.f32.mrb[0].mxu0
      %3604 = vmatprep.mubr.bf16.mxu0 0
      %3605 = vmatmul.mubr.bf16.gmra.mrb[0].mxu0 %v3491
      %v3606 = vpop.f32.mrb[0].mxu0
      %v3607 = vadd.f32 %v3464, %v3606
      %v3608 = vpop.f32.mrb[0].mxu0
      %v3609 = vpop.f32.mrb[0].mxu0
      %v3610 = vadd.f32 %v3464, %v3609
      %v3611 = vpop.f32.mrb[0].mxu0
      %3612 = vmatprep.mubr.bf16.mxu0 0
      %3613 = vmatmul.mubr.bf16.gmra.mrb[0].mxu0 %v3494
      %v3614 = vpop.f32.mrb[0].mxu0
      %v3615 = vadd.f32 %v3464, %v3614
      %v3616 = vpop.f32.mrb[0].mxu0
      %v3617 = vpop.f32.mrb[0].mxu0
      %v3618 = vadd.f32 %v3464, %v3617
      %v3619 = vpop.f32.mrb[0].mxu0
      %3620 = vmatprep.mubr.bf16.mxu0 0
      %3621 = vmatmul.mubr.bf16.gmra.mrb[0].mxu0 %v3497
      %v3622 = vpop.f32.mrb[0].mxu0
      %v3623 = vadd.f32 %v3464, %v3622
      %v3624 = vpop.f32.mrb[0].mxu0
      %v3625 = vpop.f32.mrb[0].mxu0
      %v3626 = vadd.f32 %v3464, %v3625
      %v3627 = vpop.f32.mrb[0].mxu0
      %3628 = vmatprep.mubr.bf16.mxu0 0
      %3629 = vmatmul.mubr.bf16.gmra.mrb[0].mxu0 %v3500
      %v3630 = vpop.f32.mrb[0].mxu0
      %v3631 = vadd.f32 %v3464, %v3630
      %v3632 = vpop.f32.mrb[0].mxu0
      %v3633 = vpop.f32.mrb[0].mxu0
      %v3634 = vadd.f32 %v3464, %v3633
      %v3635 = vpop.f32.mrb[0].mxu0
      %3636 = vmatprep.mubr.bf16.mxu0 0
      %3637 = vmatmul.mubr.bf16.gmra.mrb[0].mxu0 %v3503
      %v3638 = vpop.f32.mrb[0].mxu0
      %v3639 = vadd.f32 %v3464, %v3638
      %v3640 = vpop.f32.mrb[0].mxu0
      %v3641 = vpop.f32.mrb[0].mxu0
      %v3642 = vadd.f32 %v3464, %v3641
      %v3643 = vpop.f32.mrb[0].mxu0
      %3644 = vmatprep.mubr.bf16.mxu0 0
      %3645 = vmatmul.mubr.bf16.gmra.mrb[0].mxu0 %v3506
      %v3646 = vpop.f32.mrb[0].mxu0
      %v3647 = vadd.f32 %v3464, %v3646
      %v3648 = vpop.f32.mrb[0].mxu0
      %v3649 = vpop.f32.mrb[0].mxu0
      %v3650 = vadd.f32 %v3464, %v3649
      %v3651 = vpop.f32.mrb[0].mxu0
      %3652 = vmatprep.mubr.bf16.mxu0 0
      %3653 = vmatmul.mubr.bf16.gmra.mrb[0].mxu0 %v3509
      %v3654 = vpop.f32.mrb[0].mxu0
      %v3655 = vadd.f32 %v3464, %v3654
      %v3656 = vpop.f32.mrb[0].mxu0
      %v3657 = vpop.f32.mrb[0].mxu0
      %v3658 = vadd.f32 %v3464, %v3657
      %v3659 = vpop.f32.mrb[0].mxu0
      %3660 = vmatprep.mubr.bf16.mxu0 0
      %3661 = vmatmul.mubr.bf16.gmra.mrb[0].mxu0 %v3512
      %v3662 = vpop.f32.mrb[0].mxu0
      %v3663 = vadd.f32 %v3464, %v3662
      %v3664 = vpop.f32.mrb[0].mxu0
      %v3665 = vpop.f32.mrb[0].mxu0
      %v3666 = vadd.f32 %v3464, %v3665
      %v3667 = vpop.f32.mrb[0].mxu0
      %3668 = vmatprep.mubr.bf16.mxu0 0
      %3669 = vmatmul.mubr.bf16.gmra.mrb[0].mxu0 %v3515
      %v3670 = vpop.f32.mrb[0].mxu0
      %v3671 = vadd.f32 %v3464, %v3670
      %v3672 = vpop.f32.mrb[0].mxu0
      %v3673 = vpop.f32.mrb[0].mxu0
      %v3674 = vadd.f32 %v3464, %v3673
      %v3675 = vpop.f32.mrb[0].mxu0
      %3676 = vmatprep.mubr.bf16.mxu0 0
      %3677 = vmatmul.mubr.bf16.gmra.mrb[0].mxu0 %v3518
      %v3678 = vpop.f32.mrb[0].mxu0
      %v3679 = vadd.f32 %v3464, %v3678
      %v3680 = vpop.f32.mrb[0].mxu0
      %v3681 = vpop.f32.mrb[0].mxu0
      %v3682 = vadd.f32 %v3464, %v3681
      %v3683 = vpop.f32.mrb[0].mxu0
      %3684 = vdwg.mxu0
      %3685 = vst.msk [vmem:[%s332] sm:$0xff] %vm3066, %v3559
      %3686 = vst.msk [vmem:[%s332 + $0x8] sm:$0xff] %vm3066, %v3562
      %3687 = vst.msk [vmem:[%s332 + $0x10] sm:$0xff] %vm3066, %v3567
      %3688 = vst.msk [vmem:[%s332 + $0x18] sm:$0xff] %vm3066, %v3570
      %3689 = vst.msk [vmem:[%s332 + $0x20] sm:$0xff] %vm3066, %v3575
      %3690 = vst.msk [vmem:[%s332 + $0x28] sm:$0xff] %vm3066, %v3578
      %3691 = vst.msk [vmem:[%s332 + $0x30] sm:$0xff] %vm3066, %v3583
      %3692 = vst.msk [vmem:[%s332 + $0x38] sm:$0xff] %vm3066, %v3586
      %3693 = vst.msk [vmem:[%s332 + $0x40] sm:$0xff] %vm3066, %v3591
      %3694 = vst.msk [vmem:[%s332 + $0x48] sm:$0xff] %vm3066, %v3594
      %3695 = vst.msk [vmem:[%s332 + $0x50] sm:$0xff] %vm3066, %v3599
      %3696 = vst.msk [vmem:[%s332 + $0x58] sm:$0xff] %vm3066, %v3602
      %3697 = vst.msk [vmem:[%s332 + $0x60] sm:$0xff] %vm3066, %v3607
      %3698 = vst.msk [vmem:[%s332 + $0x68] sm:$0xff] %vm3066, %v3610
      %3699 = vst.msk [vmem:[%s332 + $0x70] sm:$0xff] %vm3066, %v3615
      %3700 = vst.msk [vmem:[%s332 + $0x78] sm:$0xff] %vm3066, %v3618
      %3701 = vst.msk [vmem:[%s332 + $0x80] sm:$0xff] %vm3066, %v3623
      %3702 = vst.msk [vmem:[%s332 + $0x88] sm:$0xff] %vm3066, %v3626
      %3703 = vst.msk [vmem:[%s332 + $0x90] sm:$0xff] %vm3066, %v3631
      %3704 = vst.msk [vmem:[%s332 + $0x98] sm:$0xff] %vm3066, %v3634
      %3705 = vst.msk [vmem:[%s332 + $0xa0] sm:$0xff] %vm3066, %v3639
      %3706 = vst.msk [vmem:[%s332 + $0xa8] sm:$0xff] %vm3066, %v3642
      %3707 = vst.msk [vmem:[%s332 + $0xb0] sm:$0xff] %vm3066, %v3647
      %3708 = vst.msk [vmem:[%s332 + $0xb8] sm:$0xff] %vm3066, %v3650
      %3709 = vst.msk [vmem:[%s332 + $0xc0] sm:$0xff] %vm3066, %v3655
      %3710 = vst.msk [vmem:[%s332 + $0xc8] sm:$0xff] %vm3066, %v3658
      %3711 = vst.msk [vmem:[%s332 + $0xd0] sm:$0xff] %vm3066, %v3663
      %3712 = vst.msk [vmem:[%s332 + $0xd8] sm:$0xff] %vm3066, %v3666
      %3713 = vst.msk [vmem:[%s332 + $0xe0] sm:$0xff] %vm3066, %v3671
      %3714 = vst.msk [vmem:[%s332 + $0xe8] sm:$0xff] %vm3066, %v3674
      %3715 = vst.msk [vmem:[%s332 + $0xf0] sm:$0xff] %vm3066, %v3679
      %3716 = vst.msk [vmem:[%s332 + $0xf8] sm:$0xff] %vm3066, %v3682
      %p3717 = scmp.lt.s32.totalorder %s20, 1
      %s3718 = scalar_select %p3717, %s20, 1
      %s3719 = smul.addr %s3718, 32
      %s3720 = smul.addr %s3719, 8
      %s3721 = scalar_lea.vmem %s9, %s3720
      // Predicated region
      $region57: #{tpu_custom_call.1} parent=55 // pred_check
        %p3722 = pneg %p232
      $region58: #{tpu_custom_call.1} parent=55 // pred_check_branch
        %3724 = sbr.rel (%p3722) target = $region60
      $region59: #{tpu_custom_call.1} parent=55 // pred_region
        _
      $region60: #{tpu_custom_call.1} parent=55 // pred_fallthru
        _
    $region56: #{tpu_custom_call.1} parent=5 // pred_fallthru
      _
    %p3725 = scmp.le.s32.totalorder 2, %s15
    // Predicated region
    $region61: #{tpu_custom_call.1} parent=5 // pred_check
      %p3726 = pneg %p3725
    $region62: #{tpu_custom_call.1} parent=5 // pred_check_branch
      %3728 = sbr.rel (%p3726) target = $region64
    $region63: #{tpu_custom_call.1} parent=5 // pred_region
      %s3729 = ssub.s32 %s15, 2
      // Predicated region
      $region65: #{tpu_custom_call.1} parent=63 // pred_check
        %p3730 = pneg %p238
      $region66: #{tpu_custom_call.1} parent=63 // pred_check_branch
        %3732 = sbr.rel (%p3730) target = $region68
      $region67: #{tpu_custom_call.1} parent=63 // pred_region
        %p3733 = scmp.lt.s32.totalorder %s21, 1
        %s3734 = scalar_select %p3733, %s21, 1
        %s3735 = smul.addr %s3734, 32
        %s3736 = smul.addr %s3735, 8
        %s3737 = scalar_lea.vmem %s9, %s3736
      $region68: #{tpu_custom_call.1} parent=63 // pred_fallthru
        _
    $region64: #{tpu_custom_call.1} parent=5 // pred_fallthru
      _
  $region6: #{tpu_custom_call.1} parent=0 // loop_footer
    %s19 = sadd.s32 1, %s15
  $region7: #{tpu_custom_call.1} parent=0 // loop_footer_branch
    %14 = sbr.rel target = $region3
  $region8: #{tpu_custom_call.1} parent=0 // loop_exit
    _

</llo_original>
